<compile_context>
chip_gen: v7x
topology: tpu7x:2x2x1
jax: 0.10.0
libtpu: 0.0.40
codegen_flags: <defaults>
</compile_context>

<pallas_src>
import functools
import math

import jax
import jax.numpy as jnp
from jax.experimental import pallas as pl
from jax.experimental.pallas import tpu as pltpu


# ----------------------------------------------------------------------------
# Small helpers
# ----------------------------------------------------------------------------
def _round_up(x, m):
    return (x + m - 1) // m * m


def _pad_axis(a, axis, new_size):
    if a.shape[axis] == new_size:
        return a
    pads = [(0, 0)] * a.ndim
    pads[axis] = (0, new_size - a.shape[axis])
    return jnp.pad(a, pads)


def _pick_tile(n, max_tile, multiple=8):
    """Largest t <= max_tile with n % t == 0 and t % multiple == 0, else n (full dim)."""
    if n <= max_tile:
        return n
    t = (max_tile // multiple) * multiple
    while t >= multiple:
        if n % t == 0:
            return t
        t -= multiple
    return n


def _tile_with_pad(n, max_tile, multiple):
    """Like _pick_tile, but if there is no clean divisor and n is huge, fall back to
    zero-padding (exact for matmul reductions; callers slice the result)."""
    t = _pick_tile(n, max_tile, multiple)
    if t == n and n > 2 * max_tile:
        return max_tile, _round_up(n, max_tile)
    return t, n


@functools.lru_cache(maxsize=None)
def _vmem_limit_bytes():
    """Generation-aware scoped-VMEM budget (leave headroom; ~48 MiB on v7x, ~96 MiB v5e/v6e)."""
    try:
        cap = int(pltpu.get_tpu_info().vmem_capacity_bytes)
    except Exception:
        cap = 64 * 1024 * 1024
    return min(cap * 3 // 4, 100 * 1024 * 1024)


def _cparams(dimension_semantics):
    return pltpu.CompilerParams(dimension_semantics=dimension_semantics,
                                vmem_limit_bytes=_vmem_limit_bytes())


# ----------------------------------------------------------------------------
# Tiled linear: y = x @ w + b   (used for the final output projection)
# ----------------------------------------------------------------------------
def _linear_kernel(x_ref, w_ref, b_ref, o_ref, acc_ref):
    @pl.when(pl.program_id(2) == 0)
    def _():
        acc_ref[...] = jnp.zeros_like(acc_ref)

    acc_ref[...] += jnp.dot(x_ref[...].astype(jnp.bfloat16),
                            w_ref[...].astype(jnp.bfloat16),
                            preferred_element_type=jnp.float32)

    @pl.when(pl.program_id(2) == pl.num_programs(2) - 1)
    def _():
        o_ref[...] = (acc_ref[...] + b_ref[...]).astype(o_ref.dtype)


def linear(x, w, b):
    """x:(M,K) f32, w:(K,N) bf16 (pre-padded in init), b:(1,N) f32 -> (M,N) f32."""
    M, K = x.shape
    N = w.shape[1]
    tm, Mp = _tile_with_pad(M, 512, 8)
    tn, Np = _tile_with_pad(N, 512, 128)
    tk, Kp = _tile_with_pad(K, 1024, 128)
    xp = x if (Mp == M and Kp == K) else _pad_axis(_pad_axis(x, 0, Mp), 1, Kp)
    wp = w if (Kp == K and Np == N) else _pad_axis(_pad_axis(w, 0, Kp), 1, Np)
    bp = b if Np == N else _pad_axis(b, 1, Np)

    out = pl.pallas_call(
        _linear_kernel,
        grid=(Mp // tm, Np // tn, Kp // tk),
        out_shape=jax.ShapeDtypeStruct((Mp, Np), x.dtype),
        in_specs=[
            pl.BlockSpec((tm, tk), lambda i, j, k: (i, k)),
            pl.BlockSpec((tk, tn), lambda i, j, k: (k, j)),
            pl.BlockSpec((1, tn), lambda i, j, k: (0, j)),
        ],
        out_specs=pl.BlockSpec((tm, tn), lambda i, j, k: (i, j)),
        scratch_shapes=[pltpu.VMEM((tm, tn), jnp.float32)],
        compiler_params=_cparams(("parallel", "parallel", "arbitrary")),
    )(xp, wp, bp)
    if (Mp, Np) != (M, N):
        out = out[:M, :N]
    return out


# ----------------------------------------------------------------------------
# Fused input projection + positional encoding:  (x @ w + b) + pos
# ----------------------------------------------------------------------------
def _in_proj_kernel(x_ref, w_ref, b_ref, pos_ref, o_ref):
    y = jnp.dot(x_ref[0].astype(jnp.bfloat16), w_ref[...],
                preferred_element_type=jnp.float32)
    o_ref[0] = (y + b_ref[...] + pos_ref[...]).astype(o_ref.dtype)


def input_projection(x, w, b, pos):
    """x:(B,S,F), w:(F,D) bf16, b:(1,D), pos:(S,D) -> (B,S,D)."""
    B, S, F = x.shape
    D = w.shape[1]
    ts = _pick_tile(S, 256)
    return pl.pallas_call(
        _in_proj_kernel,
        grid=(B, S // ts),
        out_shape=jax.ShapeDtypeStruct((B, S, D), x.dtype),
        in_specs=[
            pl.BlockSpec((1, ts, F), lambda b_, s_: (b_, s_, 0)),
            pl.BlockSpec((F, D), lambda b_, s_: (0, 0)),
            pl.BlockSpec((1, D), lambda b_, s_: (0, 0)),
            pl.BlockSpec((ts, D), lambda b_, s_: (s_, 0)),
        ],
        out_specs=pl.BlockSpec((1, ts, D), lambda b_, s_: (b_, s_, 0)),
        compiler_params=_cparams(("parallel", "parallel")),
    )(x, w, b, pos)


# ----------------------------------------------------------------------------
# Fused attention block:
#   QKV projections + per-head attention + out-projection + residual + LayerNorm
# gridded over (batch, query-tile); K/V use the full sequence block.
# ----------------------------------------------------------------------------
def _attn_block_kernel(xq_ref, xkv_ref, wq_ref, bq_ref, wk_ref, bk_ref,
                       wv_ref, bv_ref, wo_ref, bo_ref, g_ref, bb_ref, o_ref,
                       *, nhead, scale, eps):
    xq = xq_ref[0]                                  # (tq, D) f32 -- also the residual
    xkv = xkv_ref[0]                                # (S,  D) f32
    xq_bf = xq.astype(jnp.bfloat16)
    xkv_bf = xkv.astype(jnp.bfloat16)

    # residual + out-projection bias; per-head partial out-projections accumulate into y,
    # so the head outputs never need a lane-offset concatenate.
    y = xq + bo_ref[...]                            # (tq, D) f32

    for h in range(nhead):                          # static unroll; per-head weights are
        # leading-axis blocks of head-major parameter tensors -> no lane-offset slicing.
        q = jnp.dot(xq_bf, wq_ref[h], preferred_element_type=jnp.float32) + bq_ref[h]
        k = jnp.dot(xkv_bf, wk_ref[h], preferred_element_type=jnp.float32) + bk_ref[h]
        v = jnp.dot(xkv_bf, wv_ref[h], preferred_element_type=jnp.float32) + bv_ref[h]

        # scores: contract on the last axes directly (no materialized k.T transpose)
        s = jax.lax.dot_general(q.astype(jnp.bfloat16), k.astype(jnp.bfloat16),
                                (((1,), (1,)), ((), ())),
                                preferred_element_type=jnp.float32) * scale   # (tq, S)
        s = s - jnp.max(s, axis=-1, keepdims=True)
        p = jnp.exp(s)
        p = p / jnp.sum(p, axis=-1, keepdims=True)  # exact division (parity w/ PyTorch)

        o_h = jnp.dot(p.astype(jnp.bfloat16), v.astype(jnp.bfloat16),
                      preferred_element_type=jnp.float32)                     # (tq, Dh)
        y = y + jnp.dot(o_h.astype(jnp.bfloat16), wo_ref[h],
                        preferred_element_type=jnp.float32)                   # (tq, D)

    # post-LayerNorm (eps = 1e-5, same as nn.TransformerEncoderLayer)
    mu = jnp.mean(y, axis=-1, keepdims=True)
    var = jnp.mean(jnp.square(y - mu), axis=-1, keepdims=True)
    yn = (y - mu) * jax.lax.rsqrt(var + eps)
    o_ref[0] = (yn * g_ref[...] + bb_ref[...]).astype(o_ref.dtype)


def attention_block(h, p, nhead, scale, eps=1e-5):
    """h:(B,S,D) -> LayerNorm(h + MHA(h) @ Wo + bo)  in one kernel."""
    B, S, D = h.shape
    Dh = D // nhead
    tq = _pick_tile(S, 128)
    return pl.pallas_call(
        functools.partial(_attn_block_kernel, nhead=nhead, scale=scale, eps=eps),
        grid=(B, S // tq),
        out_shape=jax.ShapeDtypeStruct((B, S, D), h.dtype),
        in_specs=[
            pl.BlockSpec((1, tq, D), lambda b, q: (b, q, 0)),      # query rows / residual
            pl.BlockSpec((1, S, D), lambda b, q: (b, 0, 0)),       # full sequence for K/V
            pl.BlockSpec((nhead, D, Dh), lambda b, q: (0, 0, 0)),  # wq (head-major)
            pl.BlockSpec((nhead, 1, Dh), lambda b, q: (0, 0, 0)),  # bq
            pl.BlockSpec((nhead, D, Dh), lambda b, q: (0, 0, 0)),  # wk
            pl.BlockSpec((nhead, 1, Dh), lambda b, q: (0, 0, 0)),  # bk
            pl.BlockSpec((nhead, D, Dh), lambda b, q: (0, 0, 0)),  # wv
            pl.BlockSpec((nhead, 1, Dh), lambda b, q: (0, 0, 0)),  # bv
            pl.BlockSpec((nhead, Dh, D), lambda b, q: (0, 0, 0)),  # wo (head-major rows)
            pl.BlockSpec((1, D), lambda b, q: (0, 0)),             # bo
            pl.BlockSpec((1, D), lambda b, q: (0, 0)),             # ln1 gamma
            pl.BlockSpec((1, D), lambda b, q: (0, 0)),             # ln1 beta
        ],
        out_specs=pl.BlockSpec((1, tq, D), lambda b, q: (b, q, 0)),
        compiler_params=_cparams(("parallel", "parallel")),
    )(h, h, p["wq"], p["bq"], p["wk"], p["bk"], p["wv"], p["bv"],
      p["wo"], p["bo"], p["ln1_g"], p["ln1_b"])


# ----------------------------------------------------------------------------
# Fused FFN block: LayerNorm(x + relu(x@w1 + b1) @ w2 + b2), dim_feedforward tiled
# ----------------------------------------------------------------------------
def _ffn_add_ln_kernel(x_ref, w1_ref, b1_ref, w2_ref, b2_ref, g_ref, bb_ref,
                       o_ref, acc_ref, *, eps):
    f = pl.program_id(1)

    @pl.when(f == 0)
    def _():
        acc_ref[...] = jnp.zeros_like(acc_ref)

    x_bf = x_ref[...].astype(jnp.bfloat16)
    hmid = jnp.dot(x_bf, w1_ref[...], preferred_element_type=jnp.float32) + b1_ref[...]
    hmid = jnp.maximum(hmid, 0.0)                   # (tm, tfh) never leaves VMEM
    acc_ref[...] += jnp.dot(hmid.astype(jnp.bfloat16), w2_ref[...],
                            preferred_element_type=jnp.float32)

    @pl.when(f == pl.num_programs(1) - 1)
    def _():
        y = acc_ref[...] + b2_ref[...] + x_ref[...]
        mu = jnp.mean(y, axis=-1, keepdims=True)
        var = jnp.mean(jnp.square(y - mu), axis=-1, keepdims=True)
        yn = (y - mu) * jax.lax.rsqrt(var + eps)
        o_ref[...] = (yn * g_ref[...] + bb_ref[...]).astype(o_ref.dtype)


def ffn_add_layernorm(x, w1, b1, w2, b2, gamma, beta, eps=1e-5):
    """x:(M,D) f32; w1:(D,Fh) bf16; w2:(Fh,D) bf16; biases/ln params (1, .) f32."""
    M, D = x.shape
    Fh = w1.shape[1]
    tm = _pick_tile(M, 512, 8)
    tfh = _pick_tile(Fh, 2048, 128)
    return pl.pallas_call(
        functools.partial(_ffn_add_ln_kernel, eps=eps),
        grid=(M // tm, Fh // tfh),
        out_shape=jax.ShapeDtypeStruct((M, D), x.dtype),
        in_specs=[
            pl.BlockSpec((tm, D), lambda i, f: (i, 0)),
            pl.BlockSpec((D, tfh), lambda i, f: (0, f)),
            pl.BlockSpec((1, tfh), lambda i, f: (0, f)),
            pl.BlockSpec((tfh, D), lambda i, f: (f, 0)),
            pl.BlockSpec((1, D), lambda i, f: (0, 0)),
            pl.BlockSpec((1, D), lambda i, f: (0, 0)),
            pl.BlockSpec((1, D), lambda i, f: (0, 0)),
        ],
        out_specs=pl.BlockSpec((tm, D), lambda i, f: (i, 0)),
        scratch_shapes=[pltpu.VMEM((tm, D), jnp.float32)],
        compiler_params=_cparams(("parallel", "arbitrary")),
    )(x, w1, b1, w2, b2, gamma, beta)


# ----------------------------------------------------------------------------
# Parameter construction (deterministic; mirrors nn.Module __init__ shapes).
# All weight padding, head-major reordering and bf16 casting happens here, once.
# ----------------------------------------------------------------------------
def init_params(key, input_dim, d_model, nhead, num_layers, dim_feedforward, max_len=1000):
    def lin_init(k, fan_in, fan_out):
        k1, k2 = jax.random.split(k)
        bound = 1.0 / math.sqrt(fan_in)
        w = jax.random.uniform(k1, (fan_in, fan_out), jnp.float32, -bound, bound)
        b = jax.random.uniform(k2, (fan_out,), jnp.float32, -bound, bound)
        return w, b

    Dh = d_model // nhead
    keys = jax.random.split(key, 3 + num_layers)
    params = {}

    w_in, b_in = lin_init(keys[0], input_dim, d_model)
    params["w_in"] = w_in.astype(jnp.bfloat16)
    params["b_in"] = b_in.reshape(1, d_model)
    params["pos"] = jax.random.normal(keys[1], (max_len, d_model), jnp.float32)

    # Output projection: pre-pad N up to 128 lanes (lane-dense stores) and pre-cast to bf16.
    w_out, b_out = lin_init(keys[2], d_model, input_dim)
    n_pad = _round_up(input_dim, 128)
    params["w_out"] = _pad_axis(w_out, 1, n_pad).astype(jnp.bfloat16)
    params["b_out"] = _pad_axis(b_out, 0, n_pad).reshape(1, n_pad)

    def head_major_cols(w):   # (D, D) -> (nhead, D, Dh): head h = columns h*Dh:(h+1)*Dh
        return jnp.transpose(w.reshape(d_model, nhead, Dh), (1, 0, 2))

    layers = []
    for l in range(num_layers):
        lk = jax.random.split(keys[3 + l], 6)
        wq, bq = lin_init(lk[0], d_model, d_model)
        wk, bk = lin_init(lk[1], d_model, d_model)
        wv, bv = lin_init(lk[2], d_model, d_model)
        wo, bo = lin_init(lk[3], d_model, d_model)
        w1, b1 = lin_init(lk[4], d_model, dim_feedforward)
        w2, b2 = lin_init(lk[5], dim_feedforward, d_model)
        layers.append(dict(
            wq=head_major_cols(wq).astype(jnp.bfloat16),
            wk=head_major_cols(wk).astype(jnp.bfloat16),
            wv=head_major_cols(wv).astype(jnp.bfloat16),
            bq=bq.reshape(nhead, 1, Dh),
            bk=bk.reshape(nhead, 1, Dh),
            bv=bv.reshape(nhead, 1, Dh),
            # wo head-major over its rows: head h = rows h*Dh:(h+1)*Dh
            wo=wo.reshape(nhead, Dh, d_model).astype(jnp.bfloat16),
            bo=bo.reshape(1, d_model),
            w1=w1.astype(jnp.bfloat16), b1=b1.reshape(1, dim_feedforward),
            w2=w2.astype(jnp.bfloat16), b2=b2.reshape(1, d_model),
            ln1_g=jnp.ones((1, d_model), jnp.float32),
            ln1_b=jnp.zeros((1, d_model), jnp.float32),
            ln2_g=jnp.ones((1, d_model), jnp.float32),
            ln2_b=jnp.zeros((1, d_model), jnp.float32),
        ))
    params["layers"] = layers
    return params


# ----------------------------------------------------------------------------
# Forward pass
# ----------------------------------------------------------------------------
def stellar_transformer_forward(x, params, nhead):
    # x: (B, S, input_dim)
    B, S, Fin = x.shape
    D = params["w_in"].shape[1]
    Dh = D // nhead
    scale = 1.0 / math.sqrt(Dh)
    M = B * S

    # fused input projection + positional-encoding add
    h = input_projection(x, params["w_in"], params["b_in"], params["pos"][:S])

    for p in params["layers"]:
        # fused: QKV proj + multi-head attention + out-proj + residual + LayerNorm
        h = attention_block(h, p, nhead, scale)
        # fused: FFN (w1 + ReLU + w2, Fh-tiled) + residual + LayerNorm
        h2 = ffn_add_layernorm(h.reshape(M, D), p["w1"], p["b1"], p["w2"], p["b2"],
                               p["ln2_g"], p["ln2_b"])
        h = h2.reshape(B, S, D)

    # output projection (weights pre-padded to 128 lanes; slice back to input_dim)
    out = linear(h.reshape(M, D), params["w_out"], params["b_out"])
    return out[:, :Fin].reshape(B, S, Fin)


# ----------------------------------------------------------------------------
# Pure-JAX reference (same bf16 weights, f32 math) for a correctness check
# ----------------------------------------------------------------------------
def _reference_forward(x, params, nhead, eps=1e-5):
    f32 = jnp.float32

    def ln(y, g, b):
        mu = jnp.mean(y, axis=-1, keepdims=True)
        var = jnp.mean(jnp.square(y - mu), axis=-1, keepdims=True)
        return (y - mu) * jax.lax.rsqrt(var + eps) * g + b

    B, S, Fin = x.shape
    D = params["w_in"].shape[1]
    Dh = D // nhead
    scale = 1.0 / math.sqrt(Dh)
    h = x @ params["w_in"].astype(f32) + params["b_in"] + params["pos"][:S][None]
    for p in params["layers"]:
        q = jnp.einsum("bsd,hde->bhse", h, p["wq"].astype(f32)) + p["bq"][None]
        k = jnp.einsum("bsd,hde->bhse", h, p["wk"].astype(f32)) + p["bk"][None]
        v = jnp.einsum("bsd,hde->bhse", h, p["wv"].astype(f32)) + p["bv"][None]
        s = jnp.einsum("bhqe,bhke->bhqk", q, k) * scale
        a = jax.nn.softmax(s, axis=-1)
        o = jnp.einsum("bhqk,bhke->bhqe", a, v)
        attn = jnp.einsum("bhqe,hed->bqd", o, p["wo"].astype(f32)) + p["bo"]
        y = ln(h + attn, p["ln1_g"], p["ln1_b"])
        ff = jnp.maximum(y @ p["w1"].astype(f32) + p["b1"], 0.0) @ p["w2"].astype(f32) + p["b2"]
        h = ln(y + ff, p["ln2_g"], p["ln2_b"])
    out = h @ params["w_out"].astype(f32) + params["b_out"]
    return out[..., :Fin]


# ----------------------------------------------------------------------------
if __name__ == "__main__":
    input_dim, d_model, nhead, num_layers, dim_feedforward = 5, 64, 8, 3, 256
    B, S = 2, 8

    key = jax.random.PRNGKey(0)
    kx, kp = jax.random.split(key)
    x = jax.random.normal(kx, (B, S, input_dim), jnp.float32)
    params = init_params(kp, input_dim, d_model, nhead, num_layers, dim_feedforward)

    fwd = jax.jit(functools.partial(stellar_transformer_forward, nhead=nhead))
    out = fwd(x, params)
    jax.block_until_ready(out)

    assert out.shape == (B, S, input_dim)
    assert bool(jnp.all(jnp.isfinite(out)))

    with jax.default_matmul_precision("float32"):
        ref = _reference_forward(x, params, nhead)
    max_err = float(jnp.max(jnp.abs(out - ref)))
    assert max_err < 0.1, f"mismatch vs pure-JAX reference: max_err={max_err}"

    print("KERNEL_OK")
</pallas_src>

<mosaic_0001>
module attributes {stable_mosaic.version = 11 : i64} {
  func.func @_in_proj_kernel(%arg0: i32, %arg1: i32, %arg2: memref<1x8x5xf32, #tpu.memory_space<vmem>>, %arg3: memref<5x64xbf16, #tpu.memory_space<vmem>>, %arg4: memref<1x64xf32, #tpu.memory_space<vmem>>, %arg5: memref<8x64xf32, #tpu.memory_space<vmem>>, %arg6: memref<1x8x64xf32, #tpu.memory_space<vmem>>) attributes {dimension_semantics = [#tpu.dimension_semantics<parallel>, #tpu.dimension_semantics<parallel>], iteration_bounds = array<i64: 2, 1>, scalar_prefetch = 0 : i64, scratch_operands = 0 : i64, tpu.core_type = #tpu.core_type<tc>, window_params = [{transform_indices = @transform_0, window_bounds = array<i64: 1, 8, 5>}, {pipeline_mode = #tpu.pipeline_mode<synchronous>, transform_indices = @transform_1, window_bounds = array<i64: 5, 64>}, {pipeline_mode = #tpu.pipeline_mode<synchronous>, transform_indices = @transform_2, window_bounds = array<i64: 1, 64>}, {transform_indices = @transform_3, window_bounds = array<i64: 8, 64>}, {transform_indices = @transform_4, window_bounds = array<i64: 1, 8, 64>}]} {
    %c0 = arith.constant 0 : index
    %c0_0 = arith.constant 0 : index
    %c0_1 = arith.constant 0 : index
    %0 = vector.load %arg2[%c0, %c0_0, %c0_1] : memref<1x8x5xf32, #tpu.memory_space<vmem>>, vector<1x8x5xf32>
    %1 = vector.shape_cast %0 : vector<1x8x5xf32> to vector<8x5xf32>
    %2 = arith.truncf %1 : vector<8x5xf32> to vector<8x5xbf16>
    %c0_2 = arith.constant 0 : index
    %c0_3 = arith.constant 0 : index
    %3 = vector.load %arg3[%c0_2, %c0_3] : memref<5x64xbf16, #tpu.memory_space<vmem>>, vector<5x64xbf16>
    %cst = arith.constant dense<0.000000e+00> : vector<8x64xf32>
    %4 = tpu.matmul %2, %3, %cst {dimension_numbers = #tpu.dot_dimension_numbers<[1], [0], [0], [1], [0, 0, 1, 1], [], []>} : vector<8x5xbf16>, vector<5x64xbf16>, vector<8x64xf32> -> vector<8x64xf32>
    %c0_4 = arith.constant 0 : index
    %c0_5 = arith.constant 0 : index
    %5 = vector.load %arg4[%c0_4, %c0_5] : memref<1x64xf32, #tpu.memory_space<vmem>>, vector<1x64xf32>
    %6 = vector.broadcast %5 : vector<1x64xf32> to vector<8x64xf32>
    %7 = arith.addf %4, %6 : vector<8x64xf32>
    %c0_6 = arith.constant 0 : index
    %c0_7 = arith.constant 0 : index
    %8 = vector.load %arg5[%c0_6, %c0_7] : memref<8x64xf32, #tpu.memory_space<vmem>>, vector<8x64xf32>
    %9 = arith.addf %7, %8 : vector<8x64xf32>
    %c0_8 = arith.constant 0 : index
    %c0_9 = arith.constant 0 : index
    %c0_10 = arith.constant 0 : index
    %10 = vector.load %arg6[%c0_8, %c0_9, %c0_10] : memref<1x8x64xf32, #tpu.memory_space<vmem>>, vector<1x8x64xf32>
    %11 = vector.shape_cast %10 : vector<1x8x64xf32> to vector<8x64xf32>
    %12 = vector.shape_cast %9 : vector<8x64xf32> to vector<1x8x64xf32>
    tpu.vector_store %arg6[%c0_8, %c0_9, %c0_10], %12 {strides = array<i32>} : memref<1x8x64xf32, #tpu.memory_space<vmem>>, vector<1x8x64xf32>,
    return
  }
  func.func @transform_0(%arg0: i32, %arg1: i32) -> (i32, i32, i32) {
    %c0_i32 = arith.constant 0 : i32
    %c0_i32_0 = arith.constant 0 : i32
    return %arg0, %arg1, %c0_i32 : i32, i32, i32
  }
  func.func @transform_1(%arg0: i32, %arg1: i32) -> (i32, i32) {
    %c0_i32 = arith.constant 0 : i32
    %c0_i32_0 = arith.constant 0 : i32
    %c0_i32_1 = arith.constant 0 : i32
    return %c0_i32, %c0_i32_0 : i32, i32
  }
  func.func @transform_2(%arg0: i32, %arg1: i32) -> (i32, i32) {
    %c0_i32 = arith.constant 0 : i32
    %c0_i32_0 = arith.constant 0 : i32
    %c0_i32_1 = arith.constant 0 : i32
    return %c0_i32, %c0_i32_0 : i32, i32
  }
  func.func @transform_3(%arg0: i32, %arg1: i32) -> (i32, i32) {
    %c0_i32 = arith.constant 0 : i32
    %c0_i32_0 = arith.constant 0 : i32
    return %arg1, %c0_i32 : i32, i32
  }
  func.func @transform_4(%arg0: i32, %arg1: i32) -> (i32, i32, i32) {
    %c0_i32 = arith.constant 0 : i32
    %c0_i32_0 = arith.constant 0 : i32
    return %arg0, %arg1, %c0_i32 : i32, i32, i32
  }
}

module attributes {stable_mosaic.version = 11 : i64} {
  func.func @_ffn_add_ln_kernel(%arg0: i32, %arg1: i32, %arg2: memref<16x64xf32, #tpu.memory_space<vmem>>, %arg3: memref<64x256xbf16, #tpu.memory_space<vmem>>, %arg4: memref<1x256xf32, #tpu.memory_space<vmem>>, %arg5: memref<256x64xbf16, #tpu.memory_space<vmem>>, %arg6: memref<1x64xf32, #tpu.memory_space<vmem>>, %arg7: memref<1x64xf32, #tpu.memory_space<vmem>>, %arg8: memref<1x64xf32, #tpu.memory_space<vmem>>, %arg9: memref<16x64xf32, #tpu.memory_space<vmem>>, %arg10: memref<16x64xf32, #tpu.memory_space<vmem>>) attributes {dimension_semantics = [#tpu.dimension_semantics<parallel>, #tpu.dimension_semantics<arbitrary>], iteration_bounds = array<i64: 1, 1>, scalar_prefetch = 0 : i64, scratch_operands = 1 : i64, tpu.core_type = #tpu.core_type<tc>, window_params = [{transform_indices = @transform_0, window_bounds = array<i64: 16, 64>}, {transform_indices = @transform_1, window_bounds = array<i64: 64, 256>}, {transform_indices = @transform_2, window_bounds = array<i64: 1, 256>}, {transform_indices = @transform_3, window_bounds = array<i64: 256, 64>}, {pipeline_mode = #tpu.pipeline_mode<synchronous>, transform_indices = @transform_4, window_bounds = array<i64: 1, 64>}, {pipeline_mode = #tpu.pipeline_mode<synchronous>, transform_indices = @transform_5, window_bounds = array<i64: 1, 64>}, {pipeline_mode = #tpu.pipeline_mode<synchronous>, transform_indices = @transform_6, window_bounds = array<i64: 1, 64>}, {transform_indices = @transform_7, window_bounds = array<i64: 16, 64>}]} {
    %c0_i32 = arith.constant 0 : i32
    %0 = arith.cmpi eq, %arg1, %c0_i32 : i32
    %1 = arith.extui %0 : i1 to i32
    %c0_i32_0 = arith.constant 0 : i32
    %2 = arith.cmpi ne, %1, %c0_i32_0 : i32
    scf.if %2 {
      %cst_16 = arith.constant 0.000000e+00 : f32
      %21 = vector.broadcast %cst_16 : f32 to vector<16x64xf32>
      %c0_17 = arith.constant 0 : index
      %c0_18 = arith.constant 0 : index
      %22 = vector.load %arg10[%c0_17, %c0_18] : memref<16x64xf32, #tpu.memory_space<vmem>>, vector<16x64xf32>
      tpu.vector_store %arg10[%c0_17, %c0_18], %21 {strides = array<i32>} : memref<16x64xf32, #tpu.memory_space<vmem>>, vector<16x64xf32>,
    } else {
    }
    %c0 = arith.constant 0 : index
    %c0_1 = arith.constant 0 : index
    %3 = vector.load %arg2[%c0, %c0_1] : memref<16x64xf32, #tpu.memory_space<vmem>>, vector<16x64xf32>
    %4 = arith.truncf %3 : vector<16x64xf32> to vector<16x64xbf16>
    %c0_2 = arith.constant 0 : index
    %c0_3 = arith.constant 0 : index
    %5 = vector.load %arg3[%c0_2, %c0_3] : memref<64x256xbf16, #tpu.memory_space<vmem>>, vector<64x256xbf16>
    %cst = arith.constant dense<0.000000e+00> : vector<16x256xf32>
    %6 = tpu.matmul %4, %5, %cst {dimension_numbers = #tpu.dot_dimension_numbers<[1], [0], [0], [1], [0, 0, 1, 1], [], []>} : vector<16x64xbf16>, vector<64x256xbf16>, vector<16x256xf32> -> vector<16x256xf32>
    %c0_4 = arith.constant 0 : index
    %c0_5 = arith.constant 0 : index
    %7 = vector.load %arg4[%c0_4, %c0_5] : memref<1x256xf32, #tpu.memory_space<vmem>>, vector<1x256xf32>
    %8 = vector.broadcast %7 : vector<1x256xf32> to vector<16x256xf32>
    %9 = arith.addf %6, %8 : vector<16x256xf32>
    %cst_6 = arith.constant 0.000000e+00 : f32
    %10 = vector.broadcast %cst_6 : f32 to vector<16x256xf32>
    %11 = arith.maximumf %9, %10 : vector<16x256xf32>
    %c0_7 = arith.constant 0 : index
    %c0_8 = arith.constant 0 : index
    %12 = vector.load %arg10[%c0_7, %c0_8] : memref<16x64xf32, #tpu.memory_space<vmem>>, vector<16x64xf32>
    %13 = arith.truncf %11 : vector<16x256xf32> to vector<16x256xbf16>
    %c0_9 = arith.constant 0 : index
    %c0_10 = arith.constant 0 : index
    %14 = vector.load %arg5[%c0_9, %c0_10] : memref<256x64xbf16, #tpu.memory_space<vmem>>, vector<256x64xbf16>
    %cst_11 = arith.constant dense<0.000000e+00> : vector<16x64xf32>
    %15 = tpu.matmul %13, %14, %cst_11 {dimension_numbers = #tpu.dot_dimension_numbers<[1], [0], [0], [1], [0, 0, 1, 1], [], []>} : vector<16x256xbf16>, vector<256x64xbf16>, vector<16x64xf32> -> vector<16x64xf32>
    %16 = arith.addf %12, %15 : vector<16x64xf32>
    %c0_12 = arith.constant 0 : index
    %c0_13 = arith.constant 0 : index
    %17 = vector.load %arg10[%c0_12, %c0_13] : memref<16x64xf32, #tpu.memory_space<vmem>>, vector<16x64xf32>
    tpu.vector_store %arg10[%c0_12, %c0_13], %16 {strides = array<i32>} : memref<16x64xf32, #tpu.memory_space<vmem>>, vector<16x64xf32>,
    %c0_i32_14 = arith.constant 0 : i32
    %18 = arith.cmpi eq, %arg1, %c0_i32_14 : i32
    %19 = arith.extui %18 : i1 to i32
    %c0_i32_15 = arith.constant 0 : i32
    %20 = arith.cmpi ne, %19, %c0_i32_15 : i32
    scf.if %20 {
      %c0_16 = arith.constant 0 : index
      %c0_17 = arith.constant 0 : index
      %21 = vector.load %arg10[%c0_16, %c0_17] : memref<16x64xf32, #tpu.memory_space<vmem>>, vector<16x64xf32>
      %c0_18 = arith.constant 0 : index
      %c0_19 = arith.constant 0 : index
      %22 = vector.load %arg6[%c0_18, %c0_19] : memref<1x64xf32, #tpu.memory_space<vmem>>, vector<1x64xf32>
      %23 = vector.broadcast %22 : vector<1x64xf32> to vector<16x64xf32>
      %24 = arith.addf %21, %23 : vector<16x64xf32>
      %c0_20 = arith.constant 0 : index
      %c0_21 = arith.constant 0 : index
      %25 = vector.load %arg2[%c0_20, %c0_21] : memref<16x64xf32, #tpu.memory_space<vmem>>, vector<16x64xf32>
      %26 = arith.addf %24, %25 : vector<16x64xf32>
      %cst_22 = arith.constant dense<0.000000e+00> : vector<16xf32>
      %27 = vector.multi_reduction <add>, %26, %cst_22 [1] : vector<16x64xf32> to vector<16xf32>
      %28 = vector.shape_cast %27 : vector<16xf32> to vector<16x1xf32>
      %cst_23 = arith.constant 6.400000e+01 : f32
      %29 = vector.broadcast %cst_23 : f32 to vector<16x1xf32>
      %30 = arith.divf %28, %29 : vector<16x1xf32>
      %31 = vector.broadcast %30 : vector<16x1xf32> to vector<16x64xf32>
      %32 = arith.subf %26, %31 : vector<16x64xf32>
      %33 = arith.mulf %32, %32 : vector<16x64xf32>
      %cst_24 = arith.constant dense<0.000000e+00> : vector<16xf32>
      %34 = vector.multi_reduction <add>, %33, %cst_24 [1] : vector<16x64xf32> to vector<16xf32>
      %35 = vector.shape_cast %34 : vector<16xf32> to vector<16x1xf32>
      %cst_25 = arith.constant 6.400000e+01 : f32
      %36 = vector.broadcast %cst_25 : f32 to vector<16x1xf32>
      %37 = arith.divf %35, %36 : vector<16x1xf32>
      %38 = vector.broadcast %30 : vector<16x1xf32> to vector<16x64xf32>
      %39 = arith.subf %26, %38 : vector<16x64xf32>
      %cst_26 = arith.constant 9.99999974E-6 : f32
      %40 = vector.broadcast %cst_26 : f32 to vector<16x1xf32>
      %41 = arith.addf %37, %40 : vector<16x1xf32>
      %42 = math.rsqrt %41 : vector<16x1xf32>
      %43 = vector.broadcast %42 : vector<16x1xf32> to vector<16x64xf32>
      %44 = arith.mulf %39, %43 : vector<16x64xf32>
      %c0_27 = arith.constant 0 : index
      %c0_28 = arith.constant 0 : index
      %45 = vector.load %arg7[%c0_27, %c0_28] : memref<1x64xf32, #tpu.memory_space<vmem>>, vector<1x64xf32>
      %46 = vector.broadcast %45 : vector<1x64xf32> to vector<16x64xf32>
      %47 = arith.mulf %44, %46 : vector<16x64xf32>
      %c0_29 = arith.constant 0 : index
      %c0_30 = arith.constant 0 : index
      %48 = vector.load %arg8[%c0_29, %c0_30] : memref<1x64xf32, #tpu.memory_space<vmem>>, vector<1x64xf32>
      %49 = vector.broadcast %48 : vector<1x64xf32> to vector<16x64xf32>
      %50 = arith.addf %47, %49 : vector<16x64xf32>
      %c0_31 = arith.constant 0 : index
      %c0_32 = arith.constant 0 : index
      %51 = vector.load %arg9[%c0_31, %c0_32] : memref<16x64xf32, #tpu.memory_space<vmem>>, vector<16x64xf32>
      tpu.vector_store %arg9[%c0_31, %c0_32], %50 {strides = array<i32>} : memref<16x64xf32, #tpu.memory_space<vmem>>, vector<16x64xf32>,
    } else {
    }
    return
  }
  func.func @transform_0(%arg0: i32, %arg1: i32) -> (i32, i32) {
    %c0_i32 = arith.constant 0 : i32
    %c0_i32_0 = arith.constant 0 : i32
    return %arg0, %c0_i32 : i32, i32
  }
  func.func @transform_1(%arg0: i32, %arg1: i32) -> (i32, i32) {
    %c0_i32 = arith.constant 0 : i32
    %c0_i32_0 = arith.constant 0 : i32
    return %c0_i32, %arg1 : i32, i32
  }
  func.func @transform_2(%arg0: i32, %arg1: i32) -> (i32, i32) {
    %c0_i32 = arith.constant 0 : i32
    %c0_i32_0 = arith.constant 0 : i32
    return %c0_i32, %arg1 : i32, i32
  }
  func.func @transform_3(%arg0: i32, %arg1: i32) -> (i32, i32) {
    %c0_i32 = arith.constant 0 : i32
    %c0_i32_0 = arith.constant 0 : i32
    return %arg1, %c0_i32 : i32, i32
  }
  func.func @transform_4(%arg0: i32, %arg1: i32) -> (i32, i32) {
    %c0_i32 = arith.constant 0 : i32
    %c0_i32_0 = arith.constant 0 : i32
    %c0_i32_1 = arith.constant 0 : i32
    return %c0_i32, %c0_i32_0 : i32, i32
  }
  func.func @transform_5(%arg0: i32, %arg1: i32) -> (i32, i32) {
    %c0_i32 = arith.constant 0 : i32
    %c0_i32_0 = arith.constant 0 : i32
    %c0_i32_1 = arith.constant 0 : i32
    return %c0_i32, %c0_i32_0 : i32, i32
  }
  func.func @transform_6(%arg0: i32, %arg1: i32) -> (i32, i32) {
    %c0_i32 = arith.constant 0 : i32
    %c0_i32_0 = arith.constant 0 : i32
    %c0_i32_1 = arith.constant 0 : i32
    return %c0_i32, %c0_i32_0 : i32, i32
  }
  func.func @transform_7(%arg0: i32, %arg1: i32) -> (i32, i32) {
    %c0_i32 = arith.constant 0 : i32
    %c0_i32_0 = arith.constant 0 : i32
    return %arg0, %c0_i32 : i32, i32
  }
}

module attributes {stable_mosaic.version = 11 : i64} {
  func.func @_attn_block_kernel(%arg0: i32, %arg1: i32, %arg2: memref<1x8x64xf32, #tpu.memory_space<vmem>>, %arg3: memref<1x8x64xf32, #tpu.memory_space<vmem>>, %arg4: memref<8x64x8xbf16, #tpu.memory_space<vmem>>, %arg5: memref<8x1x8xf32, #tpu.memory_space<vmem>>, %arg6: memref<8x64x8xbf16, #tpu.memory_space<vmem>>, %arg7: memref<8x1x8xf32, #tpu.memory_space<vmem>>, %arg8: memref<8x64x8xbf16, #tpu.memory_space<vmem>>, %arg9: memref<8x1x8xf32, #tpu.memory_space<vmem>>, %arg10: memref<8x8x64xbf16, #tpu.memory_space<vmem>>, %arg11: memref<1x64xf32, #tpu.memory_space<vmem>>, %arg12: memref<1x64xf32, #tpu.memory_space<vmem>>, %arg13: memref<1x64xf32, #tpu.memory_space<vmem>>, %arg14: memref<1x8x64xf32, #tpu.memory_space<vmem>>) attributes {dimension_semantics = [#tpu.dimension_semantics<parallel>, #tpu.dimension_semantics<parallel>], iteration_bounds = array<i64: 2, 1>, scalar_prefetch = 0 : i64, scratch_operands = 0 : i64, tpu.core_type = #tpu.core_type<tc>, window_params = [{transform_indices = @transform_0, window_bounds = array<i64: 1, 8, 64>}, {transform_indices = @transform_1, window_bounds = array<i64: 1, 8, 64>}, {pipeline_mode = #tpu.pipeline_mode<synchronous>, transform_indices = @transform_2, window_bounds = array<i64: 8, 64, 8>}, {pipeline_mode = #tpu.pipeline_mode<synchronous>, transform_indices = @transform_3, window_bounds = array<i64: 8, 1, 8>}, {pipeline_mode = #tpu.pipeline_mode<synchronous>, transform_indices = @transform_4, window_bounds = array<i64: 8, 64, 8>}, {pipeline_mode = #tpu.pipeline_mode<synchronous>, transform_indices = @transform_5, window_bounds = array<i64: 8, 1, 8>}, {pipeline_mode = #tpu.pipeline_mode<synchronous>, transform_indices = @transform_6, window_bounds = array<i64: 8, 64, 8>}, {pipeline_mode = #tpu.pipeline_mode<synchronous>, transform_indices = @transform_7, window_bounds = array<i64: 8, 1, 8>}, {pipeline_mode = #tpu.pipeline_mode<synchronous>, transform_indices = @transform_8, window_bounds = array<i64: 8, 8, 64>}, {pipeline_mode = #tpu.pipeline_mode<synchronous>, transform_indices = @transform_9, window_bounds = array<i64: 1, 64>}, {pipeline_mode = #tpu.pipeline_mode<synchronous>, transform_indices = @transform_10, window_bounds = array<i64: 1, 64>}, {pipeline_mode = #tpu.pipeline_mode<synchronous>, transform_indices = @transform_11, window_bounds = array<i64: 1, 64>}, {transform_indices = @transform_12, window_bounds = array<i64: 1, 8, 64>}]} {
    %c0 = arith.constant 0 : index
    %c0_0 = arith.constant 0 : index
    %c0_1 = arith.constant 0 : index
    %0 = vector.load %arg2[%c0, %c0_0, %c0_1] : memref<1x8x64xf32, #tpu.memory_space<vmem>>, vector<1x8x64xf32>
    %1 = vector.shape_cast %0 : vector<1x8x64xf32> to vector<8x64xf32>
    %c0_2 = arith.constant 0 : index
    %c0_3 = arith.constant 0 : index
    %c0_4 = arith.constant 0 : index
    %2 = vector.load %arg3[%c0_2, %c0_3, %c0_4] : memref<1x8x64xf32, #tpu.memory_space<vmem>>, vector<1x8x64xf32>
    %3 = vector.shape_cast %2 : vector<1x8x64xf32> to vector<8x64xf32>
    %4 = arith.truncf %1 : vector<8x64xf32> to vector<8x64xbf16>
    %5 = arith.truncf %3 : vector<8x64xf32> to vector<8x64xbf16>
    %c0_5 = arith.constant 0 : index
    %c0_6 = arith.constant 0 : index
    %6 = vector.load %arg11[%c0_5, %c0_6] : memref<1x64xf32, #tpu.memory_space<vmem>>, vector<1x64xf32>
    %7 = vector.broadcast %6 : vector<1x64xf32> to vector<8x64xf32>
    %8 = arith.addf %1, %7 : vector<8x64xf32>
    %c0_7 = arith.constant 0 : index
    %c0_8 = arith.constant 0 : index
    %c0_9 = arith.constant 0 : index
    %9 = vector.load %arg4[%c0_7, %c0_8, %c0_9] : memref<8x64x8xbf16, #tpu.memory_space<vmem>>, vector<1x64x8xbf16>
    %10 = vector.shape_cast %9 : vector<1x64x8xbf16> to vector<64x8xbf16>
    %cst = arith.constant dense<0.000000e+00> : vector<8x8xf32>
    %11 = tpu.matmul %4, %10, %cst {dimension_numbers = #tpu.dot_dimension_numbers<[1], [0], [0], [1], [0, 0, 1, 1], [], []>} : vector<8x64xbf16>, vector<64x8xbf16>, vector<8x8xf32> -> vector<8x8xf32>
    %c0_10 = arith.constant 0 : index
    %c0_11 = arith.constant 0 : index
    %c0_12 = arith.constant 0 : index
    %12 = vector.load %arg5[%c0_10, %c0_11, %c0_12] : memref<8x1x8xf32, #tpu.memory_space<vmem>>, vector<1x1x8xf32>
    %13 = vector.shape_cast %12 : vector<1x1x8xf32> to vector<1x8xf32>
    %14 = vector.broadcast %13 : vector<1x8xf32> to vector<8x8xf32>
    %15 = arith.addf %11, %14 : vector<8x8xf32>
    %c0_13 = arith.constant 0 : index
    %c0_14 = arith.constant 0 : index
    %c0_15 = arith.constant 0 : index
    %16 = vector.load %arg6[%c0_13, %c0_14, %c0_15] : memref<8x64x8xbf16, #tpu.memory_space<vmem>>, vector<1x64x8xbf16>
    %17 = vector.shape_cast %16 : vector<1x64x8xbf16> to vector<64x8xbf16>
    %cst_16 = arith.constant dense<0.000000e+00> : vector<8x8xf32>
    %18 = tpu.matmul %5, %17, %cst_16 {dimension_numbers = #tpu.dot_dimension_numbers<[1], [0], [0], [1], [0, 0, 1, 1], [], []>} : vector<8x64xbf16>, vector<64x8xbf16>, vector<8x8xf32> -> vector<8x8xf32>
    %c0_17 = arith.constant 0 : index
    %c0_18 = arith.constant 0 : index
    %c0_19 = arith.constant 0 : index
    %19 = vector.load %arg7[%c0_17, %c0_18, %c0_19] : memref<8x1x8xf32, #tpu.memory_space<vmem>>, vector<1x1x8xf32>
    %20 = vector.shape_cast %19 : vector<1x1x8xf32> to vector<1x8xf32>
    %21 = vector.broadcast %20 : vector<1x8xf32> to vector<8x8xf32>
    %22 = arith.addf %18, %21 : vector<8x8xf32>
    %c0_20 = arith.constant 0 : index
    %c0_21 = arith.constant 0 : index
    %c0_22 = arith.constant 0 : index
    %23 = vector.load %arg8[%c0_20, %c0_21, %c0_22] : memref<8x64x8xbf16, #tpu.memory_space<vmem>>, vector<1x64x8xbf16>
    %24 = vector.shape_cast %23 : vector<1x64x8xbf16> to vector<64x8xbf16>
    %cst_23 = arith.constant dense<0.000000e+00> : vector<8x8xf32>
    %25 = tpu.matmul %5, %24, %cst_23 {dimension_numbers = #tpu.dot_dimension_numbers<[1], [0], [0], [1], [0, 0, 1, 1], [], []>} : vector<8x64xbf16>, vector<64x8xbf16>, vector<8x8xf32> -> vector<8x8xf32>
    %c0_24 = arith.constant 0 : index
    %c0_25 = arith.constant 0 : index
    %c0_26 = arith.constant 0 : index
    %26 = vector.load %arg9[%c0_24, %c0_25, %c0_26] : memref<8x1x8xf32, #tpu.memory_space<vmem>>, vector<1x1x8xf32>
    %27 = vector.shape_cast %26 : vector<1x1x8xf32> to vector<1x8xf32>
    %28 = vector.broadcast %27 : vector<1x8xf32> to vector<8x8xf32>
    %29 = arith.addf %25, %28 : vector<8x8xf32>
    %30 = arith.truncf %15 : vector<8x8xf32> to vector<8x8xbf16>
    %31 = arith.truncf %22 : vector<8x8xf32> to vector<8x8xbf16>
    %cst_27 = arith.constant dense<0.000000e+00> : vector<8x8xf32>
    %32 = tpu.matmul %30, %31, %cst_27 {dimension_numbers = #tpu.dot_dimension_numbers<[1], [1], [0], [0], [0, 0, 1, 0], [], []>} : vector<8x8xbf16>, vector<8x8xbf16>, vector<8x8xf32> -> vector<8x8xf32>
    %cst_28 = arith.constant 0.353553385 : f32
    %33 = vector.broadcast %cst_28 : f32 to vector<8x8xf32>
    %34 = arith.mulf %32, %33 : vector<8x8xf32>
    %cst_29 = arith.constant dense<0xFF800000> : vector<8xf32>
    %35 = vector.multi_reduction <maximumf>, %34, %cst_29 [1] : vector<8x8xf32> to vector<8xf32>
    %36 = vector.shape_cast %35 : vector<8xf32> to vector<8x1xf32>
    %37 = vector.broadcast %36 : vector<8x1xf32> to vector<8x8xf32>
    %38 = arith.subf %34, %37 : vector<8x8xf32>
    %39 = math.exp %38 : vector<8x8xf32>
    %cst_30 = arith.constant dense<0.000000e+00> : vector<8xf32>
    %40 = vector.multi_reduction <add>, %39, %cst_30 [1] : vector<8x8xf32> to vector<8xf32>
    %41 = vector.shape_cast %40 : vector<8xf32> to vector<8x1xf32>
    %42 = vector.broadcast %41 : vector<8x1xf32> to vector<8x8xf32>
    %43 = arith.divf %39, %42 : vector<8x8xf32>
    %44 = arith.truncf %43 : vector<8x8xf32> to vector<8x8xbf16>
    %45 = arith.truncf %29 : vector<8x8xf32> to vector<8x8xbf16>
    %cst_31 = arith.constant dense<0.000000e+00> : vector<8x8xf32>
    %46 = tpu.matmul %44, %45, %cst_31 {dimension_numbers = #tpu.dot_dimension_numbers<[1], [0], [0], [1], [0, 0, 1, 1], [], []>} : vector<8x8xbf16>, vector<8x8xbf16>, vector<8x8xf32> -> vector<8x8xf32>
    %47 = arith.truncf %46 : vector<8x8xf32> to vector<8x8xbf16>
    %c0_32 = arith.constant 0 : index
    %c0_33 = arith.constant 0 : index
    %c0_34 = arith.constant 0 : index
    %48 = vector.load %arg10[%c0_32, %c0_33, %c0_34] : memref<8x8x64xbf16, #tpu.memory_space<vmem>>, vector<1x8x64xbf16>
    %49 = vector.shape_cast %48 : vector<1x8x64xbf16> to vector<8x64xbf16>
    %cst_35 = arith.constant dense<0.000000e+00> : vector<8x64xf32>
    %50 = tpu.matmul %47, %49, %cst_35 {dimension_numbers = #tpu.dot_dimension_numbers<[1], [0], [0], [1], [0, 0, 1, 1], [], []>} : vector<8x8xbf16>, vector<8x64xbf16>, vector<8x64xf32> -> vector<8x64xf32>
    %51 = arith.addf %8, %50 : vector<8x64xf32>
    %c1 = arith.constant 1 : index
    %c0_36 = arith.constant 0 : index
    %c0_37 = arith.constant 0 : index
    %52 = vector.load %arg4[%c1, %c0_36, %c0_37] : memref<8x64x8xbf16, #tpu.memory_space<vmem>>, vector<1x64x8xbf16>
    %53 = vector.shape_cast %52 : vector<1x64x8xbf16> to vector<64x8xbf16>
    %cst_38 = arith.constant dense<0.000000e+00> : vector<8x8xf32>
    %54 = tpu.matmul %4, %53, %cst_38 {dimension_numbers = #tpu.dot_dimension_numbers<[1], [0], [0], [1], [0, 0, 1, 1], [], []>} : vector<8x64xbf16>, vector<64x8xbf16>, vector<8x8xf32> -> vector<8x8xf32>
    %c1_39 = arith.constant 1 : index
    %c0_40 = arith.constant 0 : index
    %c0_41 = arith.constant 0 : index
    %55 = vector.load %arg5[%c1_39, %c0_40, %c0_41] : memref<8x1x8xf32, #tpu.memory_space<vmem>>, vector<1x1x8xf32>
    %56 = vector.shape_cast %55 : vector<1x1x8xf32> to vector<1x8xf32>
    %57 = vector.broadcast %56 : vector<1x8xf32> to vector<8x8xf32>
    %58 = arith.addf %54, %57 : vector<8x8xf32>
    %c1_42 = arith.constant 1 : index
    %c0_43 = arith.constant 0 : index
    %c0_44 = arith.constant 0 : index
    %59 = vector.load %arg6[%c1_42, %c0_43, %c0_44] : memref<8x64x8xbf16, #tpu.memory_space<vmem>>, vector<1x64x8xbf16>
    %60 = vector.shape_cast %59 : vector<1x64x8xbf16> to vector<64x8xbf16>
    %cst_45 = arith.constant dense<0.000000e+00> : vector<8x8xf32>
    %61 = tpu.matmul %5, %60, %cst_45 {dimension_numbers = #tpu.dot_dimension_numbers<[1], [0], [0], [1], [0, 0, 1, 1], [], []>} : vector<8x64xbf16>, vector<64x8xbf16>, vector<8x8xf32> -> vector<8x8xf32>
    %c1_46 = arith.constant 1 : index
    %c0_47 = arith.constant 0 : index
    %c0_48 = arith.constant 0 : index
    %62 = vector.load %arg7[%c1_46, %c0_47, %c0_48] : memref<8x1x8xf32, #tpu.memory_space<vmem>>, vector<1x1x8xf32>
    %63 = vector.shape_cast %62 : vector<1x1x8xf32> to vector<1x8xf32>
    %64 = vector.broadcast %63 : vector<1x8xf32> to vector<8x8xf32>
    %65 = arith.addf %61, %64 : vector<8x8xf32>
    %c1_49 = arith.constant 1 : index
    %c0_50 = arith.constant 0 : index
    %c0_51 = arith.constant 0 : index
    %66 = vector.load %arg8[%c1_49, %c0_50, %c0_51] : memref<8x64x8xbf16, #tpu.memory_space<vmem>>, vector<1x64x8xbf16>
    %67 = vector.shape_cast %66 : vector<1x64x8xbf16> to vector<64x8xbf16>
    %cst_52 = arith.constant dense<0.000000e+00> : vector<8x8xf32>
    %68 = tpu.matmul %5, %67, %cst_52 {dimension_numbers = #tpu.dot_dimension_numbers<[1], [0], [0], [1], [0, 0, 1, 1], [], []>} : vector<8x64xbf16>, vector<64x8xbf16>, vector<8x8xf32> -> vector<8x8xf32>
    %c1_53 = arith.constant 1 : index
    %c0_54 = arith.constant 0 : index
    %c0_55 = arith.constant 0 : index
    %69 = vector.load %arg9[%c1_53, %c0_54, %c0_55] : memref<8x1x8xf32, #tpu.memory_space<vmem>>, vector<1x1x8xf32>
    %70 = vector.shape_cast %69 : vector<1x1x8xf32> to vector<1x8xf32>
    %71 = vector.broadcast %70 : vector<1x8xf32> to vector<8x8xf32>
    %72 = arith.addf %68, %71 : vector<8x8xf32>
    %73 = arith.truncf %58 : vector<8x8xf32> to vector<8x8xbf16>
    %74 = arith.truncf %65 : vector<8x8xf32> to vector<8x8xbf16>
    %cst_56 = arith.constant dense<0.000000e+00> : vector<8x8xf32>
    %75 = tpu.matmul %73, %74, %cst_56 {dimension_numbers = #tpu.dot_dimension_numbers<[1], [1], [0], [0], [0, 0, 1, 0], [], []>} : vector<8x8xbf16>, vector<8x8xbf16>, vector<8x8xf32> -> vector<8x8xf32>
    %cst_57 = arith.constant 0.353553385 : f32
    %76 = vector.broadcast %cst_57 : f32 to vector<8x8xf32>
    %77 = arith.mulf %75, %76 : vector<8x8xf32>
    %cst_58 = arith.constant dense<0xFF800000> : vector<8xf32>
    %78 = vector.multi_reduction <maximumf>, %77, %cst_58 [1] : vector<8x8xf32> to vector<8xf32>
    %79 = vector.shape_cast %78 : vector<8xf32> to vector<8x1xf32>
    %80 = vector.broadcast %79 : vector<8x1xf32> to vector<8x8xf32>
    %81 = arith.subf %77, %80 : vector<8x8xf32>
    %82 = math.exp %81 : vector<8x8xf32>
    %cst_59 = arith.constant dense<0.000000e+00> : vector<8xf32>
    %83 = vector.multi_reduction <add>, %82, %cst_59 [1] : vector<8x8xf32> to vector<8xf32>
    %84 = vector.shape_cast %83 : vector<8xf32> to vector<8x1xf32>
    %85 = vector.broadcast %84 : vector<8x1xf32> to vector<8x8xf32>
    %86 = arith.divf %82, %85 : vector<8x8xf32>
    %87 = arith.truncf %86 : vector<8x8xf32> to vector<8x8xbf16>
    %88 = arith.truncf %72 : vector<8x8xf32> to vector<8x8xbf16>
    %cst_60 = arith.constant dense<0.000000e+00> : vector<8x8xf32>
    %89 = tpu.matmul %87, %88, %cst_60 {dimension_numbers = #tpu.dot_dimension_numbers<[1], [0], [0], [1], [0, 0, 1, 1], [], []>} : vector<8x8xbf16>, vector<8x8xbf16>, vector<8x8xf32> -> vector<8x8xf32>
    %90 = arith.truncf %89 : vector<8x8xf32> to vector<8x8xbf16>
    %c1_61 = arith.constant 1 : index
    %c0_62 = arith.constant 0 : index
    %c0_63 = arith.constant 0 : index
    %91 = vector.load %arg10[%c1_61, %c0_62, %c0_63] : memref<8x8x64xbf16, #tpu.memory_space<vmem>>, vector<1x8x64xbf16>
    %92 = vector.shape_cast %91 : vector<1x8x64xbf16> to vector<8x64xbf16>
    %cst_64 = arith.constant dense<0.000000e+00> : vector<8x64xf32>
    %93 = tpu.matmul %90, %92, %cst_64 {dimension_numbers = #tpu.dot_dimension_numbers<[1], [0], [0], [1], [0, 0, 1, 1], [], []>} : vector<8x8xbf16>, vector<8x64xbf16>, vector<8x64xf32> -> vector<8x64xf32>
    %94 = arith.addf %51, %93 : vector<8x64xf32>
    %c2 = arith.constant 2 : index
    %c0_65 = arith.constant 0 : index
    %c0_66 = arith.constant 0 : index
    %95 = vector.load %arg4[%c2, %c0_65, %c0_66] : memref<8x64x8xbf16, #tpu.memory_space<vmem>>, vector<1x64x8xbf16>
    %96 = vector.shape_cast %95 : vector<1x64x8xbf16> to vector<64x8xbf16>
    %cst_67 = arith.constant dense<0.000000e+00> : vector<8x8xf32>
    %97 = tpu.matmul %4, %96, %cst_67 {dimension_numbers = #tpu.dot_dimension_numbers<[1], [0], [0], [1], [0, 0, 1, 1], [], []>} : vector<8x64xbf16>, vector<64x8xbf16>, vector<8x8xf32> -> vector<8x8xf32>
    %c2_68 = arith.constant 2 : index
    %c0_69 = arith.constant 0 : index
    %c0_70 = arith.constant 0 : index
    %98 = vector.load %arg5[%c2_68, %c0_69, %c0_70] : memref<8x1x8xf32, #tpu.memory_space<vmem>>, vector<1x1x8xf32>
    %99 = vector.shape_cast %98 : vector<1x1x8xf32> to vector<1x8xf32>
    %100 = vector.broadcast %99 : vector<1x8xf32> to vector<8x8xf32>
    %101 = arith.addf %97, %100 : vector<8x8xf32>
    %c2_71 = arith.constant 2 : index
    %c0_72 = arith.constant 0 : index
    %c0_73 = arith.constant 0 : index
    %102 = vector.load %arg6[%c2_71, %c0_72, %c0_73] : memref<8x64x8xbf16, #tpu.memory_space<vmem>>, vector<1x64x8xbf16>
    %103 = vector.shape_cast %102 : vector<1x64x8xbf16> to vector<64x8xbf16>
    %cst_74 = arith.constant dense<0.000000e+00> : vector<8x8xf32>
    %104 = tpu.matmul %5, %103, %cst_74 {dimension_numbers = #tpu.dot_dimension_numbers<[1], [0], [0], [1], [0, 0, 1, 1], [], []>} : vector<8x64xbf16>, vector<64x8xbf16>, vector<8x8xf32> -> vector<8x8xf32>
    %c2_75 = arith.constant 2 : index
    %c0_76 = arith.constant 0 : index
    %c0_77 = arith.constant 0 : index
    %105 = vector.load %arg7[%c2_75, %c0_76, %c0_77] : memref<8x1x8xf32, #tpu.memory_space<vmem>>, vector<1x1x8xf32>
    %106 = vector.shape_cast %105 : vector<1x1x8xf32> to vector<1x8xf32>
    %107 = vector.broadcast %106 : vector<1x8xf32> to vector<8x8xf32>
    %108 = arith.addf %104, %107 : vector<8x8xf32>
    %c2_78 = arith.constant 2 : index
    %c0_79 = arith.constant 0 : index
    %c0_80 = arith.constant 0 : index
    %109 = vector.load %arg8[%c2_78, %c0_79, %c0_80] : memref<8x64x8xbf16, #tpu.memory_space<vmem>>, vector<1x64x8xbf16>
    %110 = vector.shape_cast %109 : vector<1x64x8xbf16> to vector<64x8xbf16>
    %cst_81 = arith.constant dense<0.000000e+00> : vector<8x8xf32>
    %111 = tpu.matmul %5, %110, %cst_81 {dimension_numbers = #tpu.dot_dimension_numbers<[1], [0], [0], [1], [0, 0, 1, 1], [], []>} : vector<8x64xbf16>, vector<64x8xbf16>, vector<8x8xf32> -> vector<8x8xf32>
    %c2_82 = arith.constant 2 : index
    %c0_83 = arith.constant 0 : index
    %c0_84 = arith.constant 0 : index
    %112 = vector.load %arg9[%c2_82, %c0_83, %c0_84] : memref<8x1x8xf32, #tpu.memory_space<vmem>>, vector<1x1x8xf32>
    %113 = vector.shape_cast %112 : vector<1x1x8xf32> to vector<1x8xf32>
    %114 = vector.broadcast %113 : vector<1x8xf32> to vector<8x8xf32>
    %115 = arith.addf %111, %114 : vector<8x8xf32>
    %116 = arith.truncf %101 : vector<8x8xf32> to vector<8x8xbf16>
    %117 = arith.truncf %108 : vector<8x8xf32> to vector<8x8xbf16>
    %cst_85 = arith.constant dense<0.000000e+00> : vector<8x8xf32>
    %118 = tpu.matmul %116, %117, %cst_85 {dimension_numbers = #tpu.dot_dimension_numbers<[1], [1], [0], [0], [0, 0, 1, 0], [], []>} : vector<8x8xbf16>, vector<8x8xbf16>, vector<8x8xf32> -> vector<8x8xf32>
    %cst_86 = arith.constant 0.353553385 : f32
    %119 = vector.broadcast %cst_86 : f32 to vector<8x8xf32>
    %120 = arith.mulf %118, %119 : vector<8x8xf32>
    %cst_87 = arith.constant dense<0xFF800000> : vector<8xf32>
    %121 = vector.multi_reduction <maximumf>, %120, %cst_87 [1] : vector<8x8xf32> to vector<8xf32>
    %122 = vector.shape_cast %121 : vector<8xf32> to vector<8x1xf32>
    %123 = vector.broadcast %122 : vector<8x1xf32> to vector<8x8xf32>
    %124 = arith.subf %120, %123 : vector<8x8xf32>
    %125 = math.exp %124 : vector<8x8xf32>
    %cst_88 = arith.constant dense<0.000000e+00> : vector<8xf32>
    %126 = vector.multi_reduction <add>, %125, %cst_88 [1] : vector<8x8xf32> to vector<8xf32>
    %127 = vector.shape_cast %126 : vector<8xf32> to vector<8x1xf32>
    %128 = vector.broadcast %127 : vector<8x1xf32> to vector<8x8xf32>
    %129 = arith.divf %125, %128 : vector<8x8xf32>
    %130 = arith.truncf %129 : vector<8x8xf32> to vector<8x8xbf16>
    %131 = arith.truncf %115 : vector<8x8xf32> to vector<8x8xbf16>
    %cst_89 = arith.constant dense<0.000000e+00> : vector<8x8xf32>
    %132 = tpu.matmul %130, %131, %cst_89 {dimension_numbers = #tpu.dot_dimension_numbers<[1], [0], [0], [1], [0, 0, 1, 1], [], []>} : vector<8x8xbf16>, vector<8x8xbf16>, vector<8x8xf32> -> vector<8x8xf32>
    %133 = arith.truncf %132 : vector<8x8xf32> to vector<8x8xbf16>
    %c2_90 = arith.constant 2 : index
    %c0_91 = arith.constant 0 : index
    %c0_92 = arith.constant 0 : index
    %134 = vector.load %arg10[%c2_90, %c0_91, %c0_92] : memref<8x8x64xbf16, #tpu.memory_space<vmem>>, vector<1x8x64xbf16>
    %135 = vector.shape_cast %134 : vector<1x8x64xbf16> to vector<8x64xbf16>
    %cst_93 = arith.constant dense<0.000000e+00> : vector<8x64xf32>
    %136 = tpu.matmul %133, %135, %cst_93 {dimension_numbers = #tpu.dot_dimension_numbers<[1], [0], [0], [1], [0, 0, 1, 1], [], []>} : vector<8x8xbf16>, vector<8x64xbf16>, vector<8x64xf32> -> vector<8x64xf32>
    %137 = arith.addf %94, %136 : vector<8x64xf32>
    %c3 = arith.constant 3 : index
    %c0_94 = arith.constant 0 : index
    %c0_95 = arith.constant 0 : index
    %138 = vector.load %arg4[%c3, %c0_94, %c0_95] : memref<8x64x8xbf16, #tpu.memory_space<vmem>>, vector<1x64x8xbf16>
    %139 = vector.shape_cast %138 : vector<1x64x8xbf16> to vector<64x8xbf16>
    %cst_96 = arith.constant dense<0.000000e+00> : vector<8x8xf32>
    %140 = tpu.matmul %4, %139, %cst_96 {dimension_numbers = #tpu.dot_dimension_numbers<[1], [0], [0], [1], [0, 0, 1, 1], [], []>} : vector<8x64xbf16>, vector<64x8xbf16>, vector<8x8xf32> -> vector<8x8xf32>
    %c3_97 = arith.constant 3 : index
    %c0_98 = arith.constant 0 : index
    %c0_99 = arith.constant 0 : index
    %141 = vector.load %arg5[%c3_97, %c0_98, %c0_99] : memref<8x1x8xf32, #tpu.memory_space<vmem>>, vector<1x1x8xf32>
    %142 = vector.shape_cast %141 : vector<1x1x8xf32> to vector<1x8xf32>
    %143 = vector.broadcast %142 : vector<1x8xf32> to vector<8x8xf32>
    %144 = arith.addf %140, %143 : vector<8x8xf32>
    %c3_100 = arith.constant 3 : index
    %c0_101 = arith.constant 0 : index
    %c0_102 = arith.constant 0 : index
    %145 = vector.load %arg6[%c3_100, %c0_101, %c0_102] : memref<8x64x8xbf16, #tpu.memory_space<vmem>>, vector<1x64x8xbf16>
    %146 = vector.shape_cast %145 : vector<1x64x8xbf16> to vector<64x8xbf16>
    %cst_103 = arith.constant dense<0.000000e+00> : vector<8x8xf32>
    %147 = tpu.matmul %5, %146, %cst_103 {dimension_numbers = #tpu.dot_dimension_numbers<[1], [0], [0], [1], [0, 0, 1, 1], [], []>} : vector<8x64xbf16>, vector<64x8xbf16>, vector<8x8xf32> -> vector<8x8xf32>
    %c3_104 = arith.constant 3 : index
    %c0_105 = arith.constant 0 : index
    %c0_106 = arith.constant 0 : index
    %148 = vector.load %arg7[%c3_104, %c0_105, %c0_106] : memref<8x1x8xf32, #tpu.memory_space<vmem>>, vector<1x1x8xf32>
    %149 = vector.shape_cast %148 : vector<1x1x8xf32> to vector<1x8xf32>
    %150 = vector.broadcast %149 : vector<1x8xf32> to vector<8x8xf32>
    %151 = arith.addf %147, %150 : vector<8x8xf32>
    %c3_107 = arith.constant 3 : index
    %c0_108 = arith.constant 0 : index
    %c0_109 = arith.constant 0 : index
    %152 = vector.load %arg8[%c3_107, %c0_108, %c0_109] : memref<8x64x8xbf16, #tpu.memory_space<vmem>>, vector<1x64x8xbf16>
    %153 = vector.shape_cast %152 : vector<1x64x8xbf16> to vector<64x8xbf16>
    %cst_110 = arith.constant dense<0.000000e+00> : vector<8x8xf32>
    %154 = tpu.matmul %5, %153, %cst_110 {dimension_numbers = #tpu.dot_dimension_numbers<[1], [0], [0], [1], [0, 0, 1, 1], [], []>} : vector<8x64xbf16>, vector<64x8xbf16>, vector<8x8xf32> -> vector<8x8xf32>
    %c3_111 = arith.constant 3 : index
    %c0_112 = arith.constant 0 : index
    %c0_113 = arith.constant 0 : index
    %155 = vector.load %arg9[%c3_111, %c0_112, %c0_113] : memref<8x1x8xf32, #tpu.memory_space<vmem>>, vector<1x1x8xf32>
    %156 = vector.shape_cast %155 : vector<1x1x8xf32> to vector<1x8xf32>
    %157 = vector.broadcast %156 : vector<1x8xf32> to vector<8x8xf32>
    %158 = arith.addf %154, %157 : vector<8x8xf32>
    %159 = arith.truncf %144 : vector<8x8xf32> to vector<8x8xbf16>
    %160 = arith.truncf %151 : vector<8x8xf32> to vector<8x8xbf16>
    %cst_114 = arith.constant dense<0.000000e+00> : vector<8x8xf32>
    %161 = tpu.matmul %159, %160, %cst_114 {dimension_numbers = #tpu.dot_dimension_numbers<[1], [1], [0], [0], [0, 0, 1, 0], [], []>} : vector<8x8xbf16>, vector<8x8xbf16>, vector<8x8xf32> -> vector<8x8xf32>
    %cst_115 = arith.constant 0.353553385 : f32
    %162 = vector.broadcast %cst_115 : f32 to vector<8x8xf32>
    %163 = arith.mulf %161, %162 : vector<8x8xf32>
    %cst_116 = arith.constant dense<0xFF800000> : vector<8xf32>
    %164 = vector.multi_reduction <maximumf>, %163, %cst_116 [1] : vector<8x8xf32> to vector<8xf32>
    %165 = vector.shape_cast %164 : vector<8xf32> to vector<8x1xf32>
    %166 = vector.broadcast %165 : vector<8x1xf32> to vector<8x8xf32>
    %167 = arith.subf %163, %166 : vector<8x8xf32>
    %168 = math.exp %167 : vector<8x8xf32>
    %cst_117 = arith.constant dense<0.000000e+00> : vector<8xf32>
    %169 = vector.multi_reduction <add>, %168, %cst_117 [1] : vector<8x8xf32> to vector<8xf32>
    %170 = vector.shape_cast %169 : vector<8xf32> to vector<8x1xf32>
    %171 = vector.broadcast %170 : vector<8x1xf32> to vector<8x8xf32>
    %172 = arith.divf %168, %171 : vector<8x8xf32>
    %173 = arith.truncf %172 : vector<8x8xf32> to vector<8x8xbf16>
    %174 = arith.truncf %158 : vector<8x8xf32> to vector<8x8xbf16>
    %cst_118 = arith.constant dense<0.000000e+00> : vector<8x8xf32>
    %175 = tpu.matmul %173, %174, %cst_118 {dimension_numbers = #tpu.dot_dimension_numbers<[1], [0], [0], [1], [0, 0, 1, 1], [], []>} : vector<8x8xbf16>, vector<8x8xbf16>, vector<8x8xf32> -> vector<8x8xf32>
    %176 = arith.truncf %175 : vector<8x8xf32> to vector<8x8xbf16>
    %c3_119 = arith.constant 3 : index
    %c0_120 = arith.constant 0 : index
    %c0_121 = arith.constant 0 : index
    %177 = vector.load %arg10[%c3_119, %c0_120, %c0_121] : memref<8x8x64xbf16, #tpu.memory_space<vmem>>, vector<1x8x64xbf16>
    %178 = vector.shape_cast %177 : vector<1x8x64xbf16> to vector<8x64xbf16>
    %cst_122 = arith.constant dense<0.000000e+00> : vector<8x64xf32>
    %179 = tpu.matmul %176, %178, %cst_122 {dimension_numbers = #tpu.dot_dimension_numbers<[1], [0], [0], [1], [0, 0, 1, 1], [], []>} : vector<8x8xbf16>, vector<8x64xbf16>, vector<8x64xf32> -> vector<8x64xf32>
    %180 = arith.addf %137, %179 : vector<8x64xf32>
    %c4 = arith.constant 4 : index
    %c0_123 = arith.constant 0 : index
    %c0_124 = arith.constant 0 : index
    %181 = vector.load %arg4[%c4, %c0_123, %c0_124] : memref<8x64x8xbf16, #tpu.memory_space<vmem>>, vector<1x64x8xbf16>
    %182 = vector.shape_cast %181 : vector<1x64x8xbf16> to vector<64x8xbf16>
    %cst_125 = arith.constant dense<0.000000e+00> : vector<8x8xf32>
    %183 = tpu.matmul %4, %182, %cst_125 {dimension_numbers = #tpu.dot_dimension_numbers<[1], [0], [0], [1], [0, 0, 1, 1], [], []>} : vector<8x64xbf16>, vector<64x8xbf16>, vector<8x8xf32> -> vector<8x8xf32>
    %c4_126 = arith.constant 4 : index
    %c0_127 = arith.constant 0 : index
    %c0_128 = arith.constant 0 : index
    %184 = vector.load %arg5[%c4_126, %c0_127, %c0_128] : memref<8x1x8xf32, #tpu.memory_space<vmem>>, vector<1x1x8xf32>
    %185 = vector.shape_cast %184 : vector<1x1x8xf32> to vector<1x8xf32>
    %186 = vector.broadcast %185 : vector<1x8xf32> to vector<8x8xf32>
    %187 = arith.addf %183, %186 : vector<8x8xf32>
    %c4_129 = arith.constant 4 : index
    %c0_130 = arith.constant 0 : index
    %c0_131 = arith.constant 0 : index
    %188 = vector.load %arg6[%c4_129, %c0_130, %c0_131] : memref<8x64x8xbf16, #tpu.memory_space<vmem>>, vector<1x64x8xbf16>
    %189 = vector.shape_cast %188 : vector<1x64x8xbf16> to vector<64x8xbf16>
    %cst_132 = arith.constant dense<0.000000e+00> : vector<8x8xf32>
    %190 = tpu.matmul %5, %189, %cst_132 {dimension_numbers = #tpu.dot_dimension_numbers<[1], [0], [0], [1], [0, 0, 1, 1], [], []>} : vector<8x64xbf16>, vector<64x8xbf16>, vector<8x8xf32> -> vector<8x8xf32>
    %c4_133 = arith.constant 4 : index
    %c0_134 = arith.constant 0 : index
    %c0_135 = arith.constant 0 : index
    %191 = vector.load %arg7[%c4_133, %c0_134, %c0_135] : memref<8x1x8xf32, #tpu.memory_space<vmem>>, vector<1x1x8xf32>
    %192 = vector.shape_cast %191 : vector<1x1x8xf32> to vector<1x8xf32>
    %193 = vector.broadcast %192 : vector<1x8xf32> to vector<8x8xf32>
    %194 = arith.addf %190, %193 : vector<8x8xf32>
    %c4_136 = arith.constant 4 : index
    %c0_137 = arith.constant 0 : index
    %c0_138 = arith.constant 0 : index
    %195 = vector.load %arg8[%c4_136, %c0_137, %c0_138] : memref<8x64x8xbf16, #tpu.memory_space<vmem>>, vector<1x64x8xbf16>
    %196 = vector.shape_cast %195 : vector<1x64x8xbf16> to vector<64x8xbf16>
    %cst_139 = arith.constant dense<0.000000e+00> : vector<8x8xf32>
    %197 = tpu.matmul %5, %196, %cst_139 {dimension_numbers = #tpu.dot_dimension_numbers<[1], [0], [0], [1], [0, 0, 1, 1], [], []>} : vector<8x64xbf16>, vector<64x8xbf16>, vector<8x8xf32> -> vector<8x8xf32>
    %c4_140 = arith.constant 4 : index
    %c0_141 = arith.constant 0 : index
    %c0_142 = arith.constant 0 : index
    %198 = vector.load %arg9[%c4_140, %c0_141, %c0_142] : memref<8x1x8xf32, #tpu.memory_space<vmem>>, vector<1x1x8xf32>
    %199 = vector.shape_cast %198 : vector<1x1x8xf32> to vector<1x8xf32>
    %200 = vector.broadcast %199 : vector<1x8xf32> to vector<8x8xf32>
    %201 = arith.addf %197, %200 : vector<8x8xf32>
    %202 = arith.truncf %187 : vector<8x8xf32> to vector<8x8xbf16>
    %203 = arith.truncf %194 : vector<8x8xf32> to vector<8x8xbf16>
    %cst_143 = arith.constant dense<0.000000e+00> : vector<8x8xf32>
    %204 = tpu.matmul %202, %203, %cst_143 {dimension_numbers = #tpu.dot_dimension_numbers<[1], [1], [0], [0], [0, 0, 1, 0], [], []>} : vector<8x8xbf16>, vector<8x8xbf16>, vector<8x8xf32> -> vector<8x8xf32>
    %cst_144 = arith.constant 0.353553385 : f32
    %205 = vector.broadcast %cst_144 : f32 to vector<8x8xf32>
    %206 = arith.mulf %204, %205 : vector<8x8xf32>
    %cst_145 = arith.constant dense<0xFF800000> : vector<8xf32>
    %207 = vector.multi_reduction <maximumf>, %206, %cst_145 [1] : vector<8x8xf32> to vector<8xf32>
    %208 = vector.shape_cast %207 : vector<8xf32> to vector<8x1xf32>
    %209 = vector.broadcast %208 : vector<8x1xf32> to vector<8x8xf32>
    %210 = arith.subf %206, %209 : vector<8x8xf32>
    %211 = math.exp %210 : vector<8x8xf32>
    %cst_146 = arith.constant dense<0.000000e+00> : vector<8xf32>
    %212 = vector.multi_reduction <add>, %211, %cst_146 [1] : vector<8x8xf32> to vector<8xf32>
    %213 = vector.shape_cast %212 : vector<8xf32> to vector<8x1xf32>
    %214 = vector.broadcast %213 : vector<8x1xf32> to vector<8x8xf32>
    %215 = arith.divf %211, %214 : vector<8x8xf32>
    %216 = arith.truncf %215 : vector<8x8xf32> to vector<8x8xbf16>
    %217 = arith.truncf %201 : vector<8x8xf32> to vector<8x8xbf16>
    %cst_147 = arith.constant dense<0.000000e+00> : vector<8x8xf32>
    %218 = tpu.matmul %216, %217, %cst_147 {dimension_numbers = #tpu.dot_dimension_numbers<[1], [0], [0], [1], [0, 0, 1, 1], [], []>} : vector<8x8xbf16>, vector<8x8xbf16>, vector<8x8xf32> -> vector<8x8xf32>
    %219 = arith.truncf %218 : vector<8x8xf32> to vector<8x8xbf16>
    %c4_148 = arith.constant 4 : index
    %c0_149 = arith.constant 0 : index
    %c0_150 = arith.constant 0 : index
    %220 = vector.load %arg10[%c4_148, %c0_149, %c0_150] : memref<8x8x64xbf16, #tpu.memory_space<vmem>>, vector<1x8x64xbf16>
    %221 = vector.shape_cast %220 : vector<1x8x64xbf16> to vector<8x64xbf16>
    %cst_151 = arith.constant dense<0.000000e+00> : vector<8x64xf32>
    %222 = tpu.matmul %219, %221, %cst_151 {dimension_numbers = #tpu.dot_dimension_numbers<[1], [0], [0], [1], [0, 0, 1, 1], [], []>} : vector<8x8xbf16>, vector<8x64xbf16>, vector<8x64xf32> -> vector<8x64xf32>
    %223 = arith.addf %180, %222 : vector<8x64xf32>
    %c5 = arith.constant 5 : index
    %c0_152 = arith.constant 0 : index
    %c0_153 = arith.constant 0 : index
    %224 = vector.load %arg4[%c5, %c0_152, %c0_153] : memref<8x64x8xbf16, #tpu.memory_space<vmem>>, vector<1x64x8xbf16>
    %225 = vector.shape_cast %224 : vector<1x64x8xbf16> to vector<64x8xbf16>
    %cst_154 = arith.constant dense<0.000000e+00> : vector<8x8xf32>
    %226 = tpu.matmul %4, %225, %cst_154 {dimension_numbers = #tpu.dot_dimension_numbers<[1], [0], [0], [1], [0, 0, 1, 1], [], []>} : vector<8x64xbf16>, vector<64x8xbf16>, vector<8x8xf32> -> vector<8x8xf32>
    %c5_155 = arith.constant 5 : index
    %c0_156 = arith.constant 0 : index
    %c0_157 = arith.constant 0 : index
    %227 = vector.load %arg5[%c5_155, %c0_156, %c0_157] : memref<8x1x8xf32, #tpu.memory_space<vmem>>, vector<1x1x8xf32>
    %228 = vector.shape_cast %227 : vector<1x1x8xf32> to vector<1x8xf32>
    %229 = vector.broadcast %228 : vector<1x8xf32> to vector<8x8xf32>
    %230 = arith.addf %226, %229 : vector<8x8xf32>
    %c5_158 = arith.constant 5 : index
    %c0_159 = arith.constant 0 : index
    %c0_160 = arith.constant 0 : index
    %231 = vector.load %arg6[%c5_158, %c0_159, %c0_160] : memref<8x64x8xbf16, #tpu.memory_space<vmem>>, vector<1x64x8xbf16>
    %232 = vector.shape_cast %231 : vector<1x64x8xbf16> to vector<64x8xbf16>
    %cst_161 = arith.constant dense<0.000000e+00> : vector<8x8xf32>
    %233 = tpu.matmul %5, %232, %cst_161 {dimension_numbers = #tpu.dot_dimension_numbers<[1], [0], [0], [1], [0, 0, 1, 1], [], []>} : vector<8x64xbf16>, vector<64x8xbf16>, vector<8x8xf32> -> vector<8x8xf32>
    %c5_162 = arith.constant 5 : index
    %c0_163 = arith.constant 0 : index
    %c0_164 = arith.constant 0 : index
    %234 = vector.load %arg7[%c5_162, %c0_163, %c0_164] : memref<8x1x8xf32, #tpu.memory_space<vmem>>, vector<1x1x8xf32>
    %235 = vector.shape_cast %234 : vector<1x1x8xf32> to vector<1x8xf32>
    %236 = vector.broadcast %235 : vector<1x8xf32> to vector<8x8xf32>
    %237 = arith.addf %233, %236 : vector<8x8xf32>
    %c5_165 = arith.constant 5 : index
    %c0_166 = arith.constant 0 : index
    %c0_167 = arith.constant 0 : index
    %238 = vector.load %arg8[%c5_165, %c0_166, %c0_167] : memref<8x64x8xbf16, #tpu.memory_space<vmem>>, vector<1x64x8xbf16>
    %239 = vector.shape_cast %238 : vector<1x64x8xbf16> to vector<64x8xbf16>
    %cst_168 = arith.constant dense<0.000000e+00> : vector<8x8xf32>
    %240 = tpu.matmul %5, %239, %cst_168 {dimension_numbers = #tpu.dot_dimension_numbers<[1], [0], [0], [1], [0, 0, 1, 1], [], []>} : vector<8x64xbf16>, vector<64x8xbf16>, vector<8x8xf32> -> vector<8x8xf32>
    %c5_169 = arith.constant 5 : index
    %c0_170 = arith.constant 0 : index
    %c0_171 = arith.constant 0 : index
    %241 = vector.load %arg9[%c5_169, %c0_170, %c0_171] : memref<8x1x8xf32, #tpu.memory_space<vmem>>, vector<1x1x8xf32>
    %242 = vector.shape_cast %241 : vector<1x1x8xf32> to vector<1x8xf32>
    %243 = vector.broadcast %242 : vector<1x8xf32> to vector<8x8xf32>
    %244 = arith.addf %240, %243 : vector<8x8xf32>
    %245 = arith.truncf %230 : vector<8x8xf32> to vector<8x8xbf16>
    %246 = arith.truncf %237 : vector<8x8xf32> to vector<8x8xbf16>
    %cst_172 = arith.constant dense<0.000000e+00> : vector<8x8xf32>
    %247 = tpu.matmul %245, %246, %cst_172 {dimension_numbers = #tpu.dot_dimension_numbers<[1], [1], [0], [0], [0, 0, 1, 0], [], []>} : vector<8x8xbf16>, vector<8x8xbf16>, vector<8x8xf32> -> vector<8x8xf32>
    %cst_173 = arith.constant 0.353553385 : f32
    %248 = vector.broadcast %cst_173 : f32 to vector<8x8xf32>
    %249 = arith.mulf %247, %248 : vector<8x8xf32>
    %cst_174 = arith.constant dense<0xFF800000> : vector<8xf32>
    %250 = vector.multi_reduction <maximumf>, %249, %cst_174 [1] : vector<8x8xf32> to vector<8xf32>
    %251 = vector.shape_cast %250 : vector<8xf32> to vector<8x1xf32>
    %252 = vector.broadcast %251 : vector<8x1xf32> to vector<8x8xf32>
    %253 = arith.subf %249, %252 : vector<8x8xf32>
    %254 = math.exp %253 : vector<8x8xf32>
    %cst_175 = arith.constant dense<0.000000e+00> : vector<8xf32>
    %255 = vector.multi_reduction <add>, %254, %cst_175 [1] : vector<8x8xf32> to vector<8xf32>
    %256 = vector.shape_cast %255 : vector<8xf32> to vector<8x1xf32>
    %257 = vector.broadcast %256 : vector<8x1xf32> to vector<8x8xf32>
    %258 = arith.divf %254, %257 : vector<8x8xf32>
    %259 = arith.truncf %258 : vector<8x8xf32> to vector<8x8xbf16>
    %260 = arith.truncf %244 : vector<8x8xf32> to vector<8x8xbf16>
    %cst_176 = arith.constant dense<0.000000e+00> : vector<8x8xf32>
    %261 = tpu.matmul %259, %260, %cst_176 {dimension_numbers = #tpu.dot_dimension_numbers<[1], [0], [0], [1], [0, 0, 1, 1], [], []>} : vector<8x8xbf16>, vector<8x8xbf16>, vector<8x8xf32> -> vector<8x8xf32>
    %262 = arith.truncf %261 : vector<8x8xf32> to vector<8x8xbf16>
    %c5_177 = arith.constant 5 : index
    %c0_178 = arith.constant 0 : index
    %c0_179 = arith.constant 0 : index
    %263 = vector.load %arg10[%c5_177, %c0_178, %c0_179] : memref<8x8x64xbf16, #tpu.memory_space<vmem>>, vector<1x8x64xbf16>
    %264 = vector.shape_cast %263 : vector<1x8x64xbf16> to vector<8x64xbf16>
    %cst_180 = arith.constant dense<0.000000e+00> : vector<8x64xf32>
    %265 = tpu.matmul %262, %264, %cst_180 {dimension_numbers = #tpu.dot_dimension_numbers<[1], [0], [0], [1], [0, 0, 1, 1], [], []>} : vector<8x8xbf16>, vector<8x64xbf16>, vector<8x64xf32> -> vector<8x64xf32>
    %266 = arith.addf %223, %265 : vector<8x64xf32>
    %c6 = arith.constant 6 : index
    %c0_181 = arith.constant 0 : index
    %c0_182 = arith.constant 0 : index
    %267 = vector.load %arg4[%c6, %c0_181, %c0_182] : memref<8x64x8xbf16, #tpu.memory_space<vmem>>, vector<1x64x8xbf16>
    %268 = vector.shape_cast %267 : vector<1x64x8xbf16> to vector<64x8xbf16>
    %cst_183 = arith.constant dense<0.000000e+00> : vector<8x8xf32>
    %269 = tpu.matmul %4, %268, %cst_183 {dimension_numbers = #tpu.dot_dimension_numbers<[1], [0], [0], [1], [0, 0, 1, 1], [], []>} : vector<8x64xbf16>, vector<64x8xbf16>, vector<8x8xf32> -> vector<8x8xf32>
    %c6_184 = arith.constant 6 : index
    %c0_185 = arith.constant 0 : index
    %c0_186 = arith.constant 0 : index
    %270 = vector.load %arg5[%c6_184, %c0_185, %c0_186] : memref<8x1x8xf32, #tpu.memory_space<vmem>>, vector<1x1x8xf32>
    %271 = vector.shape_cast %270 : vector<1x1x8xf32> to vector<1x8xf32>
    %272 = vector.broadcast %271 : vector<1x8xf32> to vector<8x8xf32>
    %273 = arith.addf %269, %272 : vector<8x8xf32>
    %c6_187 = arith.constant 6 : index
    %c0_188 = arith.constant 0 : index
    %c0_189 = arith.constant 0 : index
    %274 = vector.load %arg6[%c6_187, %c0_188, %c0_189] : memref<8x64x8xbf16, #tpu.memory_space<vmem>>, vector<1x64x8xbf16>
    %275 = vector.shape_cast %274 : vector<1x64x8xbf16> to vector<64x8xbf16>
    %cst_190 = arith.constant dense<0.000000e+00> : vector<8x8xf32>
    %276 = tpu.matmul %5, %275, %cst_190 {dimension_numbers = #tpu.dot_dimension_numbers<[1], [0], [0], [1], [0, 0, 1, 1], [], []>} : vector<8x64xbf16>, vector<64x8xbf16>, vector<8x8xf32> -> vector<8x8xf32>
    %c6_191 = arith.constant 6 : index
    %c0_192 = arith.constant 0 : index
    %c0_193 = arith.constant 0 : index
    %277 = vector.load %arg7[%c6_191, %c0_192, %c0_193] : memref<8x1x8xf32, #tpu.memory_space<vmem>>, vector<1x1x8xf32>
    %278 = vector.shape_cast %277 : vector<1x1x8xf32> to vector<1x8xf32>
    %279 = vector.broadcast %278 : vector<1x8xf32> to vector<8x8xf32>
    %280 = arith.addf %276, %279 : vector<8x8xf32>
    %c6_194 = arith.constant 6 : index
    %c0_195 = arith.constant 0 : index
    %c0_196 = arith.constant 0 : index
    %281 = vector.load %arg8[%c6_194, %c0_195, %c0_196] : memref<8x64x8xbf16, #tpu.memory_space<vmem>>, vector<1x64x8xbf16>
    %282 = vector.shape_cast %281 : vector<1x64x8xbf16> to vector<64x8xbf16>
    %cst_197 = arith.constant dense<0.000000e+00> : vector<8x8xf32>
    %283 = tpu.matmul %5, %282, %cst_197 {dimension_numbers = #tpu.dot_dimension_numbers<[1], [0], [0], [1], [0, 0, 1, 1], [], []>} : vector<8x64xbf16>, vector<64x8xbf16>, vector<8x8xf32> -> vector<8x8xf32>
    %c6_198 = arith.constant 6 : index
    %c0_199 = arith.constant 0 : index
    %c0_200 = arith.constant 0 : index
    %284 = vector.load %arg9[%c6_198, %c0_199, %c0_200] : memref<8x1x8xf32, #tpu.memory_space<vmem>>, vector<1x1x8xf32>
    %285 = vector.shape_cast %284 : vector<1x1x8xf32> to vector<1x8xf32>
    %286 = vector.broadcast %285 : vector<1x8xf32> to vector<8x8xf32>
    %287 = arith.addf %283, %286 : vector<8x8xf32>
    %288 = arith.truncf %273 : vector<8x8xf32> to vector<8x8xbf16>
    %289 = arith.truncf %280 : vector<8x8xf32> to vector<8x8xbf16>
    %cst_201 = arith.constant dense<0.000000e+00> : vector<8x8xf32>
    %290 = tpu.matmul %288, %289, %cst_201 {dimension_numbers = #tpu.dot_dimension_numbers<[1], [1], [0], [0], [0, 0, 1, 0], [], []>} : vector<8x8xbf16>, vector<8x8xbf16>, vector<8x8xf32> -> vector<8x8xf32>
    %cst_202 = arith.constant 0.353553385 : f32
    %291 = vector.broadcast %cst_202 : f32 to vector<8x8xf32>
    %292 = arith.mulf %290, %291 : vector<8x8xf32>
    %cst_203 = arith.constant dense<0xFF800000> : vector<8xf32>
    %293 = vector.multi_reduction <maximumf>, %292, %cst_203 [1] : vector<8x8xf32> to vector<8xf32>
    %294 = vector.shape_cast %293 : vector<8xf32> to vector<8x1xf32>
    %295 = vector.broadcast %294 : vector<8x1xf32> to vector<8x8xf32>
    %296 = arith.subf %292, %295 : vector<8x8xf32>
    %297 = math.exp %296 : vector<8x8xf32>
    %cst_204 = arith.constant dense<0.000000e+00> : vector<8xf32>
    %298 = vector.multi_reduction <add>, %297, %cst_204 [1] : vector<8x8xf32> to vector<8xf32>
    %299 = vector.shape_cast %298 : vector<8xf32> to vector<8x1xf32>
    %300 = vector.broadcast %299 : vector<8x1xf32> to vector<8x8xf32>
    %301 = arith.divf %297, %300 : vector<8x8xf32>
    %302 = arith.truncf %301 : vector<8x8xf32> to vector<8x8xbf16>
    %303 = arith.truncf %287 : vector<8x8xf32> to vector<8x8xbf16>
    %cst_205 = arith.constant dense<0.000000e+00> : vector<8x8xf32>
    %304 = tpu.matmul %302, %303, %cst_205 {dimension_numbers = #tpu.dot_dimension_numbers<[1], [0], [0], [1], [0, 0, 1, 1], [], []>} : vector<8x8xbf16>, vector<8x8xbf16>, vector<8x8xf32> -> vector<8x8xf32>
    %305 = arith.truncf %304 : vector<8x8xf32> to vector<8x8xbf16>
    %c6_206 = arith.constant 6 : index
    %c0_207 = arith.constant 0 : index
    %c0_208 = arith.constant 0 : index
    %306 = vector.load %arg10[%c6_206, %c0_207, %c0_208] : memref<8x8x64xbf16, #tpu.memory_space<vmem>>, vector<1x8x64xbf16>
    %307 = vector.shape_cast %306 : vector<1x8x64xbf16> to vector<8x64xbf16>
    %cst_209 = arith.constant dense<0.000000e+00> : vector<8x64xf32>
    %308 = tpu.matmul %305, %307, %cst_209 {dimension_numbers = #tpu.dot_dimension_numbers<[1], [0], [0], [1], [0, 0, 1, 1], [], []>} : vector<8x8xbf16>, vector<8x64xbf16>, vector<8x64xf32> -> vector<8x64xf32>
    %309 = arith.addf %266, %308 : vector<8x64xf32>
    %c7 = arith.constant 7 : index
    %c0_210 = arith.constant 0 : index
    %c0_211 = arith.constant 0 : index
    %310 = vector.load %arg4[%c7, %c0_210, %c0_211] : memref<8x64x8xbf16, #tpu.memory_space<vmem>>, vector<1x64x8xbf16>
    %311 = vector.shape_cast %310 : vector<1x64x8xbf16> to vector<64x8xbf16>
    %cst_212 = arith.constant dense<0.000000e+00> : vector<8x8xf32>
    %312 = tpu.matmul %4, %311, %cst_212 {dimension_numbers = #tpu.dot_dimension_numbers<[1], [0], [0], [1], [0, 0, 1, 1], [], []>} : vector<8x64xbf16>, vector<64x8xbf16>, vector<8x8xf32> -> vector<8x8xf32>
    %c7_213 = arith.constant 7 : index
    %c0_214 = arith.constant 0 : index
    %c0_215 = arith.constant 0 : index
    %313 = vector.load %arg5[%c7_213, %c0_214, %c0_215] : memref<8x1x8xf32, #tpu.memory_space<vmem>>, vector<1x1x8xf32>
    %314 = vector.shape_cast %313 : vector<1x1x8xf32> to vector<1x8xf32>
    %315 = vector.broadcast %314 : vector<1x8xf32> to vector<8x8xf32>
    %316 = arith.addf %312, %315 : vector<8x8xf32>
    %c7_216 = arith.constant 7 : index
    %c0_217 = arith.constant 0 : index
    %c0_218 = arith.constant 0 : index
    %317 = vector.load %arg6[%c7_216, %c0_217, %c0_218] : memref<8x64x8xbf16, #tpu.memory_space<vmem>>, vector<1x64x8xbf16>
    %318 = vector.shape_cast %317 : vector<1x64x8xbf16> to vector<64x8xbf16>
    %cst_219 = arith.constant dense<0.000000e+00> : vector<8x8xf32>
    %319 = tpu.matmul %5, %318, %cst_219 {dimension_numbers = #tpu.dot_dimension_numbers<[1], [0], [0], [1], [0, 0, 1, 1], [], []>} : vector<8x64xbf16>, vector<64x8xbf16>, vector<8x8xf32> -> vector<8x8xf32>
    %c7_220 = arith.constant 7 : index
    %c0_221 = arith.constant 0 : index
    %c0_222 = arith.constant 0 : index
    %320 = vector.load %arg7[%c7_220, %c0_221, %c0_222] : memref<8x1x8xf32, #tpu.memory_space<vmem>>, vector<1x1x8xf32>
    %321 = vector.shape_cast %320 : vector<1x1x8xf32> to vector<1x8xf32>
    %322 = vector.broadcast %321 : vector<1x8xf32> to vector<8x8xf32>
    %323 = arith.addf %319, %322 : vector<8x8xf32>
    %c7_223 = arith.constant 7 : index
    %c0_224 = arith.constant 0 : index
    %c0_225 = arith.constant 0 : index
    %324 = vector.load %arg8[%c7_223, %c0_224, %c0_225] : memref<8x64x8xbf16, #tpu.memory_space<vmem>>, vector<1x64x8xbf16>
    %325 = vector.shape_cast %324 : vector<1x64x8xbf16> to vector<64x8xbf16>
    %cst_226 = arith.constant dense<0.000000e+00> : vector<8x8xf32>
    %326 = tpu.matmul %5, %325, %cst_226 {dimension_numbers = #tpu.dot_dimension_numbers<[1], [0], [0], [1], [0, 0, 1, 1], [], []>} : vector<8x64xbf16>, vector<64x8xbf16>, vector<8x8xf32> -> vector<8x8xf32>
    %c7_227 = arith.constant 7 : index
    %c0_228 = arith.constant 0 : index
    %c0_229 = arith.constant 0 : index
    %327 = vector.load %arg9[%c7_227, %c0_228, %c0_229] : memref<8x1x8xf32, #tpu.memory_space<vmem>>, vector<1x1x8xf32>
    %328 = vector.shape_cast %327 : vector<1x1x8xf32> to vector<1x8xf32>
    %329 = vector.broadcast %328 : vector<1x8xf32> to vector<8x8xf32>
    %330 = arith.addf %326, %329 : vector<8x8xf32>
    %331 = arith.truncf %316 : vector<8x8xf32> to vector<8x8xbf16>
    %332 = arith.truncf %323 : vector<8x8xf32> to vector<8x8xbf16>
    %cst_230 = arith.constant dense<0.000000e+00> : vector<8x8xf32>
    %333 = tpu.matmul %331, %332, %cst_230 {dimension_numbers = #tpu.dot_dimension_numbers<[1], [1], [0], [0], [0, 0, 1, 0], [], []>} : vector<8x8xbf16>, vector<8x8xbf16>, vector<8x8xf32> -> vector<8x8xf32>
    %cst_231 = arith.constant 0.353553385 : f32
    %334 = vector.broadcast %cst_231 : f32 to vector<8x8xf32>
    %335 = arith.mulf %333, %334 : vector<8x8xf32>
    %cst_232 = arith.constant dense<0xFF800000> : vector<8xf32>
    %336 = vector.multi_reduction <maximumf>, %335, %cst_232 [1] : vector<8x8xf32> to vector<8xf32>
    %337 = vector.shape_cast %336 : vector<8xf32> to vector<8x1xf32>
    %338 = vector.broadcast %337 : vector<8x1xf32> to vector<8x8xf32>
    %339 = arith.subf %335, %338 : vector<8x8xf32>
    %340 = math.exp %339 : vector<8x8xf32>
    %cst_233 = arith.constant dense<0.000000e+00> : vector<8xf32>
    %341 = vector.multi_reduction <add>, %340, %cst_233 [1] : vector<8x8xf32> to vector<8xf32>
    %342 = vector.shape_cast %341 : vector<8xf32> to vector<8x1xf32>
    %343 = vector.broadcast %342 : vector<8x1xf32> to vector<8x8xf32>
    %344 = arith.divf %340, %343 : vector<8x8xf32>
    %345 = arith.truncf %344 : vector<8x8xf32> to vector<8x8xbf16>
    %346 = arith.truncf %330 : vector<8x8xf32> to vector<8x8xbf16>
    %cst_234 = arith.constant dense<0.000000e+00> : vector<8x8xf32>
    %347 = tpu.matmul %345, %346, %cst_234 {dimension_numbers = #tpu.dot_dimension_numbers<[1], [0], [0], [1], [0, 0, 1, 1], [], []>} : vector<8x8xbf16>, vector<8x8xbf16>, vector<8x8xf32> -> vector<8x8xf32>
    %348 = arith.truncf %347 : vector<8x8xf32> to vector<8x8xbf16>
    %c7_235 = arith.constant 7 : index
    %c0_236 = arith.constant 0 : index
    %c0_237 = arith.constant 0 : index
    %349 = vector.load %arg10[%c7_235, %c0_236, %c0_237] : memref<8x8x64xbf16, #tpu.memory_space<vmem>>, vector<1x8x64xbf16>
    %350 = vector.shape_cast %349 : vector<1x8x64xbf16> to vector<8x64xbf16>
    %cst_238 = arith.constant dense<0.000000e+00> : vector<8x64xf32>
    %351 = tpu.matmul %348, %350, %cst_238 {dimension_numbers = #tpu.dot_dimension_numbers<[1], [0], [0], [1], [0, 0, 1, 1], [], []>} : vector<8x8xbf16>, vector<8x64xbf16>, vector<8x64xf32> -> vector<8x64xf32>
    %352 = arith.addf %309, %351 : vector<8x64xf32>
    %cst_239 = arith.constant dense<0.000000e+00> : vector<8xf32>
    %353 = vector.multi_reduction <add>, %352, %cst_239 [1] : vector<8x64xf32> to vector<8xf32>
    %354 = vector.shape_cast %353 : vector<8xf32> to vector<8x1xf32>
    %cst_240 = arith.constant 6.400000e+01 : f32
    %355 = vector.broadcast %cst_240 : f32 to vector<8x1xf32>
    %356 = arith.divf %354, %355 : vector<8x1xf32>
    %357 = vector.broadcast %356 : vector<8x1xf32> to vector<8x64xf32>
    %358 = arith.subf %352, %357 : vector<8x64xf32>
    %359 = arith.mulf %358, %358 : vector<8x64xf32>
    %cst_241 = arith.constant dense<0.000000e+00> : vector<8xf32>
    %360 = vector.multi_reduction <add>, %359, %cst_241 [1] : vector<8x64xf32> to vector<8xf32>
    %361 = vector.shape_cast %360 : vector<8xf32> to vector<8x1xf32>
    %cst_242 = arith.constant 6.400000e+01 : f32
    %362 = vector.broadcast %cst_242 : f32 to vector<8x1xf32>
    %363 = arith.divf %361, %362 : vector<8x1xf32>
    %364 = vector.broadcast %356 : vector<8x1xf32> to vector<8x64xf32>
    %365 = arith.subf %352, %364 : vector<8x64xf32>
    %cst_243 = arith.constant 9.99999974E-6 : f32
    %366 = vector.broadcast %cst_243 : f32 to vector<8x1xf32>
    %367 = arith.addf %363, %366 : vector<8x1xf32>
    %368 = math.rsqrt %367 : vector<8x1xf32>
    %369 = vector.broadcast %368 : vector<8x1xf32> to vector<8x64xf32>
    %370 = arith.mulf %365, %369 : vector<8x64xf32>
    %c0_244 = arith.constant 0 : index
    %c0_245 = arith.constant 0 : index
    %371 = vector.load %arg12[%c0_244, %c0_245] : memref<1x64xf32, #tpu.memory_space<vmem>>, vector<1x64xf32>
    %372 = vector.broadcast %371 : vector<1x64xf32> to vector<8x64xf32>
    %373 = arith.mulf %370, %372 : vector<8x64xf32>
    %c0_246 = arith.constant 0 : index
    %c0_247 = arith.constant 0 : index
    %374 = vector.load %arg13[%c0_246, %c0_247] : memref<1x64xf32, #tpu.memory_space<vmem>>, vector<1x64xf32>
    %375 = vector.broadcast %374 : vector<1x64xf32> to vector<8x64xf32>
    %376 = arith.addf %373, %375 : vector<8x64xf32>
    %c0_248 = arith.constant 0 : index
    %c0_249 = arith.constant 0 : index
    %c0_250 = arith.constant 0 : index
    %377 = vector.load %arg14[%c0_248, %c0_249, %c0_250] : memref<1x8x64xf32, #tpu.memory_space<vmem>>, vector<1x8x64xf32>
    %378 = vector.shape_cast %377 : vector<1x8x64xf32> to vector<8x64xf32>
    %379 = vector.shape_cast %376 : vector<8x64xf32> to vector<1x8x64xf32>
    tpu.vector_store %arg14[%c0_248, %c0_249, %c0_250], %379 {strides = array<i32>} : memref<1x8x64xf32, #tpu.memory_space<vmem>>, vector<1x8x64xf32>,
    return
  }
  func.func @transform_0(%arg0: i32, %arg1: i32) -> (i32, i32, i32) {
    %c0_i32 = arith.constant 0 : i32
    %c0_i32_0 = arith.constant 0 : i32
    return %arg0, %arg1, %c0_i32 : i32, i32, i32
  }
  func.func @transform_1(%arg0: i32, %arg1: i32) -> (i32, i32, i32) {
    %c0_i32 = arith.constant 0 : i32
    %c0_i32_0 = arith.constant 0 : i32
    %c0_i32_1 = arith.constant 0 : i32
    return %arg0, %c0_i32, %c0_i32_0 : i32, i32, i32
  }
  func.func @transform_2(%arg0: i32, %arg1: i32) -> (i32, i32, i32) {
    %c0_i32 = arith.constant 0 : i32
    %c0_i32_0 = arith.constant 0 : i32
    %c0_i32_1 = arith.constant 0 : i32
    %c0_i32_2 = arith.constant 0 : i32
    return %c0_i32, %c0_i32_0, %c0_i32_1 : i32, i32, i32
  }
  func.func @transform_3(%arg0: i32, %arg1: i32) -> (i32, i32, i32) {
    %c0_i32 = arith.constant 0 : i32
    %c0_i32_0 = arith.constant 0 : i32
    %c0_i32_1 = arith.constant 0 : i32
    %c0_i32_2 = arith.constant 0 : i32
    return %c0_i32, %c0_i32_0, %c0_i32_1 : i32, i32, i32
  }
  func.func @transform_4(%arg0: i32, %arg1: i32) -> (i32, i32, i32) {
    %c0_i32 = arith.constant 0 : i32
    %c0_i32_0 = arith.constant 0 : i32
    %c0_i32_1 = arith.constant 0 : i32
    %c0_i32_2 = arith.constant 0 : i32
    return %c0_i32, %c0_i32_0, %c0_i32_1 : i32, i32, i32
  }
  func.func @transform_5(%arg0: i32, %arg1: i32) -> (i32, i32, i32) {
    %c0_i32 = arith.constant 0 : i32
    %c0_i32_0 = arith.constant 0 : i32
    %c0_i32_1 = arith.constant 0 : i32
    %c0_i32_2 = arith.constant 0 : i32
    return %c0_i32, %c0_i32_0, %c0_i32_1 : i32, i32, i32
  }
  func.func @transform_6(%arg0: i32, %arg1: i32) -> (i32, i32, i32) {
    %c0_i32 = arith.constant 0 : i32
    %c0_i32_0 = arith.constant 0 : i32
    %c0_i32_1 = arith.constant 0 : i32
    %c0_i32_2 = arith.constant 0 : i32
    return %c0_i32, %c0_i32_0, %c0_i32_1 : i32, i32, i32
  }
  func.func @transform_7(%arg0: i32, %arg1: i32) -> (i32, i32, i32) {
    %c0_i32 = arith.constant 0 : i32
    %c0_i32_0 = arith.constant 0 : i32
    %c0_i32_1 = arith.constant 0 : i32
    %c0_i32_2 = arith.constant 0 : i32
    return %c0_i32, %c0_i32_0, %c0_i32_1 : i32, i32, i32
  }
  func.func @transform_8(%arg0: i32, %arg1: i32) -> (i32, i32, i32) {
    %c0_i32 = arith.constant 0 : i32
    %c0_i32_0 = arith.constant 0 : i32
    %c0_i32_1 = arith.constant 0 : i32
    %c0_i32_2 = arith.constant 0 : i32
    return %c0_i32, %c0_i32_0, %c0_i32_1 : i32, i32, i32
  }
  func.func @transform_9(%arg0: i32, %arg1: i32) -> (i32, i32) {
    %c0_i32 = arith.constant 0 : i32
    %c0_i32_0 = arith.constant 0 : i32
    %c0_i32_1 = arith.constant 0 : i32
    return %c0_i32, %c0_i32_0 : i32, i32
  }
  func.func @transform_10(%arg0: i32, %arg1: i32) -> (i32, i32) {
    %c0_i32 = arith.constant 0 : i32
    %c0_i32_0 = arith.constant 0 : i32
    %c0_i32_1 = arith.constant 0 : i32
    return %c0_i32, %c0_i32_0 : i32, i32
  }
  func.func @transform_11(%arg0: i32, %arg1: i32) -> (i32, i32) {
    %c0_i32 = arith.constant 0 : i32
    %c0_i32_0 = arith.constant 0 : i32
    %c0_i32_1 = arith.constant 0 : i32
    return %c0_i32, %c0_i32_0 : i32, i32
  }
  func.func @transform_12(%arg0: i32, %arg1: i32) -> (i32, i32, i32) {
    %c0_i32 = arith.constant 0 : i32
    %c0_i32_0 = arith.constant 0 : i32
    return %arg0, %arg1, %c0_i32 : i32, i32, i32
  }
}

module attributes {stable_mosaic.version = 11 : i64} {
  func.func @_linear_kernel(%arg0: i32, %arg1: i32, %arg2: i32, %arg3: memref<16x64xf32, #tpu.memory_space<vmem>>, %arg4: memref<64x128xbf16, #tpu.memory_space<vmem>>, %arg5: memref<1x128xf32, #tpu.memory_space<vmem>>, %arg6: memref<16x128xf32, #tpu.memory_space<vmem>>, %arg7: memref<16x128xf32, #tpu.memory_space<vmem>>) attributes {dimension_semantics = [#tpu.dimension_semantics<parallel>, #tpu.dimension_semantics<parallel>, #tpu.dimension_semantics<arbitrary>], iteration_bounds = array<i64: 1, 1, 1>, scalar_prefetch = 0 : i64, scratch_operands = 1 : i64, tpu.core_type = #tpu.core_type<tc>, window_params = [{transform_indices = @transform_0, window_bounds = array<i64: 16, 64>}, {transform_indices = @transform_1, window_bounds = array<i64: 64, 128>}, {transform_indices = @transform_2, window_bounds = array<i64: 1, 128>}, {transform_indices = @transform_3, window_bounds = array<i64: 16, 128>}]} {
    %c0_i32 = arith.constant 0 : i32
    %0 = arith.cmpi eq, %arg2, %c0_i32 : i32
    %1 = arith.extui %0 : i1 to i32
    %c0_i32_0 = arith.constant 0 : i32
    %2 = arith.cmpi ne, %1, %c0_i32_0 : i32
    scf.if %2 {
      %cst_10 = arith.constant 0.000000e+00 : f32
      %13 = vector.broadcast %cst_10 : f32 to vector<16x128xf32>
      %c0_11 = arith.constant 0 : index
      %c0_12 = arith.constant 0 : index
      %14 = vector.load %arg7[%c0_11, %c0_12] : memref<16x128xf32, #tpu.memory_space<vmem>>, vector<16x128xf32>
      tpu.vector_store %arg7[%c0_11, %c0_12], %13 {strides = array<i32>} : memref<16x128xf32, #tpu.memory_space<vmem>>, vector<16x128xf32>,
    } else {
    }
    %c0 = arith.constant 0 : index
    %c0_1 = arith.constant 0 : index
    %3 = vector.load %arg7[%c0, %c0_1] : memref<16x128xf32, #tpu.memory_space<vmem>>, vector<16x128xf32>
    %c0_2 = arith.constant 0 : index
    %c0_3 = arith.constant 0 : index
    %4 = vector.load %arg3[%c0_2, %c0_3] : memref<16x64xf32, #tpu.memory_space<vmem>>, vector<16x64xf32>
    %5 = arith.truncf %4 : vector<16x64xf32> to vector<16x64xbf16>
    %c0_4 = arith.constant 0 : index
    %c0_5 = arith.constant 0 : index
    %6 = vector.load %arg4[%c0_4, %c0_5] : memref<64x128xbf16, #tpu.memory_space<vmem>>, vector<64x128xbf16>
    %cst = arith.constant dense<0.000000e+00> : vector<16x128xf32>
    %7 = tpu.matmul %5, %6, %cst {dimension_numbers = #tpu.dot_dimension_numbers<[1], [0], [0], [1], [0, 0, 1, 1], [], []>} : vector<16x64xbf16>, vector<64x128xbf16>, vector<16x128xf32> -> vector<16x128xf32>
    %8 = arith.addf %3, %7 : vector<16x128xf32>
    %c0_6 = arith.constant 0 : index
    %c0_7 = arith.constant 0 : index
    %9 = vector.load %arg7[%c0_6, %c0_7] : memref<16x128xf32, #tpu.memory_space<vmem>>, vector<16x128xf32>
    tpu.vector_store %arg7[%c0_6, %c0_7], %8 {strides = array<i32>} : memref<16x128xf32, #tpu.memory_space<vmem>>, vector<16x128xf32>,
    %c0_i32_8 = arith.constant 0 : i32
    %10 = arith.cmpi eq, %arg2, %c0_i32_8 : i32
    %11 = arith.extui %10 : i1 to i32
    %c0_i32_9 = arith.constant 0 : i32
    %12 = arith.cmpi ne, %11, %c0_i32_9 : i32
    scf.if %12 {
      %c0_10 = arith.constant 0 : index
      %c0_11 = arith.constant 0 : index
      %13 = vector.load %arg7[%c0_10, %c0_11] : memref<16x128xf32, #tpu.memory_space<vmem>>, vector<16x128xf32>
      %c0_12 = arith.constant 0 : index
      %c0_13 = arith.constant 0 : index
      %14 = vector.load %arg5[%c0_12, %c0_13] : memref<1x128xf32, #tpu.memory_space<vmem>>, vector<1x128xf32>
      %15 = vector.broadcast %14 : vector<1x128xf32> to vector<16x128xf32>
      %16 = arith.addf %13, %15 : vector<16x128xf32>
      %c0_14 = arith.constant 0 : index
      %c0_15 = arith.constant 0 : index
      %17 = vector.load %arg6[%c0_14, %c0_15] : memref<16x128xf32, #tpu.memory_space<vmem>>, vector<16x128xf32>
      tpu.vector_store %arg6[%c0_14, %c0_15], %16 {strides = array<i32>} : memref<16x128xf32, #tpu.memory_space<vmem>>, vector<16x128xf32>,
    } else {
    }
    return
  }
  func.func @transform_0(%arg0: i32, %arg1: i32, %arg2: i32) -> (i32, i32) {
    %c0_i32 = arith.constant 0 : i32
    return %arg0, %arg2 : i32, i32
  }
  func.func @transform_1(%arg0: i32, %arg1: i32, %arg2: i32) -> (i32, i32) {
    %c0_i32 = arith.constant 0 : i32
    return %arg2, %arg1 : i32, i32
  }
  func.func @transform_2(%arg0: i32, %arg1: i32, %arg2: i32) -> (i32, i32) {
    %c0_i32 = arith.constant 0 : i32
    %c0_i32_0 = arith.constant 0 : i32
    return %c0_i32, %arg1 : i32, i32
  }
  func.func @transform_3(%arg0: i32, %arg1: i32, %arg2: i32) -> (i32, i32) {
    %c0_i32 = arith.constant 0 : i32
    return %arg0, %arg1 : i32, i32
  }
}

</mosaic_0001>

<llo_original>
// kernel: stellar_transformer_forward.8
$region0: #{stellar_transformer_forward.8}
  #allocation0 [shape = 'u32[]', space=smem, size = 0x4, offset = 0x4, fixed_abs, tag = 'smem constant byte address 0x4 - core index']
  #allocation1 [shape = 'u32[144,128]{1,0:T(1,128)}', space=vmem, size = 0x12000, scoped, tag = 'internal scratch']
  %s0 = inlined_call_operand.vmem [shape: f32[2,8,5], index: 0, kind: input, shape index: {}]
  %s1 = inlined_call_operand.vmem [shape: bf16[5,64], index: 1, kind: input, shape index: {}]
  %s2 = inlined_call_operand.vmem [shape: f32[1,64], index: 2, kind: input, shape index: {}]
  %s3 = inlined_call_operand.vmem [shape: f32[8,64], index: 3, kind: input, shape index: {}]
  %s4 = inlined_call_operand.vmem [shape: f32[2,8,64], index: 4, kind: output, shape index: {}]
  %s5 = sld [smem:[#allocation0]]
  $region49: #{stellar_transformer_forward.8} parent=0
    _
  %s7 = ssub.s32 1, %s5
  %s8 = scalar_select 0, %s7, %s5
  loop: start=0, step=1, limit=4
  $region2: #{stellar_transformer_forward.8} parent=0 // loop_pre_header
    _
  $region3: #{stellar_transformer_forward.8} parent=0 // loop_header
    %s10 = sphi 0, %s14
    %p11 = scmp.ge.s32.totalorder %s10, 4
    %s17 = sphi 0, %s29
    %s18 = sphi 0, %s25
    %s19 = sphi 0, %s17
    %s20 = sphi 0, %s18
    %s21 = sphi 0, %s19
    %s22 = sphi 0, %s20
    %s34 = sphi 0, %s36
    %s37 = sphi 0, %s34
    %s38 = sphi 0, %s37
    %s54 = sphi 0, %s38
    %s58 = sphi 0, %s58
    %s60 = sphi 0, %s58
    %s61 = sphi 0, %s60
    %s75 = sphi 0, %s61
    %s79 = sphi 0, %s79
    %s81 = sphi 0, %s79
    %s82 = sphi 0, %s81
    %s96 = sphi 0, %s82
    %s102 = sphi 0, %s104
    %s105 = sphi 0, %s102
    %s106 = sphi 0, %s105
    %s122 = sphi 0, %s106
    %s130 = sphi 0, %s132
    %s133 = sphi 0, %s130
    %s134 = sphi 0, %s133
    %s150 = sphi 0, %s134
  $region4: #{stellar_transformer_forward.8} parent=0 // loop_header_branch
    %13 = sbr.rel (%p11) target = $region8
  $region5: #{stellar_transformer_forward.8} parent=0 // loop_body
    %s15 = ssub.s32 %s10, 1
    %s16 = ssub.s32 %s10, 2
    %s23 = sadd.s32 1, %s18
    %p24 = scmp.ge.s32.totalorder %s23, 1
    %s25 = scalar_select %p24, 0, %s23
    %s26 = sadd.s32 1, %s17
    %s27 = scalar_select %p24, %s26, %s17
    %p28 = scmp.ge.s32.totalorder %s27, 2
    %s29 = scalar_select %p28, 0, %s27
    %s30 = ssub.s32 %s17, %s29
    %s31 = ssub.s32 %s18, %s25
    %s32 = sor.u32 %s30, %s31
    %p33 = scmp.eq.s32.totalorder %s32, 0
    %s35 = sadd.s32 %s34, 1
    %s36 = scalar_select %p33, %s34, %s35
    %p39 = pneg %p33
    %p40 = scmp.eq.s32.totalorder %s10, 1
    %p41 = por %p39, %p40
    %p42 = scmp.ne.s32.totalorder %s34, %s37
    %p43 = scmp.eq.s32.totalorder %s10, 0
    %p44 = por %p42, %p43
    %p45 = scmp.ne.s32.totalorder %s34, %s37
    %p46 = scmp.eq.s32.totalorder %s15, 1
    %p47 = por %p45, %p46
    %p48 = scmp.ne.s32.totalorder %s37, %s38
    %p49 = scmp.eq.s32.totalorder %s15, 0
    %p50 = por %p48, %p49
    %p51 = scmp.ne.s32.totalorder %s37, %s38
    %p52 = scmp.eq.s32.totalorder %s16, 1
    %p53 = por %p51, %p52
    %p55 = scmp.ne.s32.totalorder %s38, %s54
    %p56 = scmp.eq.s32.totalorder %s16, 0
    %p57 = por %p55, %p56
    %s59 = sadd.s32 %s58, 1
    %p62 = scmp.eq.s32.totalorder %s10, 1
    %p63 = scmp.ne.s32.totalorder %s58, %s60
    %p64 = scmp.eq.s32.totalorder %s10, 0
    %p65 = por %p63, %p64
    %p66 = scmp.ne.s32.totalorder %s58, %s60
    %p67 = scmp.eq.s32.totalorder %s15, 1
    %p68 = por %p66, %p67
    %p69 = scmp.ne.s32.totalorder %s60, %s61
    %p70 = scmp.eq.s32.totalorder %s15, 0
    %p71 = por %p69, %p70
    %p72 = scmp.ne.s32.totalorder %s60, %s61
    %p73 = scmp.eq.s32.totalorder %s16, 1
    %p74 = por %p72, %p73
    %p76 = scmp.ne.s32.totalorder %s61, %s75
    %p77 = scmp.eq.s32.totalorder %s16, 0
    %p78 = por %p76, %p77
    %s80 = sadd.s32 %s79, 1
    %p83 = scmp.eq.s32.totalorder %s10, 1
    %p84 = scmp.ne.s32.totalorder %s79, %s81
    %p85 = scmp.eq.s32.totalorder %s10, 0
    %p86 = por %p84, %p85
    %p87 = scmp.ne.s32.totalorder %s79, %s81
    %p88 = scmp.eq.s32.totalorder %s15, 1
    %p89 = por %p87, %p88
    %p90 = scmp.ne.s32.totalorder %s81, %s82
    %p91 = scmp.eq.s32.totalorder %s15, 0
    %p92 = por %p90, %p91
    %p93 = scmp.ne.s32.totalorder %s81, %s82
    %p94 = scmp.eq.s32.totalorder %s16, 1
    %p95 = por %p93, %p94
    %p97 = scmp.ne.s32.totalorder %s82, %s96
    %p98 = scmp.eq.s32.totalorder %s16, 0
    %p99 = por %p97, %p98
    %s100 = ssub.s32 %s18, %s25
    %p101 = scmp.eq.s32.totalorder %s100, 0
    %s103 = sadd.s32 %s102, 1
    %s104 = scalar_select %p101, %s102, %s103
    %p107 = pneg %p101
    %p108 = scmp.eq.s32.totalorder %s10, 1
    %p109 = por %p107, %p108
    %p110 = scmp.ne.s32.totalorder %s102, %s105
    %p111 = scmp.eq.s32.totalorder %s10, 0
    %p112 = por %p110, %p111
    %p113 = scmp.ne.s32.totalorder %s102, %s105
    %p114 = scmp.eq.s32.totalorder %s15, 1
    %p115 = por %p113, %p114
    %p116 = scmp.ne.s32.totalorder %s105, %s106
    %p117 = scmp.eq.s32.totalorder %s15, 0
    %p118 = por %p116, %p117
    %p119 = scmp.ne.s32.totalorder %s105, %s106
    %p120 = scmp.eq.s32.totalorder %s16, 1
    %p121 = por %p119, %p120
    %p123 = scmp.ne.s32.totalorder %s106, %s122
    %p124 = scmp.eq.s32.totalorder %s16, 0
    %p125 = por %p123, %p124
    %s126 = ssub.s32 %s17, %s29
    %s127 = ssub.s32 %s18, %s25
    %s128 = sor.u32 %s126, %s127
    %p129 = scmp.eq.s32.totalorder %s128, 0
    %s131 = sadd.s32 %s130, 1
    %s132 = scalar_select %p129, %s130, %s131
    %p135 = pneg %p129
    %p136 = scmp.eq.s32.totalorder %s10, 1
    %p137 = por %p135, %p136
    %p138 = scmp.ne.s32.totalorder %s130, %s133
    %p139 = scmp.eq.s32.totalorder %s10, 0
    %p140 = por %p138, %p139
    %p141 = scmp.ne.s32.totalorder %s130, %s133
    %p142 = scmp.eq.s32.totalorder %s15, 1
    %p143 = por %p141, %p142
    %p144 = scmp.ne.s32.totalorder %s133, %s134
    %p145 = scmp.eq.s32.totalorder %s15, 0
    %p146 = por %p144, %p145
    %p147 = scmp.ne.s32.totalorder %s133, %s134
    %p148 = scmp.eq.s32.totalorder %s16, 1
    %p149 = por %p147, %p148
    %p151 = scmp.ne.s32.totalorder %s134, %s150
    %p152 = scmp.eq.s32.totalorder %s16, 0
    %p153 = por %p151, %p152
    %p154 = scmp.le.s32.totalorder 1, %s10
    %p155 = scmp.lt.s32.totalorder %s10, 3
    %p156 = pnand %p154, %p155
    %p157 = pneg %p156
    // Predicated region
    $region9: #{stellar_transformer_forward.8} parent=5 // pred_check
      _
    $region10: #{stellar_transformer_forward.8} parent=5 // pred_check_branch
      %159 = sbr.rel (%p156) target = $region12
    $region11: #{stellar_transformer_forward.8} parent=5 // pred_region
      %s160 = ssub.s32 %s10, 1
      // Predicated region
      $region13: #{stellar_transformer_forward.8} parent=11 // pred_check
        %p161 = pneg %p71
      $region14: #{stellar_transformer_forward.8} parent=11 // pred_check_branch
        %163 = sbr.rel (%p161) target = $region16
      $region15: #{stellar_transformer_forward.8} parent=11 // pred_region
        _
      $region16: #{stellar_transformer_forward.8} parent=11 // pred_fallthru
        _
      // Predicated region
      $region17: #{stellar_transformer_forward.8} parent=11 // pred_check
        %p164 = pneg %p92
      $region18: #{stellar_transformer_forward.8} parent=11 // pred_check_branch
        %166 = sbr.rel (%p164) target = $region20
      $region19: #{stellar_transformer_forward.8} parent=11 // pred_region
        _
      $region20: #{stellar_transformer_forward.8} parent=11 // pred_fallthru
        _
      // Predicated region
      $region21: #{stellar_transformer_forward.8} parent=11 // pred_check
        %p167 = pneg %p118
      $region22: #{stellar_transformer_forward.8} parent=11 // pred_check_branch
        %169 = sbr.rel (%p167) target = $region24
      $region23: #{stellar_transformer_forward.8} parent=11 // pred_region
        %p170 = scmp.lt.s32.totalorder %s20, 0
        %s171 = scalar_select %p170, %s20, 0
        %s172 = smul.addr %s171, 8
        %s173 = scalar_lea.vmem %s3, %s172
      $region24: #{stellar_transformer_forward.8} parent=11 // pred_fallthru
        _
    $region12: #{stellar_transformer_forward.8} parent=5 // pred_fallthru
      _
    %p174 = scmp.lt.s32.totalorder %s10, 2
    // Predicated region
    $region25: #{stellar_transformer_forward.8} parent=5 // pred_check
      %p175 = pneg %p174
    $region26: #{stellar_transformer_forward.8} parent=5 // pred_check_branch
      %177 = sbr.rel (%p175) target = $region28
    $region27: #{stellar_transformer_forward.8} parent=5 // pred_region
      // Predicated region
      $region29: #{stellar_transformer_forward.8} parent=27 // pred_check
        %p178 = pneg %p44
      $region30: #{stellar_transformer_forward.8} parent=27 // pred_check_branch
        %180 = sbr.rel (%p178) target = $region32
      $region31: #{stellar_transformer_forward.8} parent=27 // pred_region
        %p181 = scmp.lt.s32.totalorder %s17, 1
        %s182 = scalar_select %p181, %s17, 1
        %p183 = scmp.lt.s32.totalorder %s18, 0
        %s184 = scalar_select %p183, %s18, 0
        %s185 = sadd.s32 %s184, %s182
        %s186 = smul.addr %s185, 8
        %s187 = scalar_lea.vmem %s0, %s186
      $region32: #{stellar_transformer_forward.8} parent=27 // pred_fallthru
        _
    $region28: #{stellar_transformer_forward.8} parent=5 // pred_fallthru
      _
    %p188 = scmp.le.s32.totalorder 1, %s10
    %p189 = scmp.lt.s32.totalorder %s10, 3
    %p190 = pnand %p188, %p189
    %p191 = pneg %p190
    // Predicated region
    $region33: #{stellar_transformer_forward.8} parent=5 // pred_check
      _
    $region34: #{stellar_transformer_forward.8} parent=5 // pred_check_branch
      %193 = sbr.rel (%p190) target = $region36
    $region35: #{stellar_transformer_forward.8} parent=5 // pred_region
      %s194 = ssub.s32 %s10, 1
      %p195 = scmp.lt.s32.totalorder %s19, 1
      %s196 = scalar_select %p195, %s19, 1
      %p197 = scmp.lt.s32.totalorder %s20, 0
      %s198 = scalar_select %p197, %s20, 0
      %s199 = sadd.s32 %s198, %s196
      %s200 = smul.addr %s199, 8
      %s201 = scalar_lea.vmem %s0, %s200
      %p202 = pneg %p50
      %p203 = pneg %p47
      %p204 = pneg %p71
      %p205 = pneg %p68
      %p206 = pneg %p92
      %p207 = pneg %p89
      %p208 = scmp.lt.s32.totalorder %s20, 0
      %s209 = scalar_select %p208, %s20, 0
      %s210 = smul.addr %s209, 8
      %s211 = scalar_lea.vmem %s3, %s210
      %p212 = pneg %p118
      %p213 = pneg %p115
      %p214 = pneg %p146
      %p215 = pneg %p143
      %p216 = scmp.lt.s32.totalorder %s19, 1
      %s217 = scalar_select %p216, %s19, 1
      %p218 = scmp.lt.s32.totalorder %s20, 0
      %s219 = scalar_select %p218, %s20, 0
      %s220 = sadd.s32 %s219, %s217
      %s221 = smul.addr %s220, 8
      %s222 = scalar_lea.vmem %s4, %s221
      %p223 = scmp.lt.s32.totalorder %s19, 1
      %s224 = scalar_select %p223, %s19, 1
      %p225 = scmp.lt.s32.totalorder %s20, 0
      %s226 = scalar_select %p225, %s20, 0
      %s227 = sadd.s32 %s226, %s224
      %s228 = smul.addr %s227, 8
      %s229 = scalar_lea.vmem %s0, %s228
      %p230 = scmp.lt.s32.totalorder %s20, 0
      %s231 = scalar_select %p230, %s20, 0
      %s232 = smul.addr %s231, 8
      %s233 = scalar_lea.vmem %s3, %s232
      %p234 = scmp.lt.s32.totalorder %s19, 1
      %s235 = scalar_select %p234, %s19, 1
      %p236 = scmp.lt.s32.totalorder %s20, 0
      %s237 = scalar_select %p236, %s20, 0
      %s238 = sadd.s32 %s237, %s235
      %s239 = smul.addr %s238, 8
      %s240 = scalar_lea.vmem %s4, %s239
      %v242 = vld [vmem:[%s229] sm:$0xff]
      %v243 = vpack.c.bf16 %v242, %v242
      %v244 = vld [vmem:[%s1] sm:$0x7]
      %v245 = vld [vmem:[%s2] sm:$0x1]
      %v247 = vlaneseq
      %v248 = vshrl.u32 %v247, 7
      %v249 = vsub.s32 0, %v248
      %v250 = vrot.slane %v245, %v249
      %vm252 = vcmask 39936
      %v254 = vsel %vm252, %v243, 0
      %vm256 = vcmask 1041408
      %vm257 = vcmask 1042432
      %v258 = vsel %vm256, 4294967295, 65535
      %v259 = vsel %vm257, %v258, 0
      %v261 = vand.u32 %v244, %v259
      %263 = vmatprep.subr.bf16.mxu0 0
      %264 = vmatpush1.bf16.msra.mxu0 %v261
      %265 = vmatprep.subr.bf16.mxu0 0
      %266 = vmatpush1.bf16.msra.mxu0 0
      %267 = vmatprep.subr.bf16.mxu0 0
      %268 = vmatpush1.bf16.msra.mxu0 0
      %269 = vmatprep.subr.bf16.mxu0 0
      %270 = vmatpush1.bf16.msra.mxu0 0
      %271 = vmatprep.subr.bf16.mxu0 0
      %272 = vmatpush1.bf16.msra.mxu0 0
      %273 = vmatprep.subr.bf16.mxu0 0
      %274 = vmatpush1.bf16.msra.mxu0 0
      %275 = vmatprep.subr.bf16.mxu0 0
      %276 = vmatpush1.bf16.msra.mxu0 0
      %277 = vmatprep.subr.bf16.mxu0 0
      %278 = vmatpush1.bf16.msra.mxu0 0
      %279 = vmatprep.subr.bf16.mxu0 0
      %280 = vmatpush1.bf16.msra.mxu0 0
      %281 = vmatprep.subr.bf16.mxu0 0
      %282 = vmatpush1.bf16.msra.mxu0 0
      %283 = vmatprep.subr.bf16.mxu0 0
      %284 = vmatpush1.bf16.msra.mxu0 0
      %285 = vmatprep.subr.bf16.mxu0 0
      %286 = vmatpush1.bf16.msra.mxu0 0
      %287 = vmatprep.subr.bf16.mxu0 0
      %288 = vmatpush1.bf16.msra.mxu0 0
      %289 = vmatprep.subr.bf16.mxu0 0
      %290 = vmatpush1.bf16.msra.mxu0 0
      %291 = vmatprep.subr.bf16.mxu0 0
      %292 = vmatpush1.bf16.msra.mxu0 0
      %293 = vmatprep.subr.bf16.mxu0 0
      %294 = vmatpush1.bf16.msra.mxu0 0
      %295 = vmatprep.mubr.bf16.mxu0 0
      %296 = vmatmul.mubr.bf16.gmra.mrb[0].mxu0 %v254
      %v297 = vpop.f32.mrb[0].mxu0
      %v298 = vadd.f32 %v250, %v297
      %v299 = vpop.f32.mrb[0].mxu0
      %v300 = vpop.f32.mrb[0].mxu0
      %v301 = vpop.f32.mrb[0].mxu0
      %302 = vdwg.mxu0
      %v303 = vld [vmem:[%s233] sm:$0xff]
      %v304 = vadd.f32 %v298, %v303
      %vm305 = vcmask 523264
      %306 = vst.msk [vmem:[%s240] sm:$0xff] %vm305, %v304
      %p307 = scmp.lt.s32.totalorder %s19, 1
      %s308 = scalar_select %p307, %s19, 1
      %p309 = scmp.lt.s32.totalorder %s20, 0
      %s310 = scalar_select %p309, %s20, 0
      %s311 = sadd.s32 %s310, %s308
      %s312 = smul.addr %s311, 8
      %s313 = scalar_lea.vmem %s4, %s312
      // Predicated region
      $region37: #{stellar_transformer_forward.8} parent=35 // pred_check
        %p314 = pneg %p143
      $region38: #{stellar_transformer_forward.8} parent=35 // pred_check_branch
        %316 = sbr.rel (%p314) target = $region40
      $region39: #{stellar_transformer_forward.8} parent=35 // pred_region
        _
      $region40: #{stellar_transformer_forward.8} parent=35 // pred_fallthru
        _
    $region36: #{stellar_transformer_forward.8} parent=5 // pred_fallthru
      _
    %p317 = scmp.le.s32.totalorder 2, %s10
    // Predicated region
    $region41: #{stellar_transformer_forward.8} parent=5 // pred_check
      %p318 = pneg %p317
    $region42: #{stellar_transformer_forward.8} parent=5 // pred_check_branch
      %320 = sbr.rel (%p318) target = $region44
    $region43: #{stellar_transformer_forward.8} parent=5 // pred_region
      %s321 = ssub.s32 %s10, 2
      // Predicated region
      $region45: #{stellar_transformer_forward.8} parent=43 // pred_check
        %p322 = pneg %p149
      $region46: #{stellar_transformer_forward.8} parent=43 // pred_check_branch
        %324 = sbr.rel (%p322) target = $region48
      $region47: #{stellar_transformer_forward.8} parent=43 // pred_region
        %p325 = scmp.lt.s32.totalorder %s21, 1
        %s326 = scalar_select %p325, %s21, 1
        %p327 = scmp.lt.s32.totalorder %s22, 0
        %s328 = scalar_select %p327, %s22, 0
        %s329 = sadd.s32 %s328, %s326
        %s330 = smul.addr %s329, 8
        %s331 = scalar_lea.vmem %s4, %s330
      $region48: #{stellar_transformer_forward.8} parent=43 // pred_fallthru
        _
    $region44: #{stellar_transformer_forward.8} parent=5 // pred_fallthru
      _
  $region6: #{stellar_transformer_forward.8} parent=0 // loop_footer
    %s14 = sadd.s32 1, %s10
  $region7: #{stellar_transformer_forward.8} parent=0 // loop_footer_branch
    %9 = sbr.rel target = $region3
  $region8: #{stellar_transformer_forward.8} parent=0 // loop_exit
    _

// kernel: stellar_transformer_forward.15
$region0: #{stellar_transformer_forward.15}
  #allocation0 [shape = 'u32[]', space=smem, size = 0x4, offset = 0x4, fixed_abs, tag = 'smem constant byte address 0x4 - core index']
  #allocation1 [shape = 'u32[144,128]{1,0:T(1,128)}', space=vmem, size = 0x12000, scoped, tag = 'internal scratch']
  #allocation2 [shape = 'f32[16,128]{1,0:T(8,128)}', space=vmem, size = 0x2000, scoped, tag = 'scratch operand']
  %s0 = inlined_call_operand.vmem [shape: f32[16,64], index: 0, kind: input, shape index: {}]
  %s1 = inlined_call_operand.vmem [shape: bf16[64,128], index: 1, kind: input, shape index: {}]
  %s2 = inlined_call_operand.vmem [shape: f32[1,128], index: 2, kind: input, shape index: {}]
  %s3 = inlined_call_operand.vmem [shape: f32[16,128], index: 3, kind: output, shape index: {}]
  %s4 = sld [smem:[#allocation0]]
  $region30: #{stellar_transformer_forward.15} parent=0
    _
  %s6 = ssub.s32 1, %s4
  %s7 = scalar_select 0, %s6, %s4
  // Predicated region
  $region2: #{stellar_transformer_forward.15} parent=0 // pred_check
    _
  $region3: #{stellar_transformer_forward.15} parent=0 // pred_check_branch
    %9 = sbr.rel (0) target = $region5
  $region4: #{stellar_transformer_forward.15} parent=0 // pred_region
    _
  $region5: #{stellar_transformer_forward.15} parent=0 // pred_fallthru
    _
  // Predicated region
  $region6: #{stellar_transformer_forward.15} parent=0 // pred_check
    _
  $region7: #{stellar_transformer_forward.15} parent=0 // pred_check_branch
    %11 = sbr.rel (0) target = $region9
  $region8: #{stellar_transformer_forward.15} parent=0 // pred_region
    _
  $region9: #{stellar_transformer_forward.15} parent=0 // pred_fallthru
    _
  // Predicated region
  $region10: #{stellar_transformer_forward.15} parent=0 // pred_check
    _
  $region11: #{stellar_transformer_forward.15} parent=0 // pred_check_branch
    %13 = sbr.rel (0) target = $region13
  $region12: #{stellar_transformer_forward.15} parent=0 // pred_region
    _
  $region13: #{stellar_transformer_forward.15} parent=0 // pred_fallthru
    _
  %p15 = scmp.eq.s32.totalorder 0, 0
  // Predicated region
  $region14: #{stellar_transformer_forward.15} parent=0 // pred_check
    %p16 = pneg %p15
  $region15: #{stellar_transformer_forward.15} parent=0 // pred_check_branch
    %18 = sbr.rel (%p16) target = $region17
  $region16: #{stellar_transformer_forward.15} parent=0 // pred_region
    %19 = vst [vmem:[#allocation2] sm:$0xff] 0.0
    %20 = vst [vmem:[#allocation2 + $0x8] sm:$0xff] 0.0
  $region17: #{stellar_transformer_forward.15} parent=0 // pred_fallthru
    _
  %v21 = vld [vmem:[#allocation2] sm:$0xff]
  %v22 = vld [vmem:[#allocation2 + $0x8] sm:$0xff]
  %v23 = vld [vmem:[%s0] sm:$0xff]
  %v24 = vld [vmem:[%s0 + $0x8] sm:$0xff]
  %v25 = vpack.c.bf16 %v24, %v23
  %v26 = vld [vmem:[%s1] sm:$0xf]
  %v27 = vld [vmem:[%s1 + $0x4] sm:$0xf]
  %v28 = vld [vmem:[%s1 + $0x8] sm:$0xf]
  %v29 = vld [vmem:[%s1 + $0xc] sm:$0xf]
  %v30 = vld [vmem:[%s1 + $0x10] sm:$0xf]
  %v31 = vld [vmem:[%s1 + $0x14] sm:$0xf]
  %v32 = vld [vmem:[%s1 + $0x18] sm:$0xf]
  %v33 = vld [vmem:[%s1 + $0x1c] sm:$0xf]
  %v42 = vunpack.c.l.b16 %v26
  %v43 = vunpack.c.l.b16 %v27
  %v44 = vunpack.c.l.b16 %v28
  %v45 = vunpack.c.l.b16 %v29
  %v46 = vunpack.c.l.b16 %v30
  %v47 = vunpack.c.l.b16 %v31
  %v48 = vunpack.c.l.b16 %v32
  %v49 = vunpack.c.l.b16 %v33
  %v50 = vpack.c.b16 %v43, %v42
  %v51 = vpack.c.b16 %v45, %v44
  %v52 = vpack.c.b16 %v47, %v46
  %v53 = vpack.c.b16 %v49, %v48
  %vm58 = vcmask 523264
  %v60 = vsel %vm58, %v25, 0
  %62 = vmatprep.subr.bf16.mxu0 0
  %63 = vmatpush1.bf16.msra.mxu0 %v50
  %64 = vmatprep.subr.bf16.mxu0 0
  %65 = vmatpush1.bf16.msra.mxu0 %v51
  %66 = vmatprep.subr.bf16.mxu0 0
  %67 = vmatpush1.bf16.msra.mxu0 %v52
  %68 = vmatprep.subr.bf16.mxu0 0
  %69 = vmatpush1.bf16.msra.mxu0 %v53
  %70 = vmatprep.subr.bf16.mxu0 0
  %71 = vmatpush1.bf16.msra.mxu0 0
  %72 = vmatprep.subr.bf16.mxu0 0
  %73 = vmatpush1.bf16.msra.mxu0 0
  %74 = vmatprep.subr.bf16.mxu0 0
  %75 = vmatpush1.bf16.msra.mxu0 0
  %76 = vmatprep.subr.bf16.mxu0 0
  %77 = vmatpush1.bf16.msra.mxu0 0
  %78 = vmatprep.subr.bf16.mxu0 0
  %79 = vmatpush1.bf16.msra.mxu0 0
  %80 = vmatprep.subr.bf16.mxu0 0
  %81 = vmatpush1.bf16.msra.mxu0 0
  %82 = vmatprep.subr.bf16.mxu0 0
  %83 = vmatpush1.bf16.msra.mxu0 0
  %84 = vmatprep.subr.bf16.mxu0 0
  %85 = vmatpush1.bf16.msra.mxu0 0
  %86 = vmatprep.subr.bf16.mxu0 0
  %87 = vmatpush1.bf16.msra.mxu0 0
  %88 = vmatprep.subr.bf16.mxu0 0
  %89 = vmatpush1.bf16.msra.mxu0 0
  %90 = vmatprep.subr.bf16.mxu0 0
  %91 = vmatpush1.bf16.msra.mxu0 0
  %92 = vmatprep.subr.bf16.mxu0 0
  %93 = vmatpush1.bf16.msra.mxu0 0
  %94 = vmatprep.mubr.bf16.mxu0 0
  %95 = vmatmul.mubr.bf16.gmra.mrb[0].mxu0 %v60
  %v96 = vpop.f32.mrb[0].mxu0
  %v97 = vadd.f32 0.0, %v96
  %v98 = vpop.f32.mrb[0].mxu0
  %v99 = vpop.f32.mrb[0].mxu0
  %v100 = vadd.f32 0.0, %v99
  %v101 = vpop.f32.mrb[0].mxu0
  %102 = vdwg.mxu0
  %v103 = vadd.f32 %v21, %v97
  %v104 = vadd.f32 %v22, %v100
  %105 = vst [vmem:[#allocation2] sm:$0xff] %v103
  %106 = vst [vmem:[#allocation2 + $0x8] sm:$0xff] %v104
  // Predicated region
  $region18: #{stellar_transformer_forward.15} parent=0 // pred_check
    %p107 = pneg %p15
  $region19: #{stellar_transformer_forward.15} parent=0 // pred_check_branch
    %109 = sbr.rel (%p107) target = $region21
  $region20: #{stellar_transformer_forward.15} parent=0 // pred_region
    %v110 = vld [vmem:[#allocation2] sm:$0xff]
    %v111 = vld [vmem:[#allocation2 + $0x8] sm:$0xff]
    %v112 = vld [vmem:[%s2] sm:$0x1]
    %v114 = vlaneseq
    %v115 = vshrl.u32 %v114, 7
    %v116 = vsub.s32 0, %v115
    %v117 = vrot.slane %v112, %v116
    %v119 = vadd.f32 %v110, %v117
    %v120 = vadd.f32 %v111, %v117
    %121 = vst [vmem:[%s3] sm:$0xff] %v119
    %122 = vst [vmem:[%s3 + $0x8] sm:$0xff] %v120
  $region21: #{stellar_transformer_forward.15} parent=0 // pred_fallthru
    _
  // Predicated region
  $region22: #{stellar_transformer_forward.15} parent=0 // pred_check
    _
  $region23: #{stellar_transformer_forward.15} parent=0 // pred_check_branch
    %124 = sbr.rel (0) target = $region25
  $region24: #{stellar_transformer_forward.15} parent=0 // pred_region
    _
  $region25: #{stellar_transformer_forward.15} parent=0 // pred_fallthru
    _
  // Predicated region
  $region26: #{stellar_transformer_forward.15} parent=0 // pred_check
    _
  $region27: #{stellar_transformer_forward.15} parent=0 // pred_check_branch
    %126 = sbr.rel (0) target = $region29
  $region28: #{stellar_transformer_forward.15} parent=0 // pred_region
    _
  $region29: #{stellar_transformer_forward.15} parent=0 // pred_fallthru
    _

// kernel: stellar_transformer_forward.10
$region0: #{stellar_transformer_forward.10}
  #allocation0 [shape = 'u32[]', space=smem, size = 0x4, offset = 0x4, fixed_abs, tag = 'smem constant byte address 0x4 - core index']
  #allocation1 [shape = 'u32[144,128]{1,0:T(1,128)}', space=vmem, size = 0x12000, scoped, tag = 'internal scratch']
  #allocation2 [shape = 'f32[16,64]{1,0:T(8,128)}', space=vmem, size = 0x2000, scoped, tag = 'scratch operand']
  %s0 = inlined_call_operand.vmem [shape: f32[16,64], index: 0, kind: input, shape index: {}]
  %s1 = inlined_call_operand.vmem [shape: bf16[64,256], index: 1, kind: input, shape index: {}]
  %s2 = inlined_call_operand.vmem [shape: f32[1,256], index: 2, kind: input, shape index: {}]
  %s3 = inlined_call_operand.vmem [shape: bf16[256,64], index: 3, kind: input, shape index: {}]
  %s4 = inlined_call_operand.vmem [shape: f32[1,64], index: 4, kind: input, shape index: {}]
  %s5 = inlined_call_operand.vmem [shape: f32[1,64], index: 5, kind: input, shape index: {}]
  %s6 = inlined_call_operand.vmem [shape: f32[1,64], index: 6, kind: input, shape index: {}]
  %s7 = inlined_call_operand.vmem [shape: f32[16,64], index: 7, kind: output, shape index: {}]
  %s8 = sld [smem:[#allocation0]]
  $region46: #{stellar_transformer_forward.10} parent=0
    _
  %s10 = ssub.s32 1, %s8
  %s11 = scalar_select 0, %s10, %s8
  // Predicated region
  $region2: #{stellar_transformer_forward.10} parent=0 // pred_check
    _
  $region3: #{stellar_transformer_forward.10} parent=0 // pred_check_branch
    %13 = sbr.rel (0) target = $region5
  $region4: #{stellar_transformer_forward.10} parent=0 // pred_region
    _
  $region5: #{stellar_transformer_forward.10} parent=0 // pred_fallthru
    _
  // Predicated region
  $region6: #{stellar_transformer_forward.10} parent=0 // pred_check
    _
  $region7: #{stellar_transformer_forward.10} parent=0 // pred_check_branch
    %15 = sbr.rel (0) target = $region9
  $region8: #{stellar_transformer_forward.10} parent=0 // pred_region
    _
  $region9: #{stellar_transformer_forward.10} parent=0 // pred_fallthru
    _
  // Predicated region
  $region10: #{stellar_transformer_forward.10} parent=0 // pred_check
    _
  $region11: #{stellar_transformer_forward.10} parent=0 // pred_check_branch
    %17 = sbr.rel (0) target = $region13
  $region12: #{stellar_transformer_forward.10} parent=0 // pred_region
    _
  $region13: #{stellar_transformer_forward.10} parent=0 // pred_fallthru
    _
  // Predicated region
  $region14: #{stellar_transformer_forward.10} parent=0 // pred_check
    _
  $region15: #{stellar_transformer_forward.10} parent=0 // pred_check_branch
    %19 = sbr.rel (0) target = $region17
  $region16: #{stellar_transformer_forward.10} parent=0 // pred_region
    _
  $region17: #{stellar_transformer_forward.10} parent=0 // pred_fallthru
    _
  // Predicated region
  $region18: #{stellar_transformer_forward.10} parent=0 // pred_check
    _
  $region19: #{stellar_transformer_forward.10} parent=0 // pred_check_branch
    %21 = sbr.rel (0) target = $region21
  $region20: #{stellar_transformer_forward.10} parent=0 // pred_region
    _
  $region21: #{stellar_transformer_forward.10} parent=0 // pred_fallthru
    _
  // Predicated region
  $region22: #{stellar_transformer_forward.10} parent=0 // pred_check
    _
  $region23: #{stellar_transformer_forward.10} parent=0 // pred_check_branch
    %23 = sbr.rel (0) target = $region25
  $region24: #{stellar_transformer_forward.10} parent=0 // pred_region
    _
  $region25: #{stellar_transformer_forward.10} parent=0 // pred_fallthru
    _
  // Predicated region
  $region26: #{stellar_transformer_forward.10} parent=0 // pred_check
    _
  $region27: #{stellar_transformer_forward.10} parent=0 // pred_check_branch
    %25 = sbr.rel (0) target = $region29
  $region28: #{stellar_transformer_forward.10} parent=0 // pred_region
    _
  $region29: #{stellar_transformer_forward.10} parent=0 // pred_fallthru
    _
  %p27 = scmp.eq.s32.totalorder 0, 0
  // Predicated region
  $region30: #{stellar_transformer_forward.10} parent=0 // pred_check
    %p28 = pneg %p27
  $region31: #{stellar_transformer_forward.10} parent=0 // pred_check_branch
    %30 = sbr.rel (%p28) target = $region33
  $region32: #{stellar_transformer_forward.10} parent=0 // pred_region
    %vm31 = vcmask 523264
    %32 = vst.msk [vmem:[#allocation2] sm:$0xff] %vm31, 0.0
    %33 = vst.msk [vmem:[#allocation2 + $0x8] sm:$0xff] %vm31, 0.0
  $region33: #{stellar_transformer_forward.10} parent=0 // pred_fallthru
    _
  %v34 = vld [vmem:[%s0] sm:$0xff]
  %v35 = vld [vmem:[%s0 + $0x8] sm:$0xff]
  %v36 = vpack.c.bf16 %v35, %v34
  %v37 = vld [vmem:[%s1] sm:$0xff]
  %v38 = vld [vmem:[%s1 + $0x8] sm:$0xff]
  %v39 = vld [vmem:[%s1 + $0x10] sm:$0xff]
  %v40 = vld [vmem:[%s1 + $0x18] sm:$0xff]
  %v41 = vld [vmem:[%s1 + $0x20] sm:$0xff]
  %v42 = vld [vmem:[%s1 + $0x28] sm:$0xff]
  %v43 = vld [vmem:[%s1 + $0x30] sm:$0xff]
  %v44 = vld [vmem:[%s1 + $0x38] sm:$0xff]
  %v45 = vld [vmem:[%s2] sm:$0x3]
  %v47 = vlaneseq
  %v48 = vshrl.u32 %v47, 7
  %v49 = vsub.s32 0, %v48
  %v50 = vrot.slane %v45, %v49
  %v51 = vlaneseq
  %v52 = vshrl.u32 %v51, 7
  %v53 = vsub.s32 1, %v52
  %v54 = vrot.slane %v45, %v53
  %v65 = vunpack.c.l.b16 %v37
  %v66 = vunpack.c.h.b16 %v37
  %v67 = vunpack.c.l.b16 %v38
  %v68 = vunpack.c.h.b16 %v38
  %v69 = vunpack.c.l.b16 %v39
  %v70 = vunpack.c.h.b16 %v39
  %v71 = vunpack.c.l.b16 %v40
  %v72 = vunpack.c.h.b16 %v40
  %v73 = vunpack.c.l.b16 %v41
  %v74 = vunpack.c.h.b16 %v41
  %v75 = vunpack.c.l.b16 %v42
  %v76 = vunpack.c.h.b16 %v42
  %v77 = vunpack.c.l.b16 %v43
  %v78 = vunpack.c.h.b16 %v43
  %v79 = vunpack.c.l.b16 %v44
  %v80 = vunpack.c.h.b16 %v44
  %v81 = vpack.c.b16 %v67, %v65
  %v82 = vpack.c.b16 %v68, %v66
  %v83 = vpack.c.b16 %v71, %v69
  %v84 = vpack.c.b16 %v72, %v70
  %v85 = vpack.c.b16 %v75, %v73
  %v86 = vpack.c.b16 %v76, %v74
  %v87 = vpack.c.b16 %v79, %v77
  %v88 = vpack.c.b16 %v80, %v78
  %vm97 = vcmask 523264
  %v99 = vsel %vm97, %v36, 0
  %101 = vmatprep.subr.bf16.mxu0 %v82
  %102 = vmatpush1.bf16.msra.mxu0 %v81
  %103 = vmatprep.subr.bf16.mxu0 %v84
  %104 = vmatpush1.bf16.msra.mxu0 %v83
  %105 = vmatprep.subr.bf16.mxu0 %v86
  %106 = vmatpush1.bf16.msra.mxu0 %v85
  %107 = vmatprep.subr.bf16.mxu0 %v88
  %108 = vmatpush1.bf16.msra.mxu0 %v87
  %109 = vmatprep.subr.bf16.mxu0 0
  %110 = vmatpush1.bf16.msra.mxu0 0
  %111 = vmatprep.subr.bf16.mxu0 0
  %112 = vmatpush1.bf16.msra.mxu0 0
  %113 = vmatprep.subr.bf16.mxu0 0
  %114 = vmatpush1.bf16.msra.mxu0 0
  %115 = vmatprep.subr.bf16.mxu0 0
  %116 = vmatpush1.bf16.msra.mxu0 0
  %117 = vmatprep.subr.bf16.mxu0 0
  %118 = vmatpush1.bf16.msra.mxu0 0
  %119 = vmatprep.subr.bf16.mxu0 0
  %120 = vmatpush1.bf16.msra.mxu0 0
  %121 = vmatprep.subr.bf16.mxu0 0
  %122 = vmatpush1.bf16.msra.mxu0 0
  %123 = vmatprep.subr.bf16.mxu0 0
  %124 = vmatpush1.bf16.msra.mxu0 0
  %125 = vmatprep.subr.bf16.mxu0 0
  %126 = vmatpush1.bf16.msra.mxu0 0
  %127 = vmatprep.subr.bf16.mxu0 0
  %128 = vmatpush1.bf16.msra.mxu0 0
  %129 = vmatprep.subr.bf16.mxu0 0
  %130 = vmatpush1.bf16.msra.mxu0 0
  %131 = vmatprep.subr.bf16.mxu0 0
  %132 = vmatpush1.bf16.msra.mxu0 0
  %133 = vmatprep.mubr.bf16.mxu0 0
  %134 = vmatmul.mubr.bf16.gmra.mrb[0].mxu0 %v99
  %v135 = vpop.f32.mrb[0].mxu0
  %v136 = vadd.f32 %v50, %v135
  %v137 = vpop.f32.mrb[0].mxu0
  %v138 = vadd.f32 %v54, %v137
  %v139 = vpop.f32.mrb[0].mxu0
  %v140 = vadd.f32 %v50, %v139
  %v141 = vpop.f32.mrb[0].mxu0
  %v142 = vadd.f32 %v54, %v141
  %143 = vdwg.mxu0
  %v144 = vmax.f32 %v136, 0.0
  %v145 = vmax.f32 %v138, 0.0
  %v146 = vmax.f32 %v140, 0.0
  %v147 = vmax.f32 %v142, 0.0
  %v148 = vld [vmem:[#allocation2] sm:$0xff]
  %v149 = vld [vmem:[#allocation2 + $0x8] sm:$0xff]
  %v150 = vpack.c.bf16 %v146, %v144
  %v151 = vpack.c.bf16 %v147, %v145
  %v152 = vld [vmem:[%s3] sm:$0xf]
  %v153 = vld [vmem:[%s3 + $0x4] sm:$0xf]
  %v154 = vld [vmem:[%s3 + $0x8] sm:$0xf]
  %v155 = vld [vmem:[%s3 + $0xc] sm:$0xf]
  %v156 = vld [vmem:[%s3 + $0x10] sm:$0xf]
  %v157 = vld [vmem:[%s3 + $0x14] sm:$0xf]
  %v158 = vld [vmem:[%s3 + $0x18] sm:$0xf]
  %v159 = vld [vmem:[%s3 + $0x1c] sm:$0xf]
  %v160 = vld [vmem:[%s3 + $0x20] sm:$0xf]
  %v161 = vld [vmem:[%s3 + $0x24] sm:$0xf]
  %v162 = vld [vmem:[%s3 + $0x28] sm:$0xf]
  %v163 = vld [vmem:[%s3 + $0x2c] sm:$0xf]
  %v164 = vld [vmem:[%s3 + $0x30] sm:$0xf]
  %v165 = vld [vmem:[%s3 + $0x34] sm:$0xf]
  %v166 = vld [vmem:[%s3 + $0x38] sm:$0xf]
  %v167 = vld [vmem:[%s3 + $0x3c] sm:$0xf]
  %v168 = vld [vmem:[%s3 + $0x40] sm:$0xf]
  %v169 = vld [vmem:[%s3 + $0x44] sm:$0xf]
  %v170 = vld [vmem:[%s3 + $0x48] sm:$0xf]
  %v171 = vld [vmem:[%s3 + $0x4c] sm:$0xf]
  %v172 = vld [vmem:[%s3 + $0x50] sm:$0xf]
  %v173 = vld [vmem:[%s3 + $0x54] sm:$0xf]
  %v174 = vld [vmem:[%s3 + $0x58] sm:$0xf]
  %v175 = vld [vmem:[%s3 + $0x5c] sm:$0xf]
  %v176 = vld [vmem:[%s3 + $0x60] sm:$0xf]
  %v177 = vld [vmem:[%s3 + $0x64] sm:$0xf]
  %v178 = vld [vmem:[%s3 + $0x68] sm:$0xf]
  %v179 = vld [vmem:[%s3 + $0x6c] sm:$0xf]
  %v180 = vld [vmem:[%s3 + $0x70] sm:$0xf]
  %v181 = vld [vmem:[%s3 + $0x74] sm:$0xf]
  %v182 = vld [vmem:[%s3 + $0x78] sm:$0xf]
  %v183 = vld [vmem:[%s3 + $0x7c] sm:$0xf]
  %v216 = vunpack.c.l.b16 %v152
  %v217 = vunpack.c.l.b16 %v153
  %v218 = vunpack.c.l.b16 %v154
  %v219 = vunpack.c.l.b16 %v155
  %v220 = vunpack.c.l.b16 %v156
  %v221 = vunpack.c.l.b16 %v157
  %v222 = vunpack.c.l.b16 %v158
  %v223 = vunpack.c.l.b16 %v159
  %v224 = vunpack.c.l.b16 %v160
  %v225 = vunpack.c.l.b16 %v161
  %v226 = vunpack.c.l.b16 %v162
  %v227 = vunpack.c.l.b16 %v163
  %v228 = vunpack.c.l.b16 %v164
  %v229 = vunpack.c.l.b16 %v165
  %v230 = vunpack.c.l.b16 %v166
  %v231 = vunpack.c.l.b16 %v167
  %v232 = vunpack.c.l.b16 %v168
  %v233 = vunpack.c.l.b16 %v169
  %v234 = vunpack.c.l.b16 %v170
  %v235 = vunpack.c.l.b16 %v171
  %v236 = vunpack.c.l.b16 %v172
  %v237 = vunpack.c.l.b16 %v173
  %v238 = vunpack.c.l.b16 %v174
  %v239 = vunpack.c.l.b16 %v175
  %v240 = vunpack.c.l.b16 %v176
  %v241 = vunpack.c.l.b16 %v177
  %v242 = vunpack.c.l.b16 %v178
  %v243 = vunpack.c.l.b16 %v179
  %v244 = vunpack.c.l.b16 %v180
  %v245 = vunpack.c.l.b16 %v181
  %v246 = vunpack.c.l.b16 %v182
  %v247 = vunpack.c.l.b16 %v183
  %v248 = vpack.c.b16 %v217, %v216
  %v249 = vpack.c.b16 %v219, %v218
  %v250 = vpack.c.b16 %v221, %v220
  %v251 = vpack.c.b16 %v223, %v222
  %v252 = vpack.c.b16 %v225, %v224
  %v253 = vpack.c.b16 %v227, %v226
  %v254 = vpack.c.b16 %v229, %v228
  %v255 = vpack.c.b16 %v231, %v230
  %v256 = vpack.c.b16 %v233, %v232
  %v257 = vpack.c.b16 %v235, %v234
  %v258 = vpack.c.b16 %v237, %v236
  %v259 = vpack.c.b16 %v239, %v238
  %v260 = vpack.c.b16 %v241, %v240
  %v261 = vpack.c.b16 %v243, %v242
  %v262 = vpack.c.b16 %v245, %v244
  %v263 = vpack.c.b16 %v247, %v246
  %280 = vmatprep.subr.bf16.mxu0 0
  %281 = vmatpush1.bf16.msra.mxu0 %v248
  %282 = vmatprep.subr.bf16.mxu0 0
  %283 = vmatpush1.bf16.msra.mxu0 %v249
  %284 = vmatprep.subr.bf16.mxu0 0
  %285 = vmatpush1.bf16.msra.mxu0 %v250
  %286 = vmatprep.subr.bf16.mxu0 0
  %287 = vmatpush1.bf16.msra.mxu0 %v251
  %288 = vmatprep.subr.bf16.mxu0 0
  %289 = vmatpush1.bf16.msra.mxu0 %v252
  %290 = vmatprep.subr.bf16.mxu0 0
  %291 = vmatpush1.bf16.msra.mxu0 %v253
  %292 = vmatprep.subr.bf16.mxu0 0
  %293 = vmatpush1.bf16.msra.mxu0 %v254
  %294 = vmatprep.subr.bf16.mxu0 0
  %295 = vmatpush1.bf16.msra.mxu0 %v255
  %296 = vmatprep.subr.bf16.mxu0 0
  %297 = vmatpush1.bf16.msra.mxu0 %v256
  %298 = vmatprep.subr.bf16.mxu0 0
  %299 = vmatpush1.bf16.msra.mxu0 %v257
  %300 = vmatprep.subr.bf16.mxu0 0
  %301 = vmatpush1.bf16.msra.mxu0 %v258
  %302 = vmatprep.subr.bf16.mxu0 0
  %303 = vmatpush1.bf16.msra.mxu0 %v259
  %304 = vmatprep.subr.bf16.mxu0 0
  %305 = vmatpush1.bf16.msra.mxu0 %v260
  %306 = vmatprep.subr.bf16.mxu0 0
  %307 = vmatpush1.bf16.msra.mxu0 %v261
  %308 = vmatprep.subr.bf16.mxu0 0
  %309 = vmatpush1.bf16.msra.mxu0 %v262
  %310 = vmatprep.subr.bf16.mxu0 0
  %311 = vmatpush1.bf16.msra.mxu0 %v263
  %312 = vmatprep.mubr.bf16.mxu0 %v151
  %313 = vmatmul.mubr.bf16.gmra.mrb[0].mxu0 %v150
  %v314 = vpop.f32.mrb[0].mxu0
  %v315 = vadd.f32 0.0, %v314
  %v316 = vpop.f32.mrb[0].mxu0
  %v317 = vpop.f32.mrb[0].mxu0
  %v318 = vadd.f32 0.0, %v317
  %v319 = vpop.f32.mrb[0].mxu0
  %320 = vdwg.mxu0
  %v321 = vadd.f32 %v148, %v315
  %v322 = vadd.f32 %v149, %v318
  %323 = vst.msk [vmem:[#allocation2] sm:$0xff] %vm97, %v321
  %324 = vst.msk [vmem:[#allocation2 + $0x8] sm:$0xff] %vm97, %v322
  // Predicated region
  $region34: #{stellar_transformer_forward.10} parent=0 // pred_check
    %p325 = pneg %p27
  $region35: #{stellar_transformer_forward.10} parent=0 // pred_check_branch
    %327 = sbr.rel (%p325) target = $region37
  $region36: #{stellar_transformer_forward.10} parent=0 // pred_region
    %v328 = vld [vmem:[#allocation2] sm:$0xff]
    %v329 = vld [vmem:[#allocation2 + $0x8] sm:$0xff]
    %v330 = vld [vmem:[%s4] sm:$0x1]
    %v332 = vlaneseq
    %v333 = vshrl.u32 %v332, 7
    %v334 = vsub.s32 0, %v333
    %v335 = vrot.slane %v330, %v334
    %v337 = vadd.f32 %v328, %v335
    %v338 = vadd.f32 %v329, %v335
    %v339 = vld [vmem:[%s0] sm:$0xff]
    %v340 = vld [vmem:[%s0 + $0x8] sm:$0xff]
    %v341 = vadd.f32 %v337, %v339
    %v342 = vadd.f32 %v338, %v340
    %v343 = vsel %vm97, %v341, 0.0
    %344 = vadd.xlane.f32.xlu0 %v343
    %v345 = vpop.xlane.xlu0 %344
    %v346 = vsel %vm97, %v342, 0.0
    %347 = vadd.xlane.f32.xlu0 %v346
    %v348 = vpop.xlane.xlu0 %347
    %v349 = vrcp.pop 64.0
    %v350 = vmul.f32 %v345, %v349
    %v351 = vmul.f32 %v348, %v349
    %v352 = vsub.f32 %v341, %v350
    %v353 = vsub.f32 %v342, %v351
    %v354 = vmul.f32 %v352, %v352
    %v355 = vmul.f32 %v353, %v353
    %v356 = vsel %vm97, %v354, 0.0
    %357 = vadd.xlane.f32.xlu0 %v356
    %v358 = vpop.xlane.xlu0 %357
    %v359 = vsel %vm97, %v355, 0.0
    %360 = vadd.xlane.f32.xlu0 %v359
    %v361 = vpop.xlane.xlu0 %360
    %v362 = vmul.f32 %v358, %v349
    %v363 = vmul.f32 %v361, %v349
    %v364 = vadd.f32 %v362, 1e-05
    %v365 = vadd.f32 %v363, 1e-05
    %v366 = vrsqrt.pop %v364
    %v367 = vrsqrt.pop %v365
    %v368 = vmul.f32 %v352, %v366
    %v369 = vmul.f32 %v353, %v367
    %v370 = vld [vmem:[%s5] sm:$0x1]
    %v372 = vlaneseq
    %v373 = vshrl.u32 %v372, 7
    %v374 = vsub.s32 0, %v373
    %v375 = vrot.slane %v370, %v374
    %v377 = vmul.f32 %v368, %v375
    %v378 = vmul.f32 %v369, %v375
    %v379 = vld [vmem:[%s6] sm:$0x1]
    %v381 = vlaneseq
    %v382 = vshrl.u32 %v381, 7
    %v383 = vsub.s32 0, %v382
    %v384 = vrot.slane %v379, %v383
    %v386 = vadd.f32 %v377, %v384
    %v387 = vadd.f32 %v378, %v384
    %388 = vst.msk [vmem:[%s7] sm:$0xff] %vm97, %v386
    %389 = vst.msk [vmem:[%s7 + $0x8] sm:$0xff] %vm97, %v387
  $region37: #{stellar_transformer_forward.10} parent=0 // pred_fallthru
    _
  // Predicated region
  $region38: #{stellar_transformer_forward.10} parent=0 // pred_check
    _
  $region39: #{stellar_transformer_forward.10} parent=0 // pred_check_branch
    %391 = sbr.rel (0) target = $region41
  $region40: #{stellar_transformer_forward.10} parent=0 // pred_region
    _
  $region41: #{stellar_transformer_forward.10} parent=0 // pred_fallthru
    _
  // Predicated region
  $region42: #{stellar_transformer_forward.10} parent=0 // pred_check
    _
  $region43: #{stellar_transformer_forward.10} parent=0 // pred_check_branch
    %393 = sbr.rel (0) target = $region45
  $region44: #{stellar_transformer_forward.10} parent=0 // pred_region
    _
  $region45: #{stellar_transformer_forward.10} parent=0 // pred_fallthru
    _

// kernel: stellar_transformer_forward.9
$region0: #{stellar_transformer_forward.9}
  #allocation0 [shape = 'u32[]', space=smem, size = 0x4, offset = 0x4, fixed_abs, tag = 'smem constant byte address 0x4 - core index']
  #allocation1 [shape = 'u32[144,128]{1,0:T(1,128)}', space=vmem, size = 0x12000, scoped, tag = 'internal scratch']
  %s0 = inlined_call_operand.vmem [shape: f32[2,8,64], index: 0, kind: input, shape index: {}, may-alias: {0,1}]
  %s1 = inlined_call_operand.vmem [shape: f32[2,8,64], index: 1, kind: input, shape index: {}, may-alias: {0,1}]
  %s2 = inlined_call_operand.vmem [shape: bf16[8,64,8], index: 2, kind: input, shape index: {}]
  %s3 = inlined_call_operand.vmem [shape: f32[8,1,8], index: 3, kind: input, shape index: {}]
  %s4 = inlined_call_operand.vmem [shape: bf16[8,64,8], index: 4, kind: input, shape index: {}]
  %s5 = inlined_call_operand.vmem [shape: f32[8,1,8], index: 5, kind: input, shape index: {}]
  %s6 = inlined_call_operand.vmem [shape: bf16[8,64,8], index: 6, kind: input, shape index: {}]
  %s7 = inlined_call_operand.vmem [shape: f32[8,1,8], index: 7, kind: input, shape index: {}]
  %s8 = inlined_call_operand.vmem [shape: bf16[8,8,64], index: 8, kind: input, shape index: {}]
  %s9 = inlined_call_operand.vmem [shape: f32[1,64], index: 9, kind: input, shape index: {}]
  %s10 = inlined_call_operand.vmem [shape: f32[1,64], index: 10, kind: input, shape index: {}]
  %s11 = inlined_call_operand.vmem [shape: f32[1,64], index: 11, kind: input, shape index: {}]
  %s12 = inlined_call_operand.vmem [shape: f32[2,8,64], index: 12, kind: output, shape index: {}]
  %s13 = sld [smem:[#allocation0]]
  $region81: #{stellar_transformer_forward.9} parent=0
    _
  %s15 = ssub.s32 1, %s13
  %s16 = scalar_select 0, %s15, %s13
  loop: start=0, step=1, limit=4
  $region2: #{stellar_transformer_forward.9} parent=0 // loop_pre_header
    _
  $region3: #{stellar_transformer_forward.9} parent=0 // loop_header
    %s18 = sphi 0, %s22
    %p19 = scmp.ge.s32.totalorder %s18, 4
    %s25 = sphi 0, %s37
    %s26 = sphi 0, %s33
    %s27 = sphi 0, %s25
    %s28 = sphi 0, %s26
    %s29 = sphi 0, %s27
    %s30 = sphi 0, %s28
    %s42 = sphi 0, %s44
    %s45 = sphi 0, %s42
    %s46 = sphi 0, %s45
    %s62 = sphi 0, %s46
    %s68 = sphi 0, %s70
    %s71 = sphi 0, %s68
    %s72 = sphi 0, %s71
    %s88 = sphi 0, %s72
    %s92 = sphi 0, %s92
    %s94 = sphi 0, %s92
    %s95 = sphi 0, %s94
    %s109 = sphi 0, %s95
    %s113 = sphi 0, %s113
    %s115 = sphi 0, %s113
    %s116 = sphi 0, %s115
    %s130 = sphi 0, %s116
    %s134 = sphi 0, %s134
    %s136 = sphi 0, %s134
    %s137 = sphi 0, %s136
    %s151 = sphi 0, %s137
    %s155 = sphi 0, %s155
    %s157 = sphi 0, %s155
    %s158 = sphi 0, %s157
    %s172 = sphi 0, %s158
    %s176 = sphi 0, %s176
    %s178 = sphi 0, %s176
    %s179 = sphi 0, %s178
    %s193 = sphi 0, %s179
    %s197 = sphi 0, %s197
    %s199 = sphi 0, %s197
    %s200 = sphi 0, %s199
    %s214 = sphi 0, %s200
    %s218 = sphi 0, %s218
    %s220 = sphi 0, %s218
    %s221 = sphi 0, %s220
    %s235 = sphi 0, %s221
    %s239 = sphi 0, %s239
    %s241 = sphi 0, %s239
    %s242 = sphi 0, %s241
    %s256 = sphi 0, %s242
    %s260 = sphi 0, %s260
    %s262 = sphi 0, %s260
    %s263 = sphi 0, %s262
    %s277 = sphi 0, %s263
    %s281 = sphi 0, %s281
    %s283 = sphi 0, %s281
    %s284 = sphi 0, %s283
    %s298 = sphi 0, %s284
    %s306 = sphi 0, %s308
    %s309 = sphi 0, %s306
    %s310 = sphi 0, %s309
    %s326 = sphi 0, %s310
  $region4: #{stellar_transformer_forward.9} parent=0 // loop_header_branch
    %21 = sbr.rel (%p19) target = $region8
  $region5: #{stellar_transformer_forward.9} parent=0 // loop_body
    %s23 = ssub.s32 %s18, 1
    %s24 = ssub.s32 %s18, 2
    %s31 = sadd.s32 1, %s26
    %p32 = scmp.ge.s32.totalorder %s31, 1
    %s33 = scalar_select %p32, 0, %s31
    %s34 = sadd.s32 1, %s25
    %s35 = scalar_select %p32, %s34, %s25
    %p36 = scmp.ge.s32.totalorder %s35, 2
    %s37 = scalar_select %p36, 0, %s35
    %s38 = ssub.s32 %s25, %s37
    %s39 = ssub.s32 %s26, %s33
    %s40 = sor.u32 %s38, %s39
    %p41 = scmp.eq.s32.totalorder %s40, 0
    %s43 = sadd.s32 %s42, 1
    %s44 = scalar_select %p41, %s42, %s43
    %p47 = pneg %p41
    %p48 = scmp.eq.s32.totalorder %s18, 1
    %p49 = por %p47, %p48
    %p50 = scmp.ne.s32.totalorder %s42, %s45
    %p51 = scmp.eq.s32.totalorder %s18, 0
    %p52 = por %p50, %p51
    %p53 = scmp.ne.s32.totalorder %s42, %s45
    %p54 = scmp.eq.s32.totalorder %s23, 1
    %p55 = por %p53, %p54
    %p56 = scmp.ne.s32.totalorder %s45, %s46
    %p57 = scmp.eq.s32.totalorder %s23, 0
    %p58 = por %p56, %p57
    %p59 = scmp.ne.s32.totalorder %s45, %s46
    %p60 = scmp.eq.s32.totalorder %s24, 1
    %p61 = por %p59, %p60
    %p63 = scmp.ne.s32.totalorder %s46, %s62
    %p64 = scmp.eq.s32.totalorder %s24, 0
    %p65 = por %p63, %p64
    %s66 = ssub.s32 %s25, %s37
    %p67 = scmp.eq.s32.totalorder %s66, 0
    %s69 = sadd.s32 %s68, 1
    %s70 = scalar_select %p67, %s68, %s69
    %p73 = pneg %p67
    %p74 = scmp.eq.s32.totalorder %s18, 1
    %p75 = por %p73, %p74
    %p76 = scmp.ne.s32.totalorder %s68, %s71
    %p77 = scmp.eq.s32.totalorder %s18, 0
    %p78 = por %p76, %p77
    %p79 = scmp.ne.s32.totalorder %s68, %s71
    %p80 = scmp.eq.s32.totalorder %s23, 1
    %p81 = por %p79, %p80
    %p82 = scmp.ne.s32.totalorder %s71, %s72
    %p83 = scmp.eq.s32.totalorder %s23, 0
    %p84 = por %p82, %p83
    %p85 = scmp.ne.s32.totalorder %s71, %s72
    %p86 = scmp.eq.s32.totalorder %s24, 1
    %p87 = por %p85, %p86
    %p89 = scmp.ne.s32.totalorder %s72, %s88
    %p90 = scmp.eq.s32.totalorder %s24, 0
    %p91 = por %p89, %p90
    %s93 = sadd.s32 %s92, 1
    %p96 = scmp.eq.s32.totalorder %s18, 1
    %p97 = scmp.ne.s32.totalorder %s92, %s94
    %p98 = scmp.eq.s32.totalorder %s18, 0
    %p99 = por %p97, %p98
    %p100 = scmp.ne.s32.totalorder %s92, %s94
    %p101 = scmp.eq.s32.totalorder %s23, 1
    %p102 = por %p100, %p101
    %p103 = scmp.ne.s32.totalorder %s94, %s95
    %p104 = scmp.eq.s32.totalorder %s23, 0
    %p105 = por %p103, %p104
    %p106 = scmp.ne.s32.totalorder %s94, %s95
    %p107 = scmp.eq.s32.totalorder %s24, 1
    %p108 = por %p106, %p107
    %p110 = scmp.ne.s32.totalorder %s95, %s109
    %p111 = scmp.eq.s32.totalorder %s24, 0
    %p112 = por %p110, %p111
    %s114 = sadd.s32 %s113, 1
    %p117 = scmp.eq.s32.totalorder %s18, 1
    %p118 = scmp.ne.s32.totalorder %s113, %s115
    %p119 = scmp.eq.s32.totalorder %s18, 0
    %p120 = por %p118, %p119
    %p121 = scmp.ne.s32.totalorder %s113, %s115
    %p122 = scmp.eq.s32.totalorder %s23, 1
    %p123 = por %p121, %p122
    %p124 = scmp.ne.s32.totalorder %s115, %s116
    %p125 = scmp.eq.s32.totalorder %s23, 0
    %p126 = por %p124, %p125
    %p127 = scmp.ne.s32.totalorder %s115, %s116
    %p128 = scmp.eq.s32.totalorder %s24, 1
    %p129 = por %p127, %p128
    %p131 = scmp.ne.s32.totalorder %s116, %s130
    %p132 = scmp.eq.s32.totalorder %s24, 0
    %p133 = por %p131, %p132
    %s135 = sadd.s32 %s134, 1
    %p138 = scmp.eq.s32.totalorder %s18, 1
    %p139 = scmp.ne.s32.totalorder %s134, %s136
    %p140 = scmp.eq.s32.totalorder %s18, 0
    %p141 = por %p139, %p140
    %p142 = scmp.ne.s32.totalorder %s134, %s136
    %p143 = scmp.eq.s32.totalorder %s23, 1
    %p144 = por %p142, %p143
    %p145 = scmp.ne.s32.totalorder %s136, %s137
    %p146 = scmp.eq.s32.totalorder %s23, 0
    %p147 = por %p145, %p146
    %p148 = scmp.ne.s32.totalorder %s136, %s137
    %p149 = scmp.eq.s32.totalorder %s24, 1
    %p150 = por %p148, %p149
    %p152 = scmp.ne.s32.totalorder %s137, %s151
    %p153 = scmp.eq.s32.totalorder %s24, 0
    %p154 = por %p152, %p153
    %s156 = sadd.s32 %s155, 1
    %p159 = scmp.eq.s32.totalorder %s18, 1
    %p160 = scmp.ne.s32.totalorder %s155, %s157
    %p161 = scmp.eq.s32.totalorder %s18, 0
    %p162 = por %p160, %p161
    %p163 = scmp.ne.s32.totalorder %s155, %s157
    %p164 = scmp.eq.s32.totalorder %s23, 1
    %p165 = por %p163, %p164
    %p166 = scmp.ne.s32.totalorder %s157, %s158
    %p167 = scmp.eq.s32.totalorder %s23, 0
    %p168 = por %p166, %p167
    %p169 = scmp.ne.s32.totalorder %s157, %s158
    %p170 = scmp.eq.s32.totalorder %s24, 1
    %p171 = por %p169, %p170
    %p173 = scmp.ne.s32.totalorder %s158, %s172
    %p174 = scmp.eq.s32.totalorder %s24, 0
    %p175 = por %p173, %p174
    %s177 = sadd.s32 %s176, 1
    %p180 = scmp.eq.s32.totalorder %s18, 1
    %p181 = scmp.ne.s32.totalorder %s176, %s178
    %p182 = scmp.eq.s32.totalorder %s18, 0
    %p183 = por %p181, %p182
    %p184 = scmp.ne.s32.totalorder %s176, %s178
    %p185 = scmp.eq.s32.totalorder %s23, 1
    %p186 = por %p184, %p185
    %p187 = scmp.ne.s32.totalorder %s178, %s179
    %p188 = scmp.eq.s32.totalorder %s23, 0
    %p189 = por %p187, %p188
    %p190 = scmp.ne.s32.totalorder %s178, %s179
    %p191 = scmp.eq.s32.totalorder %s24, 1
    %p192 = por %p190, %p191
    %p194 = scmp.ne.s32.totalorder %s179, %s193
    %p195 = scmp.eq.s32.totalorder %s24, 0
    %p196 = por %p194, %p195
    %s198 = sadd.s32 %s197, 1
    %p201 = scmp.eq.s32.totalorder %s18, 1
    %p202 = scmp.ne.s32.totalorder %s197, %s199
    %p203 = scmp.eq.s32.totalorder %s18, 0
    %p204 = por %p202, %p203
    %p205 = scmp.ne.s32.totalorder %s197, %s199
    %p206 = scmp.eq.s32.totalorder %s23, 1
    %p207 = por %p205, %p206
    %p208 = scmp.ne.s32.totalorder %s199, %s200
    %p209 = scmp.eq.s32.totalorder %s23, 0
    %p210 = por %p208, %p209
    %p211 = scmp.ne.s32.totalorder %s199, %s200
    %p212 = scmp.eq.s32.totalorder %s24, 1
    %p213 = por %p211, %p212
    %p215 = scmp.ne.s32.totalorder %s200, %s214
    %p216 = scmp.eq.s32.totalorder %s24, 0
    %p217 = por %p215, %p216
    %s219 = sadd.s32 %s218, 1
    %p222 = scmp.eq.s32.totalorder %s18, 1
    %p223 = scmp.ne.s32.totalorder %s218, %s220
    %p224 = scmp.eq.s32.totalorder %s18, 0
    %p225 = por %p223, %p224
    %p226 = scmp.ne.s32.totalorder %s218, %s220
    %p227 = scmp.eq.s32.totalorder %s23, 1
    %p228 = por %p226, %p227
    %p229 = scmp.ne.s32.totalorder %s220, %s221
    %p230 = scmp.eq.s32.totalorder %s23, 0
    %p231 = por %p229, %p230
    %p232 = scmp.ne.s32.totalorder %s220, %s221
    %p233 = scmp.eq.s32.totalorder %s24, 1
    %p234 = por %p232, %p233
    %p236 = scmp.ne.s32.totalorder %s221, %s235
    %p237 = scmp.eq.s32.totalorder %s24, 0
    %p238 = por %p236, %p237
    %s240 = sadd.s32 %s239, 1
    %p243 = scmp.eq.s32.totalorder %s18, 1
    %p244 = scmp.ne.s32.totalorder %s239, %s241
    %p245 = scmp.eq.s32.totalorder %s18, 0
    %p246 = por %p244, %p245
    %p247 = scmp.ne.s32.totalorder %s239, %s241
    %p248 = scmp.eq.s32.totalorder %s23, 1
    %p249 = por %p247, %p248
    %p250 = scmp.ne.s32.totalorder %s241, %s242
    %p251 = scmp.eq.s32.totalorder %s23, 0
    %p252 = por %p250, %p251
    %p253 = scmp.ne.s32.totalorder %s241, %s242
    %p254 = scmp.eq.s32.totalorder %s24, 1
    %p255 = por %p253, %p254
    %p257 = scmp.ne.s32.totalorder %s242, %s256
    %p258 = scmp.eq.s32.totalorder %s24, 0
    %p259 = por %p257, %p258
    %s261 = sadd.s32 %s260, 1
    %p264 = scmp.eq.s32.totalorder %s18, 1
    %p265 = scmp.ne.s32.totalorder %s260, %s262
    %p266 = scmp.eq.s32.totalorder %s18, 0
    %p267 = por %p265, %p266
    %p268 = scmp.ne.s32.totalorder %s260, %s262
    %p269 = scmp.eq.s32.totalorder %s23, 1
    %p270 = por %p268, %p269
    %p271 = scmp.ne.s32.totalorder %s262, %s263
    %p272 = scmp.eq.s32.totalorder %s23, 0
    %p273 = por %p271, %p272
    %p274 = scmp.ne.s32.totalorder %s262, %s263
    %p275 = scmp.eq.s32.totalorder %s24, 1
    %p276 = por %p274, %p275
    %p278 = scmp.ne.s32.totalorder %s263, %s277
    %p279 = scmp.eq.s32.totalorder %s24, 0
    %p280 = por %p278, %p279
    %s282 = sadd.s32 %s281, 1
    %p285 = scmp.eq.s32.totalorder %s18, 1
    %p286 = scmp.ne.s32.totalorder %s281, %s283
    %p287 = scmp.eq.s32.totalorder %s18, 0
    %p288 = por %p286, %p287
    %p289 = scmp.ne.s32.totalorder %s281, %s283
    %p290 = scmp.eq.s32.totalorder %s23, 1
    %p291 = por %p289, %p290
    %p292 = scmp.ne.s32.totalorder %s283, %s284
    %p293 = scmp.eq.s32.totalorder %s23, 0
    %p294 = por %p292, %p293
    %p295 = scmp.ne.s32.totalorder %s283, %s284
    %p296 = scmp.eq.s32.totalorder %s24, 1
    %p297 = por %p295, %p296
    %p299 = scmp.ne.s32.totalorder %s284, %s298
    %p300 = scmp.eq.s32.totalorder %s24, 0
    %p301 = por %p299, %p300
    %s302 = ssub.s32 %s25, %s37
    %s303 = ssub.s32 %s26, %s33
    %s304 = sor.u32 %s302, %s303
    %p305 = scmp.eq.s32.totalorder %s304, 0
    %s307 = sadd.s32 %s306, 1
    %s308 = scalar_select %p305, %s306, %s307
    %p311 = pneg %p305
    %p312 = scmp.eq.s32.totalorder %s18, 1
    %p313 = por %p311, %p312
    %p314 = scmp.ne.s32.totalorder %s306, %s309
    %p315 = scmp.eq.s32.totalorder %s18, 0
    %p316 = por %p314, %p315
    %p317 = scmp.ne.s32.totalorder %s306, %s309
    %p318 = scmp.eq.s32.totalorder %s23, 1
    %p319 = por %p317, %p318
    %p320 = scmp.ne.s32.totalorder %s309, %s310
    %p321 = scmp.eq.s32.totalorder %s23, 0
    %p322 = por %p320, %p321
    %p323 = scmp.ne.s32.totalorder %s309, %s310
    %p324 = scmp.eq.s32.totalorder %s24, 1
    %p325 = por %p323, %p324
    %p327 = scmp.ne.s32.totalorder %s310, %s326
    %p328 = scmp.eq.s32.totalorder %s24, 0
    %p329 = por %p327, %p328
    %p330 = scmp.le.s32.totalorder 1, %s18
    %p331 = scmp.lt.s32.totalorder %s18, 3
    %p332 = pnand %p330, %p331
    %p333 = pneg %p332
    // Predicated region
    $region9: #{stellar_transformer_forward.9} parent=5 // pred_check
      _
    $region10: #{stellar_transformer_forward.9} parent=5 // pred_check_branch
      %335 = sbr.rel (%p332) target = $region12
    $region11: #{stellar_transformer_forward.9} parent=5 // pred_region
      %s336 = ssub.s32 %s18, 1
      // Predicated region
      $region13: #{stellar_transformer_forward.9} parent=11 // pred_check
        %p337 = pneg %p105
      $region14: #{stellar_transformer_forward.9} parent=11 // pred_check_branch
        %339 = sbr.rel (%p337) target = $region16
      $region15: #{stellar_transformer_forward.9} parent=11 // pred_region
        _
      $region16: #{stellar_transformer_forward.9} parent=11 // pred_fallthru
        _
      // Predicated region
      $region17: #{stellar_transformer_forward.9} parent=11 // pred_check
        %p340 = pneg %p126
      $region18: #{stellar_transformer_forward.9} parent=11 // pred_check_branch
        %342 = sbr.rel (%p340) target = $region20
      $region19: #{stellar_transformer_forward.9} parent=11 // pred_region
        _
      $region20: #{stellar_transformer_forward.9} parent=11 // pred_fallthru
        _
      // Predicated region
      $region21: #{stellar_transformer_forward.9} parent=11 // pred_check
        %p343 = pneg %p147
      $region22: #{stellar_transformer_forward.9} parent=11 // pred_check_branch
        %345 = sbr.rel (%p343) target = $region24
      $region23: #{stellar_transformer_forward.9} parent=11 // pred_region
        _
      $region24: #{stellar_transformer_forward.9} parent=11 // pred_fallthru
        _
      // Predicated region
      $region25: #{stellar_transformer_forward.9} parent=11 // pred_check
        %p346 = pneg %p168
      $region26: #{stellar_transformer_forward.9} parent=11 // pred_check_branch
        %348 = sbr.rel (%p346) target = $region28
      $region27: #{stellar_transformer_forward.9} parent=11 // pred_region
        _
      $region28: #{stellar_transformer_forward.9} parent=11 // pred_fallthru
        _
      // Predicated region
      $region29: #{stellar_transformer_forward.9} parent=11 // pred_check
        %p349 = pneg %p189
      $region30: #{stellar_transformer_forward.9} parent=11 // pred_check_branch
        %351 = sbr.rel (%p349) target = $region32
      $region31: #{stellar_transformer_forward.9} parent=11 // pred_region
        _
      $region32: #{stellar_transformer_forward.9} parent=11 // pred_fallthru
        _
      // Predicated region
      $region33: #{stellar_transformer_forward.9} parent=11 // pred_check
        %p352 = pneg %p210
      $region34: #{stellar_transformer_forward.9} parent=11 // pred_check_branch
        %354 = sbr.rel (%p352) target = $region36
      $region35: #{stellar_transformer_forward.9} parent=11 // pred_region
        _
      $region36: #{stellar_transformer_forward.9} parent=11 // pred_fallthru
        _
      // Predicated region
      $region37: #{stellar_transformer_forward.9} parent=11 // pred_check
        %p355 = pneg %p231
      $region38: #{stellar_transformer_forward.9} parent=11 // pred_check_branch
        %357 = sbr.rel (%p355) target = $region40
      $region39: #{stellar_transformer_forward.9} parent=11 // pred_region
        _
      $region40: #{stellar_transformer_forward.9} parent=11 // pred_fallthru
        _
      // Predicated region
      $region41: #{stellar_transformer_forward.9} parent=11 // pred_check
        %p358 = pneg %p252
      $region42: #{stellar_transformer_forward.9} parent=11 // pred_check_branch
        %360 = sbr.rel (%p358) target = $region44
      $region43: #{stellar_transformer_forward.9} parent=11 // pred_region
        _
      $region44: #{stellar_transformer_forward.9} parent=11 // pred_fallthru
        _
      // Predicated region
      $region45: #{stellar_transformer_forward.9} parent=11 // pred_check
        %p361 = pneg %p273
      $region46: #{stellar_transformer_forward.9} parent=11 // pred_check_branch
        %363 = sbr.rel (%p361) target = $region48
      $region47: #{stellar_transformer_forward.9} parent=11 // pred_region
        _
      $region48: #{stellar_transformer_forward.9} parent=11 // pred_fallthru
        _
      // Predicated region
      $region49: #{stellar_transformer_forward.9} parent=11 // pred_check
        %p364 = pneg %p294
      $region50: #{stellar_transformer_forward.9} parent=11 // pred_check_branch
        %366 = sbr.rel (%p364) target = $region52
      $region51: #{stellar_transformer_forward.9} parent=11 // pred_region
        _
      $region52: #{stellar_transformer_forward.9} parent=11 // pred_fallthru
        _
    $region12: #{stellar_transformer_forward.9} parent=5 // pred_fallthru
      _
    %p367 = scmp.lt.s32.totalorder %s18, 2
    // Predicated region
    $region53: #{stellar_transformer_forward.9} parent=5 // pred_check
      %p368 = pneg %p367
    $region54: #{stellar_transformer_forward.9} parent=5 // pred_check_branch
      %370 = sbr.rel (%p368) target = $region56
    $region55: #{stellar_transformer_forward.9} parent=5 // pred_region
      // Predicated region
      $region57: #{stellar_transformer_forward.9} parent=55 // pred_check
        %p371 = pneg %p52
      $region58: #{stellar_transformer_forward.9} parent=55 // pred_check_branch
        %373 = sbr.rel (%p371) target = $region60
      $region59: #{stellar_transformer_forward.9} parent=55 // pred_region
        %p374 = scmp.lt.s32.totalorder %s25, 1
        %s375 = scalar_select %p374, %s25, 1
        %p376 = scmp.lt.s32.totalorder %s26, 0
        %s377 = scalar_select %p376, %s26, 0
        %s378 = sadd.s32 %s377, %s375
        %s379 = smul.addr %s378, 8
        %s380 = scalar_lea.vmem %s0, %s379
      $region60: #{stellar_transformer_forward.9} parent=55 // pred_fallthru
        _
      // Predicated region
      $region61: #{stellar_transformer_forward.9} parent=55 // pred_check
        %p381 = pneg %p78
      $region62: #{stellar_transformer_forward.9} parent=55 // pred_check_branch
        %383 = sbr.rel (%p381) target = $region64
      $region63: #{stellar_transformer_forward.9} parent=55 // pred_region
        %p384 = scmp.lt.s32.totalorder %s25, 1
        %s385 = scalar_select %p384, %s25, 1
        %s386 = smul.addr %s385, 8
        %s387 = scalar_lea.vmem %s1, %s386
      $region64: #{stellar_transformer_forward.9} parent=55 // pred_fallthru
        _
    $region56: #{stellar_transformer_forward.9} parent=5 // pred_fallthru
      _
    %p388 = scmp.le.s32.totalorder 1, %s18
    %p389 = scmp.lt.s32.totalorder %s18, 3
    %p390 = pnand %p388, %p389
    %p391 = pneg %p390
    // Predicated region
    $region65: #{stellar_transformer_forward.9} parent=5 // pred_check
      _
    $region66: #{stellar_transformer_forward.9} parent=5 // pred_check_branch
      %393 = sbr.rel (%p390) target = $region68
    $region67: #{stellar_transformer_forward.9} parent=5 // pred_region
      %s394 = ssub.s32 %s18, 1
      %p395 = scmp.lt.s32.totalorder %s27, 1
      %s396 = scalar_select %p395, %s27, 1
      %p397 = scmp.lt.s32.totalorder %s28, 0
      %s398 = scalar_select %p397, %s28, 0
      %s399 = sadd.s32 %s398, %s396
      %s400 = smul.addr %s399, 8
      %s401 = scalar_lea.vmem %s0, %s400
      %p402 = pneg %p58
      %p403 = pneg %p55
      %p404 = scmp.lt.s32.totalorder %s27, 1
      %s405 = scalar_select %p404, %s27, 1
      %s406 = smul.addr %s405, 8
      %s407 = scalar_lea.vmem %s1, %s406
      %p408 = pneg %p84
      %p409 = pneg %p81
      %p410 = pneg %p105
      %p411 = pneg %p102
      %p412 = pneg %p126
      %p413 = pneg %p123
      %p414 = pneg %p147
      %p415 = pneg %p144
      %p416 = pneg %p168
      %p417 = pneg %p165
      %p418 = pneg %p189
      %p419 = pneg %p186
      %p420 = pneg %p210
      %p421 = pneg %p207
      %p422 = pneg %p231
      %p423 = pneg %p228
      %p424 = pneg %p252
      %p425 = pneg %p249
      %p426 = pneg %p273
      %p427 = pneg %p270
      %p428 = pneg %p294
      %p429 = pneg %p291
      %p430 = pneg %p322
      %p431 = pneg %p319
      %p432 = scmp.lt.s32.totalorder %s27, 1
      %s433 = scalar_select %p432, %s27, 1
      %p434 = scmp.lt.s32.totalorder %s28, 0
      %s435 = scalar_select %p434, %s28, 0
      %s436 = sadd.s32 %s435, %s433
      %s437 = smul.addr %s436, 8
      %s438 = scalar_lea.vmem %s12, %s437
      %p439 = scmp.lt.s32.totalorder %s27, 1
      %s440 = scalar_select %p439, %s27, 1
      %p441 = scmp.lt.s32.totalorder %s28, 0
      %s442 = scalar_select %p441, %s28, 0
      %s443 = sadd.s32 %s442, %s440
      %s444 = smul.addr %s443, 8
      %s445 = scalar_lea.vmem %s0, %s444
      %p446 = scmp.lt.s32.totalorder %s27, 1
      %s447 = scalar_select %p446, %s27, 1
      %s448 = smul.addr %s447, 8
      %s449 = scalar_lea.vmem %s1, %s448
      %p450 = scmp.lt.s32.totalorder %s27, 1
      %s451 = scalar_select %p450, %s27, 1
      %p452 = scmp.lt.s32.totalorder %s28, 0
      %s453 = scalar_select %p452, %s28, 0
      %s454 = sadd.s32 %s453, %s451
      %s455 = smul.addr %s454, 8
      %s456 = scalar_lea.vmem %s12, %s455
      %v458 = vld [vmem:[%s445] sm:$0xff]
      %v459 = vld [vmem:[%s449] sm:$0xff]
      %v460 = vpack.c.bf16 %v458, %v458
      %v461 = vpack.c.bf16 %v459, %v459
      %v462 = vld [vmem:[%s9] sm:$0x1]
      %v464 = vlaneseq
      %v465 = vshrl.u32 %v464, 7
      %v466 = vsub.s32 0, %v465
      %v467 = vrot.slane %v462, %v466
      %v469 = vadd.f32 %v458, %v467
      %v470 = vld [vmem:[%s2] sm:$0xf]
      %v471 = vld [vmem:[%s2 + $0x4] sm:$0xf]
      %v472 = vld [vmem:[%s2 + $0x8] sm:$0xf]
      %v473 = vld [vmem:[%s2 + $0xc] sm:$0xf]
      %v474 = vld [vmem:[%s2 + $0x10] sm:$0xf]
      %v475 = vld [vmem:[%s2 + $0x14] sm:$0xf]
      %v476 = vld [vmem:[%s2 + $0x18] sm:$0xf]
      %v477 = vld [vmem:[%s2 + $0x1c] sm:$0xf]
      %v478 = vld [vmem:[%s3] sm:$0x1]
      %v480 = vlaneseq
      %v481 = vshrl.u32 %v480, 7
      %v482 = vsub.s32 0, %v481
      %v483 = vrot.slane %v478, %v482
      %v493 = vunpack.c.l.b16 %v470
      %v494 = vunpack.c.l.b16 %v471
      %v495 = vunpack.c.l.b16 %v472
      %v496 = vunpack.c.l.b16 %v473
      %v497 = vunpack.c.l.b16 %v474
      %v498 = vunpack.c.l.b16 %v475
      %v499 = vunpack.c.l.b16 %v476
      %v500 = vunpack.c.l.b16 %v477
      %v501 = vpack.c.b16 %v494, %v493
      %v502 = vpack.c.b16 %v496, %v495
      %v503 = vpack.c.b16 %v498, %v497
      %v504 = vpack.c.b16 %v500, %v499
      %vm509 = vcmask 523264
      %v511 = vsel %vm509, %v460, 0
      %513 = vmatprep.subr.bf16.mxu0 0
      %514 = vmatpush1.bf16.msra.mxu0 %v501
      %515 = vmatprep.subr.bf16.mxu0 0
      %516 = vmatpush1.bf16.msra.mxu0 %v502
      %517 = vmatprep.subr.bf16.mxu0 0
      %518 = vmatpush1.bf16.msra.mxu0 %v503
      %519 = vmatprep.subr.bf16.mxu0 0
      %520 = vmatpush1.bf16.msra.mxu0 %v504
      %521 = vmatprep.subr.bf16.mxu0 0
      %522 = vmatpush1.bf16.msra.mxu0 0
      %523 = vmatprep.subr.bf16.mxu0 0
      %524 = vmatpush1.bf16.msra.mxu0 0
      %525 = vmatprep.subr.bf16.mxu0 0
      %526 = vmatpush1.bf16.msra.mxu0 0
      %527 = vmatprep.subr.bf16.mxu0 0
      %528 = vmatpush1.bf16.msra.mxu0 0
      %529 = vmatprep.subr.bf16.mxu0 0
      %530 = vmatpush1.bf16.msra.mxu0 0
      %531 = vmatprep.subr.bf16.mxu0 0
      %532 = vmatpush1.bf16.msra.mxu0 0
      %533 = vmatprep.subr.bf16.mxu0 0
      %534 = vmatpush1.bf16.msra.mxu0 0
      %535 = vmatprep.subr.bf16.mxu0 0
      %536 = vmatpush1.bf16.msra.mxu0 0
      %537 = vmatprep.subr.bf16.mxu0 0
      %538 = vmatpush1.bf16.msra.mxu0 0
      %539 = vmatprep.subr.bf16.mxu0 0
      %540 = vmatpush1.bf16.msra.mxu0 0
      %541 = vmatprep.subr.bf16.mxu0 0
      %542 = vmatpush1.bf16.msra.mxu0 0
      %543 = vmatprep.subr.bf16.mxu0 0
      %544 = vmatpush1.bf16.msra.mxu0 0
      %545 = vmatprep.mubr.bf16.mxu0 0
      %546 = vmatmul.mubr.bf16.gmra.mrb[0].mxu0 %v511
      %v547 = vpop.f32.mrb[0].mxu0
      %v548 = vadd.f32 %v483, %v547
      %v549 = vpop.f32.mrb[0].mxu0
      %v550 = vpop.f32.mrb[0].mxu0
      %v551 = vpop.f32.mrb[0].mxu0
      %552 = vdwg.mxu0
      %v553 = vld [vmem:[%s4] sm:$0xf]
      %v554 = vld [vmem:[%s4 + $0x4] sm:$0xf]
      %v555 = vld [vmem:[%s4 + $0x8] sm:$0xf]
      %v556 = vld [vmem:[%s4 + $0xc] sm:$0xf]
      %v557 = vld [vmem:[%s4 + $0x10] sm:$0xf]
      %v558 = vld [vmem:[%s4 + $0x14] sm:$0xf]
      %v559 = vld [vmem:[%s4 + $0x18] sm:$0xf]
      %v560 = vld [vmem:[%s4 + $0x1c] sm:$0xf]
      %v561 = vld [vmem:[%s5] sm:$0x1]
      %v563 = vlaneseq
      %v564 = vshrl.u32 %v563, 7
      %v565 = vsub.s32 0, %v564
      %v566 = vrot.slane %v561, %v565
      %v576 = vunpack.c.l.b16 %v553
      %v577 = vunpack.c.l.b16 %v554
      %v578 = vunpack.c.l.b16 %v555
      %v579 = vunpack.c.l.b16 %v556
      %v580 = vunpack.c.l.b16 %v557
      %v581 = vunpack.c.l.b16 %v558
      %v582 = vunpack.c.l.b16 %v559
      %v583 = vunpack.c.l.b16 %v560
      %v584 = vpack.c.b16 %v577, %v576
      %v585 = vpack.c.b16 %v579, %v578
      %v586 = vpack.c.b16 %v581, %v580
      %v587 = vpack.c.b16 %v583, %v582
      %v593 = vsel %vm509, %v461, 0
      %595 = vmatprep.subr.bf16.mxu0 0
      %596 = vmatpush1.bf16.msra.mxu0 %v584
      %597 = vmatprep.subr.bf16.mxu0 0
      %598 = vmatpush1.bf16.msra.mxu0 %v585
      %599 = vmatprep.subr.bf16.mxu0 0
      %600 = vmatpush1.bf16.msra.mxu0 %v586
      %601 = vmatprep.subr.bf16.mxu0 0
      %602 = vmatpush1.bf16.msra.mxu0 %v587
      %603 = vmatprep.subr.bf16.mxu0 0
      %604 = vmatpush1.bf16.msra.mxu0 0
      %605 = vmatprep.subr.bf16.mxu0 0
      %606 = vmatpush1.bf16.msra.mxu0 0
      %607 = vmatprep.subr.bf16.mxu0 0
      %608 = vmatpush1.bf16.msra.mxu0 0
      %609 = vmatprep.subr.bf16.mxu0 0
      %610 = vmatpush1.bf16.msra.mxu0 0
      %611 = vmatprep.subr.bf16.mxu0 0
      %612 = vmatpush1.bf16.msra.mxu0 0
      %613 = vmatprep.subr.bf16.mxu0 0
      %614 = vmatpush1.bf16.msra.mxu0 0
      %615 = vmatprep.subr.bf16.mxu0 0
      %616 = vmatpush1.bf16.msra.mxu0 0
      %617 = vmatprep.subr.bf16.mxu0 0
      %618 = vmatpush1.bf16.msra.mxu0 0
      %619 = vmatprep.subr.bf16.mxu0 0
      %620 = vmatpush1.bf16.msra.mxu0 0
      %621 = vmatprep.subr.bf16.mxu0 0
      %622 = vmatpush1.bf16.msra.mxu0 0
      %623 = vmatprep.subr.bf16.mxu0 0
      %624 = vmatpush1.bf16.msra.mxu0 0
      %625 = vmatprep.subr.bf16.mxu0 0
      %626 = vmatpush1.bf16.msra.mxu0 0
      %627 = vmatprep.mubr.bf16.mxu0 0
      %628 = vmatmul.mubr.bf16.gmra.mrb[0].mxu0 %v593
      %v629 = vpop.f32.mrb[0].mxu0
      %v630 = vadd.f32 %v566, %v629
      %v631 = vpop.f32.mrb[0].mxu0
      %v632 = vpop.f32.mrb[0].mxu0
      %v633 = vpop.f32.mrb[0].mxu0
      %634 = vdwg.mxu0
      %v635 = vld [vmem:[%s6] sm:$0xf]
      %v636 = vld [vmem:[%s6 + $0x4] sm:$0xf]
      %v637 = vld [vmem:[%s6 + $0x8] sm:$0xf]
      %v638 = vld [vmem:[%s6 + $0xc] sm:$0xf]
      %v639 = vld [vmem:[%s6 + $0x10] sm:$0xf]
      %v640 = vld [vmem:[%s6 + $0x14] sm:$0xf]
      %v641 = vld [vmem:[%s6 + $0x18] sm:$0xf]
      %v642 = vld [vmem:[%s6 + $0x1c] sm:$0xf]
      %v643 = vld [vmem:[%s7] sm:$0x1]
      %v645 = vlaneseq
      %v646 = vshrl.u32 %v645, 7
      %v647 = vsub.s32 0, %v646
      %v648 = vrot.slane %v643, %v647
      %v658 = vunpack.c.l.b16 %v635
      %v659 = vunpack.c.l.b16 %v636
      %v660 = vunpack.c.l.b16 %v637
      %v661 = vunpack.c.l.b16 %v638
      %v662 = vunpack.c.l.b16 %v639
      %v663 = vunpack.c.l.b16 %v640
      %v664 = vunpack.c.l.b16 %v641
      %v665 = vunpack.c.l.b16 %v642
      %v666 = vpack.c.b16 %v659, %v658
      %v667 = vpack.c.b16 %v661, %v660
      %v668 = vpack.c.b16 %v663, %v662
      %v669 = vpack.c.b16 %v665, %v664
      %674 = vmatprep.subr.bf16.mxu0 0
      %675 = vmatpush1.bf16.msra.mxu0 %v666
      %676 = vmatprep.subr.bf16.mxu0 0
      %677 = vmatpush1.bf16.msra.mxu0 %v667
      %678 = vmatprep.subr.bf16.mxu0 0
      %679 = vmatpush1.bf16.msra.mxu0 %v668
      %680 = vmatprep.subr.bf16.mxu0 0
      %681 = vmatpush1.bf16.msra.mxu0 %v669
      %682 = vmatprep.subr.bf16.mxu0 0
      %683 = vmatpush1.bf16.msra.mxu0 0
      %684 = vmatprep.subr.bf16.mxu0 0
      %685 = vmatpush1.bf16.msra.mxu0 0
      %686 = vmatprep.subr.bf16.mxu0 0
      %687 = vmatpush1.bf16.msra.mxu0 0
      %688 = vmatprep.subr.bf16.mxu0 0
      %689 = vmatpush1.bf16.msra.mxu0 0
      %690 = vmatprep.subr.bf16.mxu0 0
      %691 = vmatpush1.bf16.msra.mxu0 0
      %692 = vmatprep.subr.bf16.mxu0 0
      %693 = vmatpush1.bf16.msra.mxu0 0
      %694 = vmatprep.subr.bf16.mxu0 0
      %695 = vmatpush1.bf16.msra.mxu0 0
      %696 = vmatprep.subr.bf16.mxu0 0
      %697 = vmatpush1.bf16.msra.mxu0 0
      %698 = vmatprep.subr.bf16.mxu0 0
      %699 = vmatpush1.bf16.msra.mxu0 0
      %700 = vmatprep.subr.bf16.mxu0 0
      %701 = vmatpush1.bf16.msra.mxu0 0
      %702 = vmatprep.subr.bf16.mxu0 0
      %703 = vmatpush1.bf16.msra.mxu0 0
      %704 = vmatprep.subr.bf16.mxu0 0
      %705 = vmatpush1.bf16.msra.mxu0 0
      %706 = vmatprep.mubr.bf16.mxu0 0
      %707 = vmatmul.mubr.bf16.gmra.mrb[0].mxu0 %v593
      %v708 = vpop.f32.mrb[0].mxu0
      %v709 = vadd.f32 %v648, %v708
      %v710 = vpop.f32.mrb[0].mxu0
      %v711 = vpop.f32.mrb[0].mxu0
      %v712 = vpop.f32.mrb[0].mxu0
      %713 = vdwg.mxu0
      %v714 = vpack.c.bf16 %v548, %v548
      %v715 = vpack.c.bf16 %v630, %v630
      %vm716 = vcmask 64512
      %v718 = vsel %vm716, %v714, 0
      %v721 = vsel %vm716, %v715, 0
      %723 = vmatprep.subr.bf16.mxu0 0
      %724 = vmatpush1.bf16.xpose.msra.mxu0 %v721
      %725 = vmatprep.subr.bf16.mxu0 0
      %726 = vmatpush1.bf16.xpose.msra.mxu0 0
      %727 = vmatprep.subr.bf16.mxu0 0
      %728 = vmatpush1.bf16.xpose.msra.mxu0 0
      %729 = vmatprep.subr.bf16.mxu0 0
      %730 = vmatpush1.bf16.xpose.msra.mxu0 0
      %731 = vmatprep.subr.bf16.mxu0 0
      %732 = vmatpush1.bf16.xpose.msra.mxu0 0
      %733 = vmatprep.subr.bf16.mxu0 0
      %734 = vmatpush1.bf16.xpose.msra.mxu0 0
      %735 = vmatprep.subr.bf16.mxu0 0
      %736 = vmatpush1.bf16.xpose.msra.mxu0 0
      %737 = vmatprep.subr.bf16.mxu0 0
      %738 = vmatpush1.bf16.xpose.msra.mxu0 0
      %739 = vmatprep.subr.bf16.mxu0 0
      %740 = vmatpush1.bf16.xpose.msra.mxu0 0
      %741 = vmatprep.subr.bf16.mxu0 0
      %742 = vmatpush1.bf16.xpose.msra.mxu0 0
      %743 = vmatprep.subr.bf16.mxu0 0
      %744 = vmatpush1.bf16.xpose.msra.mxu0 0
      %745 = vmatprep.subr.bf16.mxu0 0
      %746 = vmatpush1.bf16.xpose.msra.mxu0 0
      %747 = vmatprep.subr.bf16.mxu0 0
      %748 = vmatpush1.bf16.xpose.msra.mxu0 0
      %749 = vmatprep.subr.bf16.mxu0 0
      %750 = vmatpush1.bf16.xpose.msra.mxu0 0
      %751 = vmatprep.subr.bf16.mxu0 0
      %752 = vmatpush1.bf16.xpose.msra.mxu0 0
      %753 = vmatprep.subr.bf16.mxu0 0
      %754 = vmatpush1.bf16.xpose.msra.mxu0 0
      %755 = vmatprep.mubr.bf16.mxu0 0
      %756 = vmatmul.mubr.bf16.gmra.mrb[0].mxu0 %v718
      %v757 = vpop.f32.mrb[0].mxu0
      %v758 = vadd.f32 0.0, %v757
      %v759 = vpop.f32.mrb[0].mxu0
      %v760 = vpop.f32.mrb[0].mxu0
      %v761 = vpop.f32.mrb[0].mxu0
      %762 = vdwg.mxu0
      %v763 = vmul.f32 %v758, 0.35355338
      %v764 = vsel %vm716, %v763, -inf
      %765 = vmax.xlane.f32.xlu0 %v764
      %v766 = vpop.xlane.xlu0 %765
      %v767 = vsub.f32 %v763, %v766
      %v768 = vmul.f32 %v767, 1.442695
      %v769 = vpow.pop %v768
      %v770 = vsel %vm716, %v769, 0.0
      %771 = vadd.xlane.f32.xlu0 %v770
      %v772 = vpop.xlane.xlu0 %771
      %v773 = vrcp.pop %v772
      %v774 = vmul.f32 %v769, %v773
      %v775 = vpack.c.bf16 %v774, %v774
      %v776 = vpack.c.bf16 %v709, %v709
      %v778 = vsel %vm716, %v775, 0
      %vm780 = vcmask 1043456
      %v782 = vsel %vm780, %v776, 0
      %784 = vmatprep.subr.bf16.mxu0 0
      %785 = vmatpush1.bf16.msra.mxu0 %v782
      %786 = vmatprep.subr.bf16.mxu0 0
      %787 = vmatpush1.bf16.msra.mxu0 0
      %788 = vmatprep.subr.bf16.mxu0 0
      %789 = vmatpush1.bf16.msra.mxu0 0
      %790 = vmatprep.subr.bf16.mxu0 0
      %791 = vmatpush1.bf16.msra.mxu0 0
      %792 = vmatprep.subr.bf16.mxu0 0
      %793 = vmatpush1.bf16.msra.mxu0 0
      %794 = vmatprep.subr.bf16.mxu0 0
      %795 = vmatpush1.bf16.msra.mxu0 0
      %796 = vmatprep.subr.bf16.mxu0 0
      %797 = vmatpush1.bf16.msra.mxu0 0
      %798 = vmatprep.subr.bf16.mxu0 0
      %799 = vmatpush1.bf16.msra.mxu0 0
      %800 = vmatprep.subr.bf16.mxu0 0
      %801 = vmatpush1.bf16.msra.mxu0 0
      %802 = vmatprep.subr.bf16.mxu0 0
      %803 = vmatpush1.bf16.msra.mxu0 0
      %804 = vmatprep.subr.bf16.mxu0 0
      %805 = vmatpush1.bf16.msra.mxu0 0
      %806 = vmatprep.subr.bf16.mxu0 0
      %807 = vmatpush1.bf16.msra.mxu0 0
      %808 = vmatprep.subr.bf16.mxu0 0
      %809 = vmatpush1.bf16.msra.mxu0 0
      %810 = vmatprep.subr.bf16.mxu0 0
      %811 = vmatpush1.bf16.msra.mxu0 0
      %812 = vmatprep.subr.bf16.mxu0 0
      %813 = vmatpush1.bf16.msra.mxu0 0
      %814 = vmatprep.subr.bf16.mxu0 0
      %815 = vmatpush1.bf16.msra.mxu0 0
      %816 = vmatprep.mubr.bf16.mxu0 0
      %817 = vmatmul.mubr.bf16.gmra.mrb[0].mxu0 %v778
      %v818 = vpop.f32.mrb[0].mxu0
      %v819 = vadd.f32 0.0, %v818
      %v820 = vpop.f32.mrb[0].mxu0
      %v821 = vpop.f32.mrb[0].mxu0
      %v822 = vpop.f32.mrb[0].mxu0
      %823 = vdwg.mxu0
      %v824 = vpack.c.bf16 %v819, %v819
      %v825 = vld [vmem:[%s8] sm:$0xf]
      %v827 = vsel %vm716, %v824, 0
      %v830 = vsel %vm780, %v825, 0
      %832 = vmatprep.subr.bf16.mxu0 0
      %833 = vmatpush1.bf16.msra.mxu0 %v830
      %834 = vmatprep.subr.bf16.mxu0 0
      %835 = vmatpush1.bf16.msra.mxu0 0
      %836 = vmatprep.subr.bf16.mxu0 0
      %837 = vmatpush1.bf16.msra.mxu0 0
      %838 = vmatprep.subr.bf16.mxu0 0
      %839 = vmatpush1.bf16.msra.mxu0 0
      %840 = vmatprep.subr.bf16.mxu0 0
      %841 = vmatpush1.bf16.msra.mxu0 0
      %842 = vmatprep.subr.bf16.mxu0 0
      %843 = vmatpush1.bf16.msra.mxu0 0
      %844 = vmatprep.subr.bf16.mxu0 0
      %845 = vmatpush1.bf16.msra.mxu0 0
      %846 = vmatprep.subr.bf16.mxu0 0
      %847 = vmatpush1.bf16.msra.mxu0 0
      %848 = vmatprep.subr.bf16.mxu0 0
      %849 = vmatpush1.bf16.msra.mxu0 0
      %850 = vmatprep.subr.bf16.mxu0 0
      %851 = vmatpush1.bf16.msra.mxu0 0
      %852 = vmatprep.subr.bf16.mxu0 0
      %853 = vmatpush1.bf16.msra.mxu0 0
      %854 = vmatprep.subr.bf16.mxu0 0
      %855 = vmatpush1.bf16.msra.mxu0 0
      %856 = vmatprep.subr.bf16.mxu0 0
      %857 = vmatpush1.bf16.msra.mxu0 0
      %858 = vmatprep.subr.bf16.mxu0 0
      %859 = vmatpush1.bf16.msra.mxu0 0
      %860 = vmatprep.subr.bf16.mxu0 0
      %861 = vmatpush1.bf16.msra.mxu0 0
      %862 = vmatprep.subr.bf16.mxu0 0
      %863 = vmatpush1.bf16.msra.mxu0 0
      %864 = vmatprep.mubr.bf16.mxu0 0
      %865 = vmatmul.mubr.bf16.gmra.mrb[0].mxu0 %v827
      %v866 = vpop.f32.mrb[0].mxu0
      %v867 = vadd.f32 0.0, %v866
      %v868 = vpop.f32.mrb[0].mxu0
      %v869 = vpop.f32.mrb[0].mxu0
      %v870 = vpop.f32.mrb[0].mxu0
      %871 = vdwg.mxu0
      %v872 = vadd.f32 %v469, %v867
      %s873 = scalar_lea.vmem %s2, 32
      %v874 = vld [vmem:[%s873] sm:$0xf]
      %v875 = vld [vmem:[%s873 + $0x4] sm:$0xf]
      %v876 = vld [vmem:[%s873 + $0x8] sm:$0xf]
      %v877 = vld [vmem:[%s873 + $0xc] sm:$0xf]
      %v878 = vld [vmem:[%s873 + $0x10] sm:$0xf]
      %v879 = vld [vmem:[%s873 + $0x14] sm:$0xf]
      %v880 = vld [vmem:[%s873 + $0x18] sm:$0xf]
      %v881 = vld [vmem:[%s873 + $0x1c] sm:$0xf]
      %s882 = scalar_lea.vmem %s3, 1
      %v883 = vld [vmem:[%s882] sm:$0x1]
      %v885 = vlaneseq
      %v886 = vshrl.u32 %v885, 7
      %v887 = vsub.s32 0, %v886
      %v888 = vrot.slane %v883, %v887
      %v898 = vunpack.c.l.b16 %v874
      %v899 = vunpack.c.l.b16 %v875
      %v900 = vunpack.c.l.b16 %v876
      %v901 = vunpack.c.l.b16 %v877
      %v902 = vunpack.c.l.b16 %v878
      %v903 = vunpack.c.l.b16 %v879
      %v904 = vunpack.c.l.b16 %v880
      %v905 = vunpack.c.l.b16 %v881
      %v906 = vpack.c.b16 %v899, %v898
      %v907 = vpack.c.b16 %v901, %v900
      %v908 = vpack.c.b16 %v903, %v902
      %v909 = vpack.c.b16 %v905, %v904
      %914 = vmatprep.subr.bf16.mxu0 0
      %915 = vmatpush1.bf16.msra.mxu0 %v906
      %916 = vmatprep.subr.bf16.mxu0 0
      %917 = vmatpush1.bf16.msra.mxu0 %v907
      %918 = vmatprep.subr.bf16.mxu0 0
      %919 = vmatpush1.bf16.msra.mxu0 %v908
      %920 = vmatprep.subr.bf16.mxu0 0
      %921 = vmatpush1.bf16.msra.mxu0 %v909
      %922 = vmatprep.subr.bf16.mxu0 0
      %923 = vmatpush1.bf16.msra.mxu0 0
      %924 = vmatprep.subr.bf16.mxu0 0
      %925 = vmatpush1.bf16.msra.mxu0 0
      %926 = vmatprep.subr.bf16.mxu0 0
      %927 = vmatpush1.bf16.msra.mxu0 0
      %928 = vmatprep.subr.bf16.mxu0 0
      %929 = vmatpush1.bf16.msra.mxu0 0
      %930 = vmatprep.subr.bf16.mxu0 0
      %931 = vmatpush1.bf16.msra.mxu0 0
      %932 = vmatprep.subr.bf16.mxu0 0
      %933 = vmatpush1.bf16.msra.mxu0 0
      %934 = vmatprep.subr.bf16.mxu0 0
      %935 = vmatpush1.bf16.msra.mxu0 0
      %936 = vmatprep.subr.bf16.mxu0 0
      %937 = vmatpush1.bf16.msra.mxu0 0
      %938 = vmatprep.subr.bf16.mxu0 0
      %939 = vmatpush1.bf16.msra.mxu0 0
      %940 = vmatprep.subr.bf16.mxu0 0
      %941 = vmatpush1.bf16.msra.mxu0 0
      %942 = vmatprep.subr.bf16.mxu0 0
      %943 = vmatpush1.bf16.msra.mxu0 0
      %944 = vmatprep.subr.bf16.mxu0 0
      %945 = vmatpush1.bf16.msra.mxu0 0
      %946 = vmatprep.mubr.bf16.mxu0 0
      %947 = vmatmul.mubr.bf16.gmra.mrb[0].mxu0 %v511
      %v948 = vpop.f32.mrb[0].mxu0
      %v949 = vadd.f32 %v888, %v948
      %v950 = vpop.f32.mrb[0].mxu0
      %v951 = vpop.f32.mrb[0].mxu0
      %v952 = vpop.f32.mrb[0].mxu0
      %953 = vdwg.mxu0
      %s954 = scalar_lea.vmem %s4, 32
      %v955 = vld [vmem:[%s954] sm:$0xf]
      %v956 = vld [vmem:[%s954 + $0x4] sm:$0xf]
      %v957 = vld [vmem:[%s954 + $0x8] sm:$0xf]
      %v958 = vld [vmem:[%s954 + $0xc] sm:$0xf]
      %v959 = vld [vmem:[%s954 + $0x10] sm:$0xf]
      %v960 = vld [vmem:[%s954 + $0x14] sm:$0xf]
      %v961 = vld [vmem:[%s954 + $0x18] sm:$0xf]
      %v962 = vld [vmem:[%s954 + $0x1c] sm:$0xf]
      %s963 = scalar_lea.vmem %s5, 1
      %v964 = vld [vmem:[%s963] sm:$0x1]
      %v966 = vlaneseq
      %v967 = vshrl.u32 %v966, 7
      %v968 = vsub.s32 0, %v967
      %v969 = vrot.slane %v964, %v968
      %v979 = vunpack.c.l.b16 %v955
      %v980 = vunpack.c.l.b16 %v956
      %v981 = vunpack.c.l.b16 %v957
      %v982 = vunpack.c.l.b16 %v958
      %v983 = vunpack.c.l.b16 %v959
      %v984 = vunpack.c.l.b16 %v960
      %v985 = vunpack.c.l.b16 %v961
      %v986 = vunpack.c.l.b16 %v962
      %v987 = vpack.c.b16 %v980, %v979
      %v988 = vpack.c.b16 %v982, %v981
      %v989 = vpack.c.b16 %v984, %v983
      %v990 = vpack.c.b16 %v986, %v985
      %995 = vmatprep.subr.bf16.mxu0 0
      %996 = vmatpush1.bf16.msra.mxu0 %v987
      %997 = vmatprep.subr.bf16.mxu0 0
      %998 = vmatpush1.bf16.msra.mxu0 %v988
      %999 = vmatprep.subr.bf16.mxu0 0
      %1000 = vmatpush1.bf16.msra.mxu0 %v989
      %1001 = vmatprep.subr.bf16.mxu0 0
      %1002 = vmatpush1.bf16.msra.mxu0 %v990
      %1003 = vmatprep.subr.bf16.mxu0 0
      %1004 = vmatpush1.bf16.msra.mxu0 0
      %1005 = vmatprep.subr.bf16.mxu0 0
      %1006 = vmatpush1.bf16.msra.mxu0 0
      %1007 = vmatprep.subr.bf16.mxu0 0
      %1008 = vmatpush1.bf16.msra.mxu0 0
      %1009 = vmatprep.subr.bf16.mxu0 0
      %1010 = vmatpush1.bf16.msra.mxu0 0
      %1011 = vmatprep.subr.bf16.mxu0 0
      %1012 = vmatpush1.bf16.msra.mxu0 0
      %1013 = vmatprep.subr.bf16.mxu0 0
      %1014 = vmatpush1.bf16.msra.mxu0 0
      %1015 = vmatprep.subr.bf16.mxu0 0
      %1016 = vmatpush1.bf16.msra.mxu0 0
      %1017 = vmatprep.subr.bf16.mxu0 0
      %1018 = vmatpush1.bf16.msra.mxu0 0
      %1019 = vmatprep.subr.bf16.mxu0 0
      %1020 = vmatpush1.bf16.msra.mxu0 0
      %1021 = vmatprep.subr.bf16.mxu0 0
      %1022 = vmatpush1.bf16.msra.mxu0 0
      %1023 = vmatprep.subr.bf16.mxu0 0
      %1024 = vmatpush1.bf16.msra.mxu0 0
      %1025 = vmatprep.subr.bf16.mxu0 0
      %1026 = vmatpush1.bf16.msra.mxu0 0
      %1027 = vmatprep.mubr.bf16.mxu0 0
      %1028 = vmatmul.mubr.bf16.gmra.mrb[0].mxu0 %v593
      %v1029 = vpop.f32.mrb[0].mxu0
      %v1030 = vadd.f32 %v969, %v1029
      %v1031 = vpop.f32.mrb[0].mxu0
      %v1032 = vpop.f32.mrb[0].mxu0
      %v1033 = vpop.f32.mrb[0].mxu0
      %1034 = vdwg.mxu0
      %s1035 = scalar_lea.vmem %s6, 32
      %v1036 = vld [vmem:[%s1035] sm:$0xf]
      %v1037 = vld [vmem:[%s1035 + $0x4] sm:$0xf]
      %v1038 = vld [vmem:[%s1035 + $0x8] sm:$0xf]
      %v1039 = vld [vmem:[%s1035 + $0xc] sm:$0xf]
      %v1040 = vld [vmem:[%s1035 + $0x10] sm:$0xf]
      %v1041 = vld [vmem:[%s1035 + $0x14] sm:$0xf]
      %v1042 = vld [vmem:[%s1035 + $0x18] sm:$0xf]
      %v1043 = vld [vmem:[%s1035 + $0x1c] sm:$0xf]
      %s1044 = scalar_lea.vmem %s7, 1
      %v1045 = vld [vmem:[%s1044] sm:$0x1]
      %v1047 = vlaneseq
      %v1048 = vshrl.u32 %v1047, 7
      %v1049 = vsub.s32 0, %v1048
      %v1050 = vrot.slane %v1045, %v1049
      %v1060 = vunpack.c.l.b16 %v1036
      %v1061 = vunpack.c.l.b16 %v1037
      %v1062 = vunpack.c.l.b16 %v1038
      %v1063 = vunpack.c.l.b16 %v1039
      %v1064 = vunpack.c.l.b16 %v1040
      %v1065 = vunpack.c.l.b16 %v1041
      %v1066 = vunpack.c.l.b16 %v1042
      %v1067 = vunpack.c.l.b16 %v1043
      %v1068 = vpack.c.b16 %v1061, %v1060
      %v1069 = vpack.c.b16 %v1063, %v1062
      %v1070 = vpack.c.b16 %v1065, %v1064
      %v1071 = vpack.c.b16 %v1067, %v1066
      %1076 = vmatprep.subr.bf16.mxu0 0
      %1077 = vmatpush1.bf16.msra.mxu0 %v1068
      %1078 = vmatprep.subr.bf16.mxu0 0
      %1079 = vmatpush1.bf16.msra.mxu0 %v1069
      %1080 = vmatprep.subr.bf16.mxu0 0
      %1081 = vmatpush1.bf16.msra.mxu0 %v1070
      %1082 = vmatprep.subr.bf16.mxu0 0
      %1083 = vmatpush1.bf16.msra.mxu0 %v1071
      %1084 = vmatprep.subr.bf16.mxu0 0
      %1085 = vmatpush1.bf16.msra.mxu0 0
      %1086 = vmatprep.subr.bf16.mxu0 0
      %1087 = vmatpush1.bf16.msra.mxu0 0
      %1088 = vmatprep.subr.bf16.mxu0 0
      %1089 = vmatpush1.bf16.msra.mxu0 0
      %1090 = vmatprep.subr.bf16.mxu0 0
      %1091 = vmatpush1.bf16.msra.mxu0 0
      %1092 = vmatprep.subr.bf16.mxu0 0
      %1093 = vmatpush1.bf16.msra.mxu0 0
      %1094 = vmatprep.subr.bf16.mxu0 0
      %1095 = vmatpush1.bf16.msra.mxu0 0
      %1096 = vmatprep.subr.bf16.mxu0 0
      %1097 = vmatpush1.bf16.msra.mxu0 0
      %1098 = vmatprep.subr.bf16.mxu0 0
      %1099 = vmatpush1.bf16.msra.mxu0 0
      %1100 = vmatprep.subr.bf16.mxu0 0
      %1101 = vmatpush1.bf16.msra.mxu0 0
      %1102 = vmatprep.subr.bf16.mxu0 0
      %1103 = vmatpush1.bf16.msra.mxu0 0
      %1104 = vmatprep.subr.bf16.mxu0 0
      %1105 = vmatpush1.bf16.msra.mxu0 0
      %1106 = vmatprep.subr.bf16.mxu0 0
      %1107 = vmatpush1.bf16.msra.mxu0 0
      %1108 = vmatprep.mubr.bf16.mxu0 0
      %1109 = vmatmul.mubr.bf16.gmra.mrb[0].mxu0 %v593
      %v1110 = vpop.f32.mrb[0].mxu0
      %v1111 = vadd.f32 %v1050, %v1110
      %v1112 = vpop.f32.mrb[0].mxu0
      %v1113 = vpop.f32.mrb[0].mxu0
      %v1114 = vpop.f32.mrb[0].mxu0
      %1115 = vdwg.mxu0
      %v1116 = vpack.c.bf16 %v949, %v949
      %v1117 = vpack.c.bf16 %v1030, %v1030
      %v1119 = vsel %vm716, %v1116, 0
      %v1122 = vsel %vm716, %v1117, 0
      %1124 = vmatprep.subr.bf16.mxu0 0
      %1125 = vmatpush1.bf16.xpose.msra.mxu0 %v1122
      %1126 = vmatprep.subr.bf16.mxu0 0
      %1127 = vmatpush1.bf16.xpose.msra.mxu0 0
      %1128 = vmatprep.subr.bf16.mxu0 0
      %1129 = vmatpush1.bf16.xpose.msra.mxu0 0
      %1130 = vmatprep.subr.bf16.mxu0 0
      %1131 = vmatpush1.bf16.xpose.msra.mxu0 0
      %1132 = vmatprep.subr.bf16.mxu0 0
      %1133 = vmatpush1.bf16.xpose.msra.mxu0 0
      %1134 = vmatprep.subr.bf16.mxu0 0
      %1135 = vmatpush1.bf16.xpose.msra.mxu0 0
      %1136 = vmatprep.subr.bf16.mxu0 0
      %1137 = vmatpush1.bf16.xpose.msra.mxu0 0
      %1138 = vmatprep.subr.bf16.mxu0 0
      %1139 = vmatpush1.bf16.xpose.msra.mxu0 0
      %1140 = vmatprep.subr.bf16.mxu0 0
      %1141 = vmatpush1.bf16.xpose.msra.mxu0 0
      %1142 = vmatprep.subr.bf16.mxu0 0
      %1143 = vmatpush1.bf16.xpose.msra.mxu0 0
      %1144 = vmatprep.subr.bf16.mxu0 0
      %1145 = vmatpush1.bf16.xpose.msra.mxu0 0
      %1146 = vmatprep.subr.bf16.mxu0 0
      %1147 = vmatpush1.bf16.xpose.msra.mxu0 0
      %1148 = vmatprep.subr.bf16.mxu0 0
      %1149 = vmatpush1.bf16.xpose.msra.mxu0 0
      %1150 = vmatprep.subr.bf16.mxu0 0
      %1151 = vmatpush1.bf16.xpose.msra.mxu0 0
      %1152 = vmatprep.subr.bf16.mxu0 0
      %1153 = vmatpush1.bf16.xpose.msra.mxu0 0
      %1154 = vmatprep.subr.bf16.mxu0 0
      %1155 = vmatpush1.bf16.xpose.msra.mxu0 0
      %1156 = vmatprep.mubr.bf16.mxu0 0
      %1157 = vmatmul.mubr.bf16.gmra.mrb[0].mxu0 %v1119
      %v1158 = vpop.f32.mrb[0].mxu0
      %v1159 = vadd.f32 0.0, %v1158
      %v1160 = vpop.f32.mrb[0].mxu0
      %v1161 = vpop.f32.mrb[0].mxu0
      %v1162 = vpop.f32.mrb[0].mxu0
      %1163 = vdwg.mxu0
      %v1164 = vmul.f32 %v1159, 0.35355338
      %v1165 = vsel %vm716, %v1164, -inf
      %1166 = vmax.xlane.f32.xlu0 %v1165
      %v1167 = vpop.xlane.xlu0 %1166
      %v1168 = vsub.f32 %v1164, %v1167
      %v1169 = vmul.f32 %v1168, 1.442695
      %v1170 = vpow.pop %v1169
      %v1171 = vsel %vm716, %v1170, 0.0
      %1172 = vadd.xlane.f32.xlu0 %v1171
      %v1173 = vpop.xlane.xlu0 %1172
      %v1174 = vrcp.pop %v1173
      %v1175 = vmul.f32 %v1170, %v1174
      %v1176 = vpack.c.bf16 %v1175, %v1175
      %v1177 = vpack.c.bf16 %v1111, %v1111
      %v1179 = vsel %vm716, %v1176, 0
      %v1182 = vsel %vm780, %v1177, 0
      %1184 = vmatprep.subr.bf16.mxu0 0
      %1185 = vmatpush1.bf16.msra.mxu0 %v1182
      %1186 = vmatprep.subr.bf16.mxu0 0
      %1187 = vmatpush1.bf16.msra.mxu0 0
      %1188 = vmatprep.subr.bf16.mxu0 0
      %1189 = vmatpush1.bf16.msra.mxu0 0
      %1190 = vmatprep.subr.bf16.mxu0 0
      %1191 = vmatpush1.bf16.msra.mxu0 0
      %1192 = vmatprep.subr.bf16.mxu0 0
      %1193 = vmatpush1.bf16.msra.mxu0 0
      %1194 = vmatprep.subr.bf16.mxu0 0
      %1195 = vmatpush1.bf16.msra.mxu0 0
      %1196 = vmatprep.subr.bf16.mxu0 0
      %1197 = vmatpush1.bf16.msra.mxu0 0
      %1198 = vmatprep.subr.bf16.mxu0 0
      %1199 = vmatpush1.bf16.msra.mxu0 0
      %1200 = vmatprep.subr.bf16.mxu0 0
      %1201 = vmatpush1.bf16.msra.mxu0 0
      %1202 = vmatprep.subr.bf16.mxu0 0
      %1203 = vmatpush1.bf16.msra.mxu0 0
      %1204 = vmatprep.subr.bf16.mxu0 0
      %1205 = vmatpush1.bf16.msra.mxu0 0
      %1206 = vmatprep.subr.bf16.mxu0 0
      %1207 = vmatpush1.bf16.msra.mxu0 0
      %1208 = vmatprep.subr.bf16.mxu0 0
      %1209 = vmatpush1.bf16.msra.mxu0 0
      %1210 = vmatprep.subr.bf16.mxu0 0
      %1211 = vmatpush1.bf16.msra.mxu0 0
      %1212 = vmatprep.subr.bf16.mxu0 0
      %1213 = vmatpush1.bf16.msra.mxu0 0
      %1214 = vmatprep.subr.bf16.mxu0 0
      %1215 = vmatpush1.bf16.msra.mxu0 0
      %1216 = vmatprep.mubr.bf16.mxu0 0
      %1217 = vmatmul.mubr.bf16.gmra.mrb[0].mxu0 %v1179
      %v1218 = vpop.f32.mrb[0].mxu0
      %v1219 = vadd.f32 0.0, %v1218
      %v1220 = vpop.f32.mrb[0].mxu0
      %v1221 = vpop.f32.mrb[0].mxu0
      %v1222 = vpop.f32.mrb[0].mxu0
      %1223 = vdwg.mxu0
      %v1224 = vpack.c.bf16 %v1219, %v1219
      %s1225 = scalar_lea.vmem %s8, 4
      %v1226 = vld [vmem:[%s1225] sm:$0xf]
      %v1228 = vsel %vm716, %v1224, 0
      %v1231 = vsel %vm780, %v1226, 0
      %1233 = vmatprep.subr.bf16.mxu0 0
      %1234 = vmatpush1.bf16.msra.mxu0 %v1231
      %1235 = vmatprep.subr.bf16.mxu0 0
      %1236 = vmatpush1.bf16.msra.mxu0 0
      %1237 = vmatprep.subr.bf16.mxu0 0
      %1238 = vmatpush1.bf16.msra.mxu0 0
      %1239 = vmatprep.subr.bf16.mxu0 0
      %1240 = vmatpush1.bf16.msra.mxu0 0
      %1241 = vmatprep.subr.bf16.mxu0 0
      %1242 = vmatpush1.bf16.msra.mxu0 0
      %1243 = vmatprep.subr.bf16.mxu0 0
      %1244 = vmatpush1.bf16.msra.mxu0 0
      %1245 = vmatprep.subr.bf16.mxu0 0
      %1246 = vmatpush1.bf16.msra.mxu0 0
      %1247 = vmatprep.subr.bf16.mxu0 0
      %1248 = vmatpush1.bf16.msra.mxu0 0
      %1249 = vmatprep.subr.bf16.mxu0 0
      %1250 = vmatpush1.bf16.msra.mxu0 0
      %1251 = vmatprep.subr.bf16.mxu0 0
      %1252 = vmatpush1.bf16.msra.mxu0 0
      %1253 = vmatprep.subr.bf16.mxu0 0
      %1254 = vmatpush1.bf16.msra.mxu0 0
      %1255 = vmatprep.subr.bf16.mxu0 0
      %1256 = vmatpush1.bf16.msra.mxu0 0
      %1257 = vmatprep.subr.bf16.mxu0 0
      %1258 = vmatpush1.bf16.msra.mxu0 0
      %1259 = vmatprep.subr.bf16.mxu0 0
      %1260 = vmatpush1.bf16.msra.mxu0 0
      %1261 = vmatprep.subr.bf16.mxu0 0
      %1262 = vmatpush1.bf16.msra.mxu0 0
      %1263 = vmatprep.subr.bf16.mxu0 0
      %1264 = vmatpush1.bf16.msra.mxu0 0
      %1265 = vmatprep.mubr.bf16.mxu0 0
      %1266 = vmatmul.mubr.bf16.gmra.mrb[0].mxu0 %v1228
      %v1267 = vpop.f32.mrb[0].mxu0
      %v1268 = vadd.f32 0.0, %v1267
      %v1269 = vpop.f32.mrb[0].mxu0
      %v1270 = vpop.f32.mrb[0].mxu0
      %v1271 = vpop.f32.mrb[0].mxu0
      %1272 = vdwg.mxu0
      %v1273 = vadd.f32 %v872, %v1268
      %s1274 = scalar_lea.vmem %s2, 64
      %v1275 = vld [vmem:[%s1274] sm:$0xf]
      %v1276 = vld [vmem:[%s1274 + $0x4] sm:$0xf]
      %v1277 = vld [vmem:[%s1274 + $0x8] sm:$0xf]
      %v1278 = vld [vmem:[%s1274 + $0xc] sm:$0xf]
      %v1279 = vld [vmem:[%s1274 + $0x10] sm:$0xf]
      %v1280 = vld [vmem:[%s1274 + $0x14] sm:$0xf]
      %v1281 = vld [vmem:[%s1274 + $0x18] sm:$0xf]
      %v1282 = vld [vmem:[%s1274 + $0x1c] sm:$0xf]
      %s1283 = scalar_lea.vmem %s3, 2
      %v1284 = vld [vmem:[%s1283] sm:$0x1]
      %v1286 = vlaneseq
      %v1287 = vshrl.u32 %v1286, 7
      %v1288 = vsub.s32 0, %v1287
      %v1289 = vrot.slane %v1284, %v1288
      %v1299 = vunpack.c.l.b16 %v1275
      %v1300 = vunpack.c.l.b16 %v1276
      %v1301 = vunpack.c.l.b16 %v1277
      %v1302 = vunpack.c.l.b16 %v1278
      %v1303 = vunpack.c.l.b16 %v1279
      %v1304 = vunpack.c.l.b16 %v1280
      %v1305 = vunpack.c.l.b16 %v1281
      %v1306 = vunpack.c.l.b16 %v1282
      %v1307 = vpack.c.b16 %v1300, %v1299
      %v1308 = vpack.c.b16 %v1302, %v1301
      %v1309 = vpack.c.b16 %v1304, %v1303
      %v1310 = vpack.c.b16 %v1306, %v1305
      %1315 = vmatprep.subr.bf16.mxu0 0
      %1316 = vmatpush1.bf16.msra.mxu0 %v1307
      %1317 = vmatprep.subr.bf16.mxu0 0
      %1318 = vmatpush1.bf16.msra.mxu0 %v1308
      %1319 = vmatprep.subr.bf16.mxu0 0
      %1320 = vmatpush1.bf16.msra.mxu0 %v1309
      %1321 = vmatprep.subr.bf16.mxu0 0
      %1322 = vmatpush1.bf16.msra.mxu0 %v1310
      %1323 = vmatprep.subr.bf16.mxu0 0
      %1324 = vmatpush1.bf16.msra.mxu0 0
      %1325 = vmatprep.subr.bf16.mxu0 0
      %1326 = vmatpush1.bf16.msra.mxu0 0
      %1327 = vmatprep.subr.bf16.mxu0 0
      %1328 = vmatpush1.bf16.msra.mxu0 0
      %1329 = vmatprep.subr.bf16.mxu0 0
      %1330 = vmatpush1.bf16.msra.mxu0 0
      %1331 = vmatprep.subr.bf16.mxu0 0
      %1332 = vmatpush1.bf16.msra.mxu0 0
      %1333 = vmatprep.subr.bf16.mxu0 0
      %1334 = vmatpush1.bf16.msra.mxu0 0
      %1335 = vmatprep.subr.bf16.mxu0 0
      %1336 = vmatpush1.bf16.msra.mxu0 0
      %1337 = vmatprep.subr.bf16.mxu0 0
      %1338 = vmatpush1.bf16.msra.mxu0 0
      %1339 = vmatprep.subr.bf16.mxu0 0
      %1340 = vmatpush1.bf16.msra.mxu0 0
      %1341 = vmatprep.subr.bf16.mxu0 0
      %1342 = vmatpush1.bf16.msra.mxu0 0
      %1343 = vmatprep.subr.bf16.mxu0 0
      %1344 = vmatpush1.bf16.msra.mxu0 0
      %1345 = vmatprep.subr.bf16.mxu0 0
      %1346 = vmatpush1.bf16.msra.mxu0 0
      %1347 = vmatprep.mubr.bf16.mxu0 0
      %1348 = vmatmul.mubr.bf16.gmra.mrb[0].mxu0 %v511
      %v1349 = vpop.f32.mrb[0].mxu0
      %v1350 = vadd.f32 %v1289, %v1349
      %v1351 = vpop.f32.mrb[0].mxu0
      %v1352 = vpop.f32.mrb[0].mxu0
      %v1353 = vpop.f32.mrb[0].mxu0
      %1354 = vdwg.mxu0
      %s1355 = scalar_lea.vmem %s4, 64
      %v1356 = vld [vmem:[%s1355] sm:$0xf]
      %v1357 = vld [vmem:[%s1355 + $0x4] sm:$0xf]
      %v1358 = vld [vmem:[%s1355 + $0x8] sm:$0xf]
      %v1359 = vld [vmem:[%s1355 + $0xc] sm:$0xf]
      %v1360 = vld [vmem:[%s1355 + $0x10] sm:$0xf]
      %v1361 = vld [vmem:[%s1355 + $0x14] sm:$0xf]
      %v1362 = vld [vmem:[%s1355 + $0x18] sm:$0xf]
      %v1363 = vld [vmem:[%s1355 + $0x1c] sm:$0xf]
      %s1364 = scalar_lea.vmem %s5, 2
      %v1365 = vld [vmem:[%s1364] sm:$0x1]
      %v1367 = vlaneseq
      %v1368 = vshrl.u32 %v1367, 7
      %v1369 = vsub.s32 0, %v1368
      %v1370 = vrot.slane %v1365, %v1369
      %v1380 = vunpack.c.l.b16 %v1356
      %v1381 = vunpack.c.l.b16 %v1357
      %v1382 = vunpack.c.l.b16 %v1358
      %v1383 = vunpack.c.l.b16 %v1359
      %v1384 = vunpack.c.l.b16 %v1360
      %v1385 = vunpack.c.l.b16 %v1361
      %v1386 = vunpack.c.l.b16 %v1362
      %v1387 = vunpack.c.l.b16 %v1363
      %v1388 = vpack.c.b16 %v1381, %v1380
      %v1389 = vpack.c.b16 %v1383, %v1382
      %v1390 = vpack.c.b16 %v1385, %v1384
      %v1391 = vpack.c.b16 %v1387, %v1386
      %1396 = vmatprep.subr.bf16.mxu0 0
      %1397 = vmatpush1.bf16.msra.mxu0 %v1388
      %1398 = vmatprep.subr.bf16.mxu0 0
      %1399 = vmatpush1.bf16.msra.mxu0 %v1389
      %1400 = vmatprep.subr.bf16.mxu0 0
      %1401 = vmatpush1.bf16.msra.mxu0 %v1390
      %1402 = vmatprep.subr.bf16.mxu0 0
      %1403 = vmatpush1.bf16.msra.mxu0 %v1391
      %1404 = vmatprep.subr.bf16.mxu0 0
      %1405 = vmatpush1.bf16.msra.mxu0 0
      %1406 = vmatprep.subr.bf16.mxu0 0
      %1407 = vmatpush1.bf16.msra.mxu0 0
      %1408 = vmatprep.subr.bf16.mxu0 0
      %1409 = vmatpush1.bf16.msra.mxu0 0
      %1410 = vmatprep.subr.bf16.mxu0 0
      %1411 = vmatpush1.bf16.msra.mxu0 0
      %1412 = vmatprep.subr.bf16.mxu0 0
      %1413 = vmatpush1.bf16.msra.mxu0 0
      %1414 = vmatprep.subr.bf16.mxu0 0
      %1415 = vmatpush1.bf16.msra.mxu0 0
      %1416 = vmatprep.subr.bf16.mxu0 0
      %1417 = vmatpush1.bf16.msra.mxu0 0
      %1418 = vmatprep.subr.bf16.mxu0 0
      %1419 = vmatpush1.bf16.msra.mxu0 0
      %1420 = vmatprep.subr.bf16.mxu0 0
      %1421 = vmatpush1.bf16.msra.mxu0 0
      %1422 = vmatprep.subr.bf16.mxu0 0
      %1423 = vmatpush1.bf16.msra.mxu0 0
      %1424 = vmatprep.subr.bf16.mxu0 0
      %1425 = vmatpush1.bf16.msra.mxu0 0
      %1426 = vmatprep.subr.bf16.mxu0 0
      %1427 = vmatpush1.bf16.msra.mxu0 0
      %1428 = vmatprep.mubr.bf16.mxu0 0
      %1429 = vmatmul.mubr.bf16.gmra.mrb[0].mxu0 %v593
      %v1430 = vpop.f32.mrb[0].mxu0
      %v1431 = vadd.f32 %v1370, %v1430
      %v1432 = vpop.f32.mrb[0].mxu0
      %v1433 = vpop.f32.mrb[0].mxu0
      %v1434 = vpop.f32.mrb[0].mxu0
      %1435 = vdwg.mxu0
      %s1436 = scalar_lea.vmem %s6, 64
      %v1437 = vld [vmem:[%s1436] sm:$0xf]
      %v1438 = vld [vmem:[%s1436 + $0x4] sm:$0xf]
      %v1439 = vld [vmem:[%s1436 + $0x8] sm:$0xf]
      %v1440 = vld [vmem:[%s1436 + $0xc] sm:$0xf]
      %v1441 = vld [vmem:[%s1436 + $0x10] sm:$0xf]
      %v1442 = vld [vmem:[%s1436 + $0x14] sm:$0xf]
      %v1443 = vld [vmem:[%s1436 + $0x18] sm:$0xf]
      %v1444 = vld [vmem:[%s1436 + $0x1c] sm:$0xf]
      %s1445 = scalar_lea.vmem %s7, 2
      %v1446 = vld [vmem:[%s1445] sm:$0x1]
      %v1448 = vlaneseq
      %v1449 = vshrl.u32 %v1448, 7
      %v1450 = vsub.s32 0, %v1449
      %v1451 = vrot.slane %v1446, %v1450
      %v1461 = vunpack.c.l.b16 %v1437
      %v1462 = vunpack.c.l.b16 %v1438
      %v1463 = vunpack.c.l.b16 %v1439
      %v1464 = vunpack.c.l.b16 %v1440
      %v1465 = vunpack.c.l.b16 %v1441
      %v1466 = vunpack.c.l.b16 %v1442
      %v1467 = vunpack.c.l.b16 %v1443
      %v1468 = vunpack.c.l.b16 %v1444
      %v1469 = vpack.c.b16 %v1462, %v1461
      %v1470 = vpack.c.b16 %v1464, %v1463
      %v1471 = vpack.c.b16 %v1466, %v1465
      %v1472 = vpack.c.b16 %v1468, %v1467
      %1477 = vmatprep.subr.bf16.mxu0 0
      %1478 = vmatpush1.bf16.msra.mxu0 %v1469
      %1479 = vmatprep.subr.bf16.mxu0 0
      %1480 = vmatpush1.bf16.msra.mxu0 %v1470
      %1481 = vmatprep.subr.bf16.mxu0 0
      %1482 = vmatpush1.bf16.msra.mxu0 %v1471
      %1483 = vmatprep.subr.bf16.mxu0 0
      %1484 = vmatpush1.bf16.msra.mxu0 %v1472
      %1485 = vmatprep.subr.bf16.mxu0 0
      %1486 = vmatpush1.bf16.msra.mxu0 0
      %1487 = vmatprep.subr.bf16.mxu0 0
      %1488 = vmatpush1.bf16.msra.mxu0 0
      %1489 = vmatprep.subr.bf16.mxu0 0
      %1490 = vmatpush1.bf16.msra.mxu0 0
      %1491 = vmatprep.subr.bf16.mxu0 0
      %1492 = vmatpush1.bf16.msra.mxu0 0
      %1493 = vmatprep.subr.bf16.mxu0 0
      %1494 = vmatpush1.bf16.msra.mxu0 0
      %1495 = vmatprep.subr.bf16.mxu0 0
      %1496 = vmatpush1.bf16.msra.mxu0 0
      %1497 = vmatprep.subr.bf16.mxu0 0
      %1498 = vmatpush1.bf16.msra.mxu0 0
      %1499 = vmatprep.subr.bf16.mxu0 0
      %1500 = vmatpush1.bf16.msra.mxu0 0
      %1501 = vmatprep.subr.bf16.mxu0 0
      %1502 = vmatpush1.bf16.msra.mxu0 0
      %1503 = vmatprep.subr.bf16.mxu0 0
      %1504 = vmatpush1.bf16.msra.mxu0 0
      %1505 = vmatprep.subr.bf16.mxu0 0
      %1506 = vmatpush1.bf16.msra.mxu0 0
      %1507 = vmatprep.subr.bf16.mxu0 0
      %1508 = vmatpush1.bf16.msra.mxu0 0
      %1509 = vmatprep.mubr.bf16.mxu0 0
      %1510 = vmatmul.mubr.bf16.gmra.mrb[0].mxu0 %v593
      %v1511 = vpop.f32.mrb[0].mxu0
      %v1512 = vadd.f32 %v1451, %v1511
      %v1513 = vpop.f32.mrb[0].mxu0
      %v1514 = vpop.f32.mrb[0].mxu0
      %v1515 = vpop.f32.mrb[0].mxu0
      %1516 = vdwg.mxu0
      %v1517 = vpack.c.bf16 %v1350, %v1350
      %v1518 = vpack.c.bf16 %v1431, %v1431
      %v1520 = vsel %vm716, %v1517, 0
      %v1523 = vsel %vm716, %v1518, 0
      %1525 = vmatprep.subr.bf16.mxu0 0
      %1526 = vmatpush1.bf16.xpose.msra.mxu0 %v1523
      %1527 = vmatprep.subr.bf16.mxu0 0
      %1528 = vmatpush1.bf16.xpose.msra.mxu0 0
      %1529 = vmatprep.subr.bf16.mxu0 0
      %1530 = vmatpush1.bf16.xpose.msra.mxu0 0
      %1531 = vmatprep.subr.bf16.mxu0 0
      %1532 = vmatpush1.bf16.xpose.msra.mxu0 0
      %1533 = vmatprep.subr.bf16.mxu0 0
      %1534 = vmatpush1.bf16.xpose.msra.mxu0 0
      %1535 = vmatprep.subr.bf16.mxu0 0
      %1536 = vmatpush1.bf16.xpose.msra.mxu0 0
      %1537 = vmatprep.subr.bf16.mxu0 0
      %1538 = vmatpush1.bf16.xpose.msra.mxu0 0
      %1539 = vmatprep.subr.bf16.mxu0 0
      %1540 = vmatpush1.bf16.xpose.msra.mxu0 0
      %1541 = vmatprep.subr.bf16.mxu0 0
      %1542 = vmatpush1.bf16.xpose.msra.mxu0 0
      %1543 = vmatprep.subr.bf16.mxu0 0
      %1544 = vmatpush1.bf16.xpose.msra.mxu0 0
      %1545 = vmatprep.subr.bf16.mxu0 0
      %1546 = vmatpush1.bf16.xpose.msra.mxu0 0
      %1547 = vmatprep.subr.bf16.mxu0 0
      %1548 = vmatpush1.bf16.xpose.msra.mxu0 0
      %1549 = vmatprep.subr.bf16.mxu0 0
      %1550 = vmatpush1.bf16.xpose.msra.mxu0 0
      %1551 = vmatprep.subr.bf16.mxu0 0
      %1552 = vmatpush1.bf16.xpose.msra.mxu0 0
      %1553 = vmatprep.subr.bf16.mxu0 0
      %1554 = vmatpush1.bf16.xpose.msra.mxu0 0
      %1555 = vmatprep.subr.bf16.mxu0 0
      %1556 = vmatpush1.bf16.xpose.msra.mxu0 0
      %1557 = vmatprep.mubr.bf16.mxu0 0
      %1558 = vmatmul.mubr.bf16.gmra.mrb[0].mxu0 %v1520
      %v1559 = vpop.f32.mrb[0].mxu0
      %v1560 = vadd.f32 0.0, %v1559
      %v1561 = vpop.f32.mrb[0].mxu0
      %v1562 = vpop.f32.mrb[0].mxu0
      %v1563 = vpop.f32.mrb[0].mxu0
      %1564 = vdwg.mxu0
      %v1565 = vmul.f32 %v1560, 0.35355338
      %v1566 = vsel %vm716, %v1565, -inf
      %1567 = vmax.xlane.f32.xlu0 %v1566
      %v1568 = vpop.xlane.xlu0 %1567
      %v1569 = vsub.f32 %v1565, %v1568
      %v1570 = vmul.f32 %v1569, 1.442695
      %v1571 = vpow.pop %v1570
      %v1572 = vsel %vm716, %v1571, 0.0
      %1573 = vadd.xlane.f32.xlu0 %v1572
      %v1574 = vpop.xlane.xlu0 %1573
      %v1575 = vrcp.pop %v1574
      %v1576 = vmul.f32 %v1571, %v1575
      %v1577 = vpack.c.bf16 %v1576, %v1576
      %v1578 = vpack.c.bf16 %v1512, %v1512
      %v1580 = vsel %vm716, %v1577, 0
      %v1583 = vsel %vm780, %v1578, 0
      %1585 = vmatprep.subr.bf16.mxu0 0
      %1586 = vmatpush1.bf16.msra.mxu0 %v1583
      %1587 = vmatprep.subr.bf16.mxu0 0
      %1588 = vmatpush1.bf16.msra.mxu0 0
      %1589 = vmatprep.subr.bf16.mxu0 0
      %1590 = vmatpush1.bf16.msra.mxu0 0
      %1591 = vmatprep.subr.bf16.mxu0 0
      %1592 = vmatpush1.bf16.msra.mxu0 0
      %1593 = vmatprep.subr.bf16.mxu0 0
      %1594 = vmatpush1.bf16.msra.mxu0 0
      %1595 = vmatprep.subr.bf16.mxu0 0
      %1596 = vmatpush1.bf16.msra.mxu0 0
      %1597 = vmatprep.subr.bf16.mxu0 0
      %1598 = vmatpush1.bf16.msra.mxu0 0
      %1599 = vmatprep.subr.bf16.mxu0 0
      %1600 = vmatpush1.bf16.msra.mxu0 0
      %1601 = vmatprep.subr.bf16.mxu0 0
      %1602 = vmatpush1.bf16.msra.mxu0 0
      %1603 = vmatprep.subr.bf16.mxu0 0
      %1604 = vmatpush1.bf16.msra.mxu0 0
      %1605 = vmatprep.subr.bf16.mxu0 0
      %1606 = vmatpush1.bf16.msra.mxu0 0
      %1607 = vmatprep.subr.bf16.mxu0 0
      %1608 = vmatpush1.bf16.msra.mxu0 0
      %1609 = vmatprep.subr.bf16.mxu0 0
      %1610 = vmatpush1.bf16.msra.mxu0 0
      %1611 = vmatprep.subr.bf16.mxu0 0
      %1612 = vmatpush1.bf16.msra.mxu0 0
      %1613 = vmatprep.subr.bf16.mxu0 0
      %1614 = vmatpush1.bf16.msra.mxu0 0
      %1615 = vmatprep.subr.bf16.mxu0 0
      %1616 = vmatpush1.bf16.msra.mxu0 0
      %1617 = vmatprep.mubr.bf16.mxu0 0
      %1618 = vmatmul.mubr.bf16.gmra.mrb[0].mxu0 %v1580
      %v1619 = vpop.f32.mrb[0].mxu0
      %v1620 = vadd.f32 0.0, %v1619
      %v1621 = vpop.f32.mrb[0].mxu0
      %v1622 = vpop.f32.mrb[0].mxu0
      %v1623 = vpop.f32.mrb[0].mxu0
      %1624 = vdwg.mxu0
      %v1625 = vpack.c.bf16 %v1620, %v1620
      %s1626 = scalar_lea.vmem %s8, 8
      %v1627 = vld [vmem:[%s1626] sm:$0xf]
      %v1629 = vsel %vm716, %v1625, 0
      %v1632 = vsel %vm780, %v1627, 0
      %1634 = vmatprep.subr.bf16.mxu0 0
      %1635 = vmatpush1.bf16.msra.mxu0 %v1632
      %1636 = vmatprep.subr.bf16.mxu0 0
      %1637 = vmatpush1.bf16.msra.mxu0 0
      %1638 = vmatprep.subr.bf16.mxu0 0
      %1639 = vmatpush1.bf16.msra.mxu0 0
      %1640 = vmatprep.subr.bf16.mxu0 0
      %1641 = vmatpush1.bf16.msra.mxu0 0
      %1642 = vmatprep.subr.bf16.mxu0 0
      %1643 = vmatpush1.bf16.msra.mxu0 0
      %1644 = vmatprep.subr.bf16.mxu0 0
      %1645 = vmatpush1.bf16.msra.mxu0 0
      %1646 = vmatprep.subr.bf16.mxu0 0
      %1647 = vmatpush1.bf16.msra.mxu0 0
      %1648 = vmatprep.subr.bf16.mxu0 0
      %1649 = vmatpush1.bf16.msra.mxu0 0
      %1650 = vmatprep.subr.bf16.mxu0 0
      %1651 = vmatpush1.bf16.msra.mxu0 0
      %1652 = vmatprep.subr.bf16.mxu0 0
      %1653 = vmatpush1.bf16.msra.mxu0 0
      %1654 = vmatprep.subr.bf16.mxu0 0
      %1655 = vmatpush1.bf16.msra.mxu0 0
      %1656 = vmatprep.subr.bf16.mxu0 0
      %1657 = vmatpush1.bf16.msra.mxu0 0
      %1658 = vmatprep.subr.bf16.mxu0 0
      %1659 = vmatpush1.bf16.msra.mxu0 0
      %1660 = vmatprep.subr.bf16.mxu0 0
      %1661 = vmatpush1.bf16.msra.mxu0 0
      %1662 = vmatprep.subr.bf16.mxu0 0
      %1663 = vmatpush1.bf16.msra.mxu0 0
      %1664 = vmatprep.subr.bf16.mxu0 0
      %1665 = vmatpush1.bf16.msra.mxu0 0
      %1666 = vmatprep.mubr.bf16.mxu0 0
      %1667 = vmatmul.mubr.bf16.gmra.mrb[0].mxu0 %v1629
      %v1668 = vpop.f32.mrb[0].mxu0
      %v1669 = vadd.f32 0.0, %v1668
      %v1670 = vpop.f32.mrb[0].mxu0
      %v1671 = vpop.f32.mrb[0].mxu0
      %v1672 = vpop.f32.mrb[0].mxu0
      %1673 = vdwg.mxu0
      %v1674 = vadd.f32 %v1273, %v1669
      %s1675 = scalar_lea.vmem %s2, 96
      %v1676 = vld [vmem:[%s1675] sm:$0xf]
      %v1677 = vld [vmem:[%s1675 + $0x4] sm:$0xf]
      %v1678 = vld [vmem:[%s1675 + $0x8] sm:$0xf]
      %v1679 = vld [vmem:[%s1675 + $0xc] sm:$0xf]
      %v1680 = vld [vmem:[%s1675 + $0x10] sm:$0xf]
      %v1681 = vld [vmem:[%s1675 + $0x14] sm:$0xf]
      %v1682 = vld [vmem:[%s1675 + $0x18] sm:$0xf]
      %v1683 = vld [vmem:[%s1675 + $0x1c] sm:$0xf]
      %s1684 = scalar_lea.vmem %s3, 3
      %v1685 = vld [vmem:[%s1684] sm:$0x1]
      %v1687 = vlaneseq
      %v1688 = vshrl.u32 %v1687, 7
      %v1689 = vsub.s32 0, %v1688
      %v1690 = vrot.slane %v1685, %v1689
      %v1700 = vunpack.c.l.b16 %v1676
      %v1701 = vunpack.c.l.b16 %v1677
      %v1702 = vunpack.c.l.b16 %v1678
      %v1703 = vunpack.c.l.b16 %v1679
      %v1704 = vunpack.c.l.b16 %v1680
      %v1705 = vunpack.c.l.b16 %v1681
      %v1706 = vunpack.c.l.b16 %v1682
      %v1707 = vunpack.c.l.b16 %v1683
      %v1708 = vpack.c.b16 %v1701, %v1700
      %v1709 = vpack.c.b16 %v1703, %v1702
      %v1710 = vpack.c.b16 %v1705, %v1704
      %v1711 = vpack.c.b16 %v1707, %v1706
      %1716 = vmatprep.subr.bf16.mxu0 0
      %1717 = vmatpush1.bf16.msra.mxu0 %v1708
      %1718 = vmatprep.subr.bf16.mxu0 0
      %1719 = vmatpush1.bf16.msra.mxu0 %v1709
      %1720 = vmatprep.subr.bf16.mxu0 0
      %1721 = vmatpush1.bf16.msra.mxu0 %v1710
      %1722 = vmatprep.subr.bf16.mxu0 0
      %1723 = vmatpush1.bf16.msra.mxu0 %v1711
      %1724 = vmatprep.subr.bf16.mxu0 0
      %1725 = vmatpush1.bf16.msra.mxu0 0
      %1726 = vmatprep.subr.bf16.mxu0 0
      %1727 = vmatpush1.bf16.msra.mxu0 0
      %1728 = vmatprep.subr.bf16.mxu0 0
      %1729 = vmatpush1.bf16.msra.mxu0 0
      %1730 = vmatprep.subr.bf16.mxu0 0
      %1731 = vmatpush1.bf16.msra.mxu0 0
      %1732 = vmatprep.subr.bf16.mxu0 0
      %1733 = vmatpush1.bf16.msra.mxu0 0
      %1734 = vmatprep.subr.bf16.mxu0 0
      %1735 = vmatpush1.bf16.msra.mxu0 0
      %1736 = vmatprep.subr.bf16.mxu0 0
      %1737 = vmatpush1.bf16.msra.mxu0 0
      %1738 = vmatprep.subr.bf16.mxu0 0
      %1739 = vmatpush1.bf16.msra.mxu0 0
      %1740 = vmatprep.subr.bf16.mxu0 0
      %1741 = vmatpush1.bf16.msra.mxu0 0
      %1742 = vmatprep.subr.bf16.mxu0 0
      %1743 = vmatpush1.bf16.msra.mxu0 0
      %1744 = vmatprep.subr.bf16.mxu0 0
      %1745 = vmatpush1.bf16.msra.mxu0 0
      %1746 = vmatprep.subr.bf16.mxu0 0
      %1747 = vmatpush1.bf16.msra.mxu0 0
      %1748 = vmatprep.mubr.bf16.mxu0 0
      %1749 = vmatmul.mubr.bf16.gmra.mrb[0].mxu0 %v511
      %v1750 = vpop.f32.mrb[0].mxu0
      %v1751 = vadd.f32 %v1690, %v1750
      %v1752 = vpop.f32.mrb[0].mxu0
      %v1753 = vpop.f32.mrb[0].mxu0
      %v1754 = vpop.f32.mrb[0].mxu0
      %1755 = vdwg.mxu0
      %s1756 = scalar_lea.vmem %s4, 96
      %v1757 = vld [vmem:[%s1756] sm:$0xf]
      %v1758 = vld [vmem:[%s1756 + $0x4] sm:$0xf]
      %v1759 = vld [vmem:[%s1756 + $0x8] sm:$0xf]
      %v1760 = vld [vmem:[%s1756 + $0xc] sm:$0xf]
      %v1761 = vld [vmem:[%s1756 + $0x10] sm:$0xf]
      %v1762 = vld [vmem:[%s1756 + $0x14] sm:$0xf]
      %v1763 = vld [vmem:[%s1756 + $0x18] sm:$0xf]
      %v1764 = vld [vmem:[%s1756 + $0x1c] sm:$0xf]
      %s1765 = scalar_lea.vmem %s5, 3
      %v1766 = vld [vmem:[%s1765] sm:$0x1]
      %v1768 = vlaneseq
      %v1769 = vshrl.u32 %v1768, 7
      %v1770 = vsub.s32 0, %v1769
      %v1771 = vrot.slane %v1766, %v1770
      %v1781 = vunpack.c.l.b16 %v1757
      %v1782 = vunpack.c.l.b16 %v1758
      %v1783 = vunpack.c.l.b16 %v1759
      %v1784 = vunpack.c.l.b16 %v1760
      %v1785 = vunpack.c.l.b16 %v1761
      %v1786 = vunpack.c.l.b16 %v1762
      %v1787 = vunpack.c.l.b16 %v1763
      %v1788 = vunpack.c.l.b16 %v1764
      %v1789 = vpack.c.b16 %v1782, %v1781
      %v1790 = vpack.c.b16 %v1784, %v1783
      %v1791 = vpack.c.b16 %v1786, %v1785
      %v1792 = vpack.c.b16 %v1788, %v1787
      %1797 = vmatprep.subr.bf16.mxu0 0
      %1798 = vmatpush1.bf16.msra.mxu0 %v1789
      %1799 = vmatprep.subr.bf16.mxu0 0
      %1800 = vmatpush1.bf16.msra.mxu0 %v1790
      %1801 = vmatprep.subr.bf16.mxu0 0
      %1802 = vmatpush1.bf16.msra.mxu0 %v1791
      %1803 = vmatprep.subr.bf16.mxu0 0
      %1804 = vmatpush1.bf16.msra.mxu0 %v1792
      %1805 = vmatprep.subr.bf16.mxu0 0
      %1806 = vmatpush1.bf16.msra.mxu0 0
      %1807 = vmatprep.subr.bf16.mxu0 0
      %1808 = vmatpush1.bf16.msra.mxu0 0
      %1809 = vmatprep.subr.bf16.mxu0 0
      %1810 = vmatpush1.bf16.msra.mxu0 0
      %1811 = vmatprep.subr.bf16.mxu0 0
      %1812 = vmatpush1.bf16.msra.mxu0 0
      %1813 = vmatprep.subr.bf16.mxu0 0
      %1814 = vmatpush1.bf16.msra.mxu0 0
      %1815 = vmatprep.subr.bf16.mxu0 0
      %1816 = vmatpush1.bf16.msra.mxu0 0
      %1817 = vmatprep.subr.bf16.mxu0 0
      %1818 = vmatpush1.bf16.msra.mxu0 0
      %1819 = vmatprep.subr.bf16.mxu0 0
      %1820 = vmatpush1.bf16.msra.mxu0 0
      %1821 = vmatprep.subr.bf16.mxu0 0
      %1822 = vmatpush1.bf16.msra.mxu0 0
      %1823 = vmatprep.subr.bf16.mxu0 0
      %1824 = vmatpush1.bf16.msra.mxu0 0
      %1825 = vmatprep.subr.bf16.mxu0 0
      %1826 = vmatpush1.bf16.msra.mxu0 0
      %1827 = vmatprep.subr.bf16.mxu0 0
      %1828 = vmatpush1.bf16.msra.mxu0 0
      %1829 = vmatprep.mubr.bf16.mxu0 0
      %1830 = vmatmul.mubr.bf16.gmra.mrb[0].mxu0 %v593
      %v1831 = vpop.f32.mrb[0].mxu0
      %v1832 = vadd.f32 %v1771, %v1831
      %v1833 = vpop.f32.mrb[0].mxu0
      %v1834 = vpop.f32.mrb[0].mxu0
      %v1835 = vpop.f32.mrb[0].mxu0
      %1836 = vdwg.mxu0
      %s1837 = scalar_lea.vmem %s6, 96
      %v1838 = vld [vmem:[%s1837] sm:$0xf]
      %v1839 = vld [vmem:[%s1837 + $0x4] sm:$0xf]
      %v1840 = vld [vmem:[%s1837 + $0x8] sm:$0xf]
      %v1841 = vld [vmem:[%s1837 + $0xc] sm:$0xf]
      %v1842 = vld [vmem:[%s1837 + $0x10] sm:$0xf]
      %v1843 = vld [vmem:[%s1837 + $0x14] sm:$0xf]
      %v1844 = vld [vmem:[%s1837 + $0x18] sm:$0xf]
      %v1845 = vld [vmem:[%s1837 + $0x1c] sm:$0xf]
      %s1846 = scalar_lea.vmem %s7, 3
      %v1847 = vld [vmem:[%s1846] sm:$0x1]
      %v1849 = vlaneseq
      %v1850 = vshrl.u32 %v1849, 7
      %v1851 = vsub.s32 0, %v1850
      %v1852 = vrot.slane %v1847, %v1851
      %v1862 = vunpack.c.l.b16 %v1838
      %v1863 = vunpack.c.l.b16 %v1839
      %v1864 = vunpack.c.l.b16 %v1840
      %v1865 = vunpack.c.l.b16 %v1841
      %v1866 = vunpack.c.l.b16 %v1842
      %v1867 = vunpack.c.l.b16 %v1843
      %v1868 = vunpack.c.l.b16 %v1844
      %v1869 = vunpack.c.l.b16 %v1845
      %v1870 = vpack.c.b16 %v1863, %v1862
      %v1871 = vpack.c.b16 %v1865, %v1864
      %v1872 = vpack.c.b16 %v1867, %v1866
      %v1873 = vpack.c.b16 %v1869, %v1868
      %1878 = vmatprep.subr.bf16.mxu0 0
      %1879 = vmatpush1.bf16.msra.mxu0 %v1870
      %1880 = vmatprep.subr.bf16.mxu0 0
      %1881 = vmatpush1.bf16.msra.mxu0 %v1871
      %1882 = vmatprep.subr.bf16.mxu0 0
      %1883 = vmatpush1.bf16.msra.mxu0 %v1872
      %1884 = vmatprep.subr.bf16.mxu0 0
      %1885 = vmatpush1.bf16.msra.mxu0 %v1873
      %1886 = vmatprep.subr.bf16.mxu0 0
      %1887 = vmatpush1.bf16.msra.mxu0 0
      %1888 = vmatprep.subr.bf16.mxu0 0
      %1889 = vmatpush1.bf16.msra.mxu0 0
      %1890 = vmatprep.subr.bf16.mxu0 0
      %1891 = vmatpush1.bf16.msra.mxu0 0
      %1892 = vmatprep.subr.bf16.mxu0 0
      %1893 = vmatpush1.bf16.msra.mxu0 0
      %1894 = vmatprep.subr.bf16.mxu0 0
      %1895 = vmatpush1.bf16.msra.mxu0 0
      %1896 = vmatprep.subr.bf16.mxu0 0
      %1897 = vmatpush1.bf16.msra.mxu0 0
      %1898 = vmatprep.subr.bf16.mxu0 0
      %1899 = vmatpush1.bf16.msra.mxu0 0
      %1900 = vmatprep.subr.bf16.mxu0 0
      %1901 = vmatpush1.bf16.msra.mxu0 0
      %1902 = vmatprep.subr.bf16.mxu0 0
      %1903 = vmatpush1.bf16.msra.mxu0 0
      %1904 = vmatprep.subr.bf16.mxu0 0
      %1905 = vmatpush1.bf16.msra.mxu0 0
      %1906 = vmatprep.subr.bf16.mxu0 0
      %1907 = vmatpush1.bf16.msra.mxu0 0
      %1908 = vmatprep.subr.bf16.mxu0 0
      %1909 = vmatpush1.bf16.msra.mxu0 0
      %1910 = vmatprep.mubr.bf16.mxu0 0
      %1911 = vmatmul.mubr.bf16.gmra.mrb[0].mxu0 %v593
      %v1912 = vpop.f32.mrb[0].mxu0
      %v1913 = vadd.f32 %v1852, %v1912
      %v1914 = vpop.f32.mrb[0].mxu0
      %v1915 = vpop.f32.mrb[0].mxu0
      %v1916 = vpop.f32.mrb[0].mxu0
      %1917 = vdwg.mxu0
      %v1918 = vpack.c.bf16 %v1751, %v1751
      %v1919 = vpack.c.bf16 %v1832, %v1832
      %v1921 = vsel %vm716, %v1918, 0
      %v1924 = vsel %vm716, %v1919, 0
      %1926 = vmatprep.subr.bf16.mxu0 0
      %1927 = vmatpush1.bf16.xpose.msra.mxu0 %v1924
      %1928 = vmatprep.subr.bf16.mxu0 0
      %1929 = vmatpush1.bf16.xpose.msra.mxu0 0
      %1930 = vmatprep.subr.bf16.mxu0 0
      %1931 = vmatpush1.bf16.xpose.msra.mxu0 0
      %1932 = vmatprep.subr.bf16.mxu0 0
      %1933 = vmatpush1.bf16.xpose.msra.mxu0 0
      %1934 = vmatprep.subr.bf16.mxu0 0
      %1935 = vmatpush1.bf16.xpose.msra.mxu0 0
      %1936 = vmatprep.subr.bf16.mxu0 0
      %1937 = vmatpush1.bf16.xpose.msra.mxu0 0
      %1938 = vmatprep.subr.bf16.mxu0 0
      %1939 = vmatpush1.bf16.xpose.msra.mxu0 0
      %1940 = vmatprep.subr.bf16.mxu0 0
      %1941 = vmatpush1.bf16.xpose.msra.mxu0 0
      %1942 = vmatprep.subr.bf16.mxu0 0
      %1943 = vmatpush1.bf16.xpose.msra.mxu0 0
      %1944 = vmatprep.subr.bf16.mxu0 0
      %1945 = vmatpush1.bf16.xpose.msra.mxu0 0
      %1946 = vmatprep.subr.bf16.mxu0 0
      %1947 = vmatpush1.bf16.xpose.msra.mxu0 0
      %1948 = vmatprep.subr.bf16.mxu0 0
      %1949 = vmatpush1.bf16.xpose.msra.mxu0 0
      %1950 = vmatprep.subr.bf16.mxu0 0
      %1951 = vmatpush1.bf16.xpose.msra.mxu0 0
      %1952 = vmatprep.subr.bf16.mxu0 0
      %1953 = vmatpush1.bf16.xpose.msra.mxu0 0
      %1954 = vmatprep.subr.bf16.mxu0 0
      %1955 = vmatpush1.bf16.xpose.msra.mxu0 0
      %1956 = vmatprep.subr.bf16.mxu0 0
      %1957 = vmatpush1.bf16.xpose.msra.mxu0 0
      %1958 = vmatprep.mubr.bf16.mxu0 0
      %1959 = vmatmul.mubr.bf16.gmra.mrb[0].mxu0 %v1921
      %v1960 = vpop.f32.mrb[0].mxu0
      %v1961 = vadd.f32 0.0, %v1960
      %v1962 = vpop.f32.mrb[0].mxu0
      %v1963 = vpop.f32.mrb[0].mxu0
      %v1964 = vpop.f32.mrb[0].mxu0
      %1965 = vdwg.mxu0
      %v1966 = vmul.f32 %v1961, 0.35355338
      %v1967 = vsel %vm716, %v1966, -inf
      %1968 = vmax.xlane.f32.xlu0 %v1967
      %v1969 = vpop.xlane.xlu0 %1968
      %v1970 = vsub.f32 %v1966, %v1969
      %v1971 = vmul.f32 %v1970, 1.442695
      %v1972 = vpow.pop %v1971
      %v1973 = vsel %vm716, %v1972, 0.0
      %1974 = vadd.xlane.f32.xlu0 %v1973
      %v1975 = vpop.xlane.xlu0 %1974
      %v1976 = vrcp.pop %v1975
      %v1977 = vmul.f32 %v1972, %v1976
      %v1978 = vpack.c.bf16 %v1977, %v1977
      %v1979 = vpack.c.bf16 %v1913, %v1913
      %v1981 = vsel %vm716, %v1978, 0
      %v1984 = vsel %vm780, %v1979, 0
      %1986 = vmatprep.subr.bf16.mxu0 0
      %1987 = vmatpush1.bf16.msra.mxu0 %v1984
      %1988 = vmatprep.subr.bf16.mxu0 0
      %1989 = vmatpush1.bf16.msra.mxu0 0
      %1990 = vmatprep.subr.bf16.mxu0 0
      %1991 = vmatpush1.bf16.msra.mxu0 0
      %1992 = vmatprep.subr.bf16.mxu0 0
      %1993 = vmatpush1.bf16.msra.mxu0 0
      %1994 = vmatprep.subr.bf16.mxu0 0
      %1995 = vmatpush1.bf16.msra.mxu0 0
      %1996 = vmatprep.subr.bf16.mxu0 0
      %1997 = vmatpush1.bf16.msra.mxu0 0
      %1998 = vmatprep.subr.bf16.mxu0 0
      %1999 = vmatpush1.bf16.msra.mxu0 0
      %2000 = vmatprep.subr.bf16.mxu0 0
      %2001 = vmatpush1.bf16.msra.mxu0 0
      %2002 = vmatprep.subr.bf16.mxu0 0
      %2003 = vmatpush1.bf16.msra.mxu0 0
      %2004 = vmatprep.subr.bf16.mxu0 0
      %2005 = vmatpush1.bf16.msra.mxu0 0
      %2006 = vmatprep.subr.bf16.mxu0 0
      %2007 = vmatpush1.bf16.msra.mxu0 0
      %2008 = vmatprep.subr.bf16.mxu0 0
      %2009 = vmatpush1.bf16.msra.mxu0 0
      %2010 = vmatprep.subr.bf16.mxu0 0
      %2011 = vmatpush1.bf16.msra.mxu0 0
      %2012 = vmatprep.subr.bf16.mxu0 0
      %2013 = vmatpush1.bf16.msra.mxu0 0
      %2014 = vmatprep.subr.bf16.mxu0 0
      %2015 = vmatpush1.bf16.msra.mxu0 0
      %2016 = vmatprep.subr.bf16.mxu0 0
      %2017 = vmatpush1.bf16.msra.mxu0 0
      %2018 = vmatprep.mubr.bf16.mxu0 0
      %2019 = vmatmul.mubr.bf16.gmra.mrb[0].mxu0 %v1981
      %v2020 = vpop.f32.mrb[0].mxu0
      %v2021 = vadd.f32 0.0, %v2020
      %v2022 = vpop.f32.mrb[0].mxu0
      %v2023 = vpop.f32.mrb[0].mxu0
      %v2024 = vpop.f32.mrb[0].mxu0
      %2025 = vdwg.mxu0
      %v2026 = vpack.c.bf16 %v2021, %v2021
      %s2027 = scalar_lea.vmem %s8, 12
      %v2028 = vld [vmem:[%s2027] sm:$0xf]
      %v2030 = vsel %vm716, %v2026, 0
      %v2033 = vsel %vm780, %v2028, 0
      %2035 = vmatprep.subr.bf16.mxu0 0
      %2036 = vmatpush1.bf16.msra.mxu0 %v2033
      %2037 = vmatprep.subr.bf16.mxu0 0
      %2038 = vmatpush1.bf16.msra.mxu0 0
      %2039 = vmatprep.subr.bf16.mxu0 0
      %2040 = vmatpush1.bf16.msra.mxu0 0
      %2041 = vmatprep.subr.bf16.mxu0 0
      %2042 = vmatpush1.bf16.msra.mxu0 0
      %2043 = vmatprep.subr.bf16.mxu0 0
      %2044 = vmatpush1.bf16.msra.mxu0 0
      %2045 = vmatprep.subr.bf16.mxu0 0
      %2046 = vmatpush1.bf16.msra.mxu0 0
      %2047 = vmatprep.subr.bf16.mxu0 0
      %2048 = vmatpush1.bf16.msra.mxu0 0
      %2049 = vmatprep.subr.bf16.mxu0 0
      %2050 = vmatpush1.bf16.msra.mxu0 0
      %2051 = vmatprep.subr.bf16.mxu0 0
      %2052 = vmatpush1.bf16.msra.mxu0 0
      %2053 = vmatprep.subr.bf16.mxu0 0
      %2054 = vmatpush1.bf16.msra.mxu0 0
      %2055 = vmatprep.subr.bf16.mxu0 0
      %2056 = vmatpush1.bf16.msra.mxu0 0
      %2057 = vmatprep.subr.bf16.mxu0 0
      %2058 = vmatpush1.bf16.msra.mxu0 0
      %2059 = vmatprep.subr.bf16.mxu0 0
      %2060 = vmatpush1.bf16.msra.mxu0 0
      %2061 = vmatprep.subr.bf16.mxu0 0
      %2062 = vmatpush1.bf16.msra.mxu0 0
      %2063 = vmatprep.subr.bf16.mxu0 0
      %2064 = vmatpush1.bf16.msra.mxu0 0
      %2065 = vmatprep.subr.bf16.mxu0 0
      %2066 = vmatpush1.bf16.msra.mxu0 0
      %2067 = vmatprep.mubr.bf16.mxu0 0
      %2068 = vmatmul.mubr.bf16.gmra.mrb[0].mxu0 %v2030
      %v2069 = vpop.f32.mrb[0].mxu0
      %v2070 = vadd.f32 0.0, %v2069
      %v2071 = vpop.f32.mrb[0].mxu0
      %v2072 = vpop.f32.mrb[0].mxu0
      %v2073 = vpop.f32.mrb[0].mxu0
      %2074 = vdwg.mxu0
      %v2075 = vadd.f32 %v1674, %v2070
      %s2076 = scalar_lea.vmem %s2, 128
      %v2077 = vld [vmem:[%s2076] sm:$0xf]
      %v2078 = vld [vmem:[%s2076 + $0x4] sm:$0xf]
      %v2079 = vld [vmem:[%s2076 + $0x8] sm:$0xf]
      %v2080 = vld [vmem:[%s2076 + $0xc] sm:$0xf]
      %v2081 = vld [vmem:[%s2076 + $0x10] sm:$0xf]
      %v2082 = vld [vmem:[%s2076 + $0x14] sm:$0xf]
      %v2083 = vld [vmem:[%s2076 + $0x18] sm:$0xf]
      %v2084 = vld [vmem:[%s2076 + $0x1c] sm:$0xf]
      %s2085 = scalar_lea.vmem %s3, 4
      %v2086 = vld [vmem:[%s2085] sm:$0x1]
      %v2088 = vlaneseq
      %v2089 = vshrl.u32 %v2088, 7
      %v2090 = vsub.s32 0, %v2089
      %v2091 = vrot.slane %v2086, %v2090
      %v2101 = vunpack.c.l.b16 %v2077
      %v2102 = vunpack.c.l.b16 %v2078
      %v2103 = vunpack.c.l.b16 %v2079
      %v2104 = vunpack.c.l.b16 %v2080
      %v2105 = vunpack.c.l.b16 %v2081
      %v2106 = vunpack.c.l.b16 %v2082
      %v2107 = vunpack.c.l.b16 %v2083
      %v2108 = vunpack.c.l.b16 %v2084
      %v2109 = vpack.c.b16 %v2102, %v2101
      %v2110 = vpack.c.b16 %v2104, %v2103
      %v2111 = vpack.c.b16 %v2106, %v2105
      %v2112 = vpack.c.b16 %v2108, %v2107
      %2117 = vmatprep.subr.bf16.mxu0 0
      %2118 = vmatpush1.bf16.msra.mxu0 %v2109
      %2119 = vmatprep.subr.bf16.mxu0 0
      %2120 = vmatpush1.bf16.msra.mxu0 %v2110
      %2121 = vmatprep.subr.bf16.mxu0 0
      %2122 = vmatpush1.bf16.msra.mxu0 %v2111
      %2123 = vmatprep.subr.bf16.mxu0 0
      %2124 = vmatpush1.bf16.msra.mxu0 %v2112
      %2125 = vmatprep.subr.bf16.mxu0 0
      %2126 = vmatpush1.bf16.msra.mxu0 0
      %2127 = vmatprep.subr.bf16.mxu0 0
      %2128 = vmatpush1.bf16.msra.mxu0 0
      %2129 = vmatprep.subr.bf16.mxu0 0
      %2130 = vmatpush1.bf16.msra.mxu0 0
      %2131 = vmatprep.subr.bf16.mxu0 0
      %2132 = vmatpush1.bf16.msra.mxu0 0
      %2133 = vmatprep.subr.bf16.mxu0 0
      %2134 = vmatpush1.bf16.msra.mxu0 0
      %2135 = vmatprep.subr.bf16.mxu0 0
      %2136 = vmatpush1.bf16.msra.mxu0 0
      %2137 = vmatprep.subr.bf16.mxu0 0
      %2138 = vmatpush1.bf16.msra.mxu0 0
      %2139 = vmatprep.subr.bf16.mxu0 0
      %2140 = vmatpush1.bf16.msra.mxu0 0
      %2141 = vmatprep.subr.bf16.mxu0 0
      %2142 = vmatpush1.bf16.msra.mxu0 0
      %2143 = vmatprep.subr.bf16.mxu0 0
      %2144 = vmatpush1.bf16.msra.mxu0 0
      %2145 = vmatprep.subr.bf16.mxu0 0
      %2146 = vmatpush1.bf16.msra.mxu0 0
      %2147 = vmatprep.subr.bf16.mxu0 0
      %2148 = vmatpush1.bf16.msra.mxu0 0
      %2149 = vmatprep.mubr.bf16.mxu0 0
      %2150 = vmatmul.mubr.bf16.gmra.mrb[0].mxu0 %v511
      %v2151 = vpop.f32.mrb[0].mxu0
      %v2152 = vadd.f32 %v2091, %v2151
      %v2153 = vpop.f32.mrb[0].mxu0
      %v2154 = vpop.f32.mrb[0].mxu0
      %v2155 = vpop.f32.mrb[0].mxu0
      %2156 = vdwg.mxu0
      %s2157 = scalar_lea.vmem %s4, 128
      %v2158 = vld [vmem:[%s2157] sm:$0xf]
      %v2159 = vld [vmem:[%s2157 + $0x4] sm:$0xf]
      %v2160 = vld [vmem:[%s2157 + $0x8] sm:$0xf]
      %v2161 = vld [vmem:[%s2157 + $0xc] sm:$0xf]
      %v2162 = vld [vmem:[%s2157 + $0x10] sm:$0xf]
      %v2163 = vld [vmem:[%s2157 + $0x14] sm:$0xf]
      %v2164 = vld [vmem:[%s2157 + $0x18] sm:$0xf]
      %v2165 = vld [vmem:[%s2157 + $0x1c] sm:$0xf]
      %s2166 = scalar_lea.vmem %s5, 4
      %v2167 = vld [vmem:[%s2166] sm:$0x1]
      %v2169 = vlaneseq
      %v2170 = vshrl.u32 %v2169, 7
      %v2171 = vsub.s32 0, %v2170
      %v2172 = vrot.slane %v2167, %v2171
      %v2182 = vunpack.c.l.b16 %v2158
      %v2183 = vunpack.c.l.b16 %v2159
      %v2184 = vunpack.c.l.b16 %v2160
      %v2185 = vunpack.c.l.b16 %v2161
      %v2186 = vunpack.c.l.b16 %v2162
      %v2187 = vunpack.c.l.b16 %v2163
      %v2188 = vunpack.c.l.b16 %v2164
      %v2189 = vunpack.c.l.b16 %v2165
      %v2190 = vpack.c.b16 %v2183, %v2182
      %v2191 = vpack.c.b16 %v2185, %v2184
      %v2192 = vpack.c.b16 %v2187, %v2186
      %v2193 = vpack.c.b16 %v2189, %v2188
      %2198 = vmatprep.subr.bf16.mxu0 0
      %2199 = vmatpush1.bf16.msra.mxu0 %v2190
      %2200 = vmatprep.subr.bf16.mxu0 0
      %2201 = vmatpush1.bf16.msra.mxu0 %v2191
      %2202 = vmatprep.subr.bf16.mxu0 0
      %2203 = vmatpush1.bf16.msra.mxu0 %v2192
      %2204 = vmatprep.subr.bf16.mxu0 0
      %2205 = vmatpush1.bf16.msra.mxu0 %v2193
      %2206 = vmatprep.subr.bf16.mxu0 0
      %2207 = vmatpush1.bf16.msra.mxu0 0
      %2208 = vmatprep.subr.bf16.mxu0 0
      %2209 = vmatpush1.bf16.msra.mxu0 0
      %2210 = vmatprep.subr.bf16.mxu0 0
      %2211 = vmatpush1.bf16.msra.mxu0 0
      %2212 = vmatprep.subr.bf16.mxu0 0
      %2213 = vmatpush1.bf16.msra.mxu0 0
      %2214 = vmatprep.subr.bf16.mxu0 0
      %2215 = vmatpush1.bf16.msra.mxu0 0
      %2216 = vmatprep.subr.bf16.mxu0 0
      %2217 = vmatpush1.bf16.msra.mxu0 0
      %2218 = vmatprep.subr.bf16.mxu0 0
      %2219 = vmatpush1.bf16.msra.mxu0 0
      %2220 = vmatprep.subr.bf16.mxu0 0
      %2221 = vmatpush1.bf16.msra.mxu0 0
      %2222 = vmatprep.subr.bf16.mxu0 0
      %2223 = vmatpush1.bf16.msra.mxu0 0
      %2224 = vmatprep.subr.bf16.mxu0 0
      %2225 = vmatpush1.bf16.msra.mxu0 0
      %2226 = vmatprep.subr.bf16.mxu0 0
      %2227 = vmatpush1.bf16.msra.mxu0 0
      %2228 = vmatprep.subr.bf16.mxu0 0
      %2229 = vmatpush1.bf16.msra.mxu0 0
      %2230 = vmatprep.mubr.bf16.mxu0 0
      %2231 = vmatmul.mubr.bf16.gmra.mrb[0].mxu0 %v593
      %v2232 = vpop.f32.mrb[0].mxu0
      %v2233 = vadd.f32 %v2172, %v2232
      %v2234 = vpop.f32.mrb[0].mxu0
      %v2235 = vpop.f32.mrb[0].mxu0
      %v2236 = vpop.f32.mrb[0].mxu0
      %2237 = vdwg.mxu0
      %s2238 = scalar_lea.vmem %s6, 128
      %v2239 = vld [vmem:[%s2238] sm:$0xf]
      %v2240 = vld [vmem:[%s2238 + $0x4] sm:$0xf]
      %v2241 = vld [vmem:[%s2238 + $0x8] sm:$0xf]
      %v2242 = vld [vmem:[%s2238 + $0xc] sm:$0xf]
      %v2243 = vld [vmem:[%s2238 + $0x10] sm:$0xf]
      %v2244 = vld [vmem:[%s2238 + $0x14] sm:$0xf]
      %v2245 = vld [vmem:[%s2238 + $0x18] sm:$0xf]
      %v2246 = vld [vmem:[%s2238 + $0x1c] sm:$0xf]
      %s2247 = scalar_lea.vmem %s7, 4
      %v2248 = vld [vmem:[%s2247] sm:$0x1]
      %v2250 = vlaneseq
      %v2251 = vshrl.u32 %v2250, 7
      %v2252 = vsub.s32 0, %v2251
      %v2253 = vrot.slane %v2248, %v2252
      %v2263 = vunpack.c.l.b16 %v2239
      %v2264 = vunpack.c.l.b16 %v2240
      %v2265 = vunpack.c.l.b16 %v2241
      %v2266 = vunpack.c.l.b16 %v2242
      %v2267 = vunpack.c.l.b16 %v2243
      %v2268 = vunpack.c.l.b16 %v2244
      %v2269 = vunpack.c.l.b16 %v2245
      %v2270 = vunpack.c.l.b16 %v2246
      %v2271 = vpack.c.b16 %v2264, %v2263
      %v2272 = vpack.c.b16 %v2266, %v2265
      %v2273 = vpack.c.b16 %v2268, %v2267
      %v2274 = vpack.c.b16 %v2270, %v2269
      %2279 = vmatprep.subr.bf16.mxu0 0
      %2280 = vmatpush1.bf16.msra.mxu0 %v2271
      %2281 = vmatprep.subr.bf16.mxu0 0
      %2282 = vmatpush1.bf16.msra.mxu0 %v2272
      %2283 = vmatprep.subr.bf16.mxu0 0
      %2284 = vmatpush1.bf16.msra.mxu0 %v2273
      %2285 = vmatprep.subr.bf16.mxu0 0
      %2286 = vmatpush1.bf16.msra.mxu0 %v2274
      %2287 = vmatprep.subr.bf16.mxu0 0
      %2288 = vmatpush1.bf16.msra.mxu0 0
      %2289 = vmatprep.subr.bf16.mxu0 0
      %2290 = vmatpush1.bf16.msra.mxu0 0
      %2291 = vmatprep.subr.bf16.mxu0 0
      %2292 = vmatpush1.bf16.msra.mxu0 0
      %2293 = vmatprep.subr.bf16.mxu0 0
      %2294 = vmatpush1.bf16.msra.mxu0 0
      %2295 = vmatprep.subr.bf16.mxu0 0
      %2296 = vmatpush1.bf16.msra.mxu0 0
      %2297 = vmatprep.subr.bf16.mxu0 0
      %2298 = vmatpush1.bf16.msra.mxu0 0
      %2299 = vmatprep.subr.bf16.mxu0 0
      %2300 = vmatpush1.bf16.msra.mxu0 0
      %2301 = vmatprep.subr.bf16.mxu0 0
      %2302 = vmatpush1.bf16.msra.mxu0 0
      %2303 = vmatprep.subr.bf16.mxu0 0
      %2304 = vmatpush1.bf16.msra.mxu0 0
      %2305 = vmatprep.subr.bf16.mxu0 0
      %2306 = vmatpush1.bf16.msra.mxu0 0
      %2307 = vmatprep.subr.bf16.mxu0 0
      %2308 = vmatpush1.bf16.msra.mxu0 0
      %2309 = vmatprep.subr.bf16.mxu0 0
      %2310 = vmatpush1.bf16.msra.mxu0 0
      %2311 = vmatprep.mubr.bf16.mxu0 0
      %2312 = vmatmul.mubr.bf16.gmra.mrb[0].mxu0 %v593
      %v2313 = vpop.f32.mrb[0].mxu0
      %v2314 = vadd.f32 %v2253, %v2313
      %v2315 = vpop.f32.mrb[0].mxu0
      %v2316 = vpop.f32.mrb[0].mxu0
      %v2317 = vpop.f32.mrb[0].mxu0
      %2318 = vdwg.mxu0
      %v2319 = vpack.c.bf16 %v2152, %v2152
      %v2320 = vpack.c.bf16 %v2233, %v2233
      %v2322 = vsel %vm716, %v2319, 0
      %v2325 = vsel %vm716, %v2320, 0
      %2327 = vmatprep.subr.bf16.mxu0 0
      %2328 = vmatpush1.bf16.xpose.msra.mxu0 %v2325
      %2329 = vmatprep.subr.bf16.mxu0 0
      %2330 = vmatpush1.bf16.xpose.msra.mxu0 0
      %2331 = vmatprep.subr.bf16.mxu0 0
      %2332 = vmatpush1.bf16.xpose.msra.mxu0 0
      %2333 = vmatprep.subr.bf16.mxu0 0
      %2334 = vmatpush1.bf16.xpose.msra.mxu0 0
      %2335 = vmatprep.subr.bf16.mxu0 0
      %2336 = vmatpush1.bf16.xpose.msra.mxu0 0
      %2337 = vmatprep.subr.bf16.mxu0 0
      %2338 = vmatpush1.bf16.xpose.msra.mxu0 0
      %2339 = vmatprep.subr.bf16.mxu0 0
      %2340 = vmatpush1.bf16.xpose.msra.mxu0 0
      %2341 = vmatprep.subr.bf16.mxu0 0
      %2342 = vmatpush1.bf16.xpose.msra.mxu0 0
      %2343 = vmatprep.subr.bf16.mxu0 0
      %2344 = vmatpush1.bf16.xpose.msra.mxu0 0
      %2345 = vmatprep.subr.bf16.mxu0 0
      %2346 = vmatpush1.bf16.xpose.msra.mxu0 0
      %2347 = vmatprep.subr.bf16.mxu0 0
      %2348 = vmatpush1.bf16.xpose.msra.mxu0 0
      %2349 = vmatprep.subr.bf16.mxu0 0
      %2350 = vmatpush1.bf16.xpose.msra.mxu0 0
      %2351 = vmatprep.subr.bf16.mxu0 0
      %2352 = vmatpush1.bf16.xpose.msra.mxu0 0
      %2353 = vmatprep.subr.bf16.mxu0 0
      %2354 = vmatpush1.bf16.xpose.msra.mxu0 0
      %2355 = vmatprep.subr.bf16.mxu0 0
      %2356 = vmatpush1.bf16.xpose.msra.mxu0 0
      %2357 = vmatprep.subr.bf16.mxu0 0
      %2358 = vmatpush1.bf16.xpose.msra.mxu0 0
      %2359 = vmatprep.mubr.bf16.mxu0 0
      %2360 = vmatmul.mubr.bf16.gmra.mrb[0].mxu0 %v2322
      %v2361 = vpop.f32.mrb[0].mxu0
      %v2362 = vadd.f32 0.0, %v2361
      %v2363 = vpop.f32.mrb[0].mxu0
      %v2364 = vpop.f32.mrb[0].mxu0
      %v2365 = vpop.f32.mrb[0].mxu0
      %2366 = vdwg.mxu0
      %v2367 = vmul.f32 %v2362, 0.35355338
      %v2368 = vsel %vm716, %v2367, -inf
      %2369 = vmax.xlane.f32.xlu0 %v2368
      %v2370 = vpop.xlane.xlu0 %2369
      %v2371 = vsub.f32 %v2367, %v2370
      %v2372 = vmul.f32 %v2371, 1.442695
      %v2373 = vpow.pop %v2372
      %v2374 = vsel %vm716, %v2373, 0.0
      %2375 = vadd.xlane.f32.xlu0 %v2374
      %v2376 = vpop.xlane.xlu0 %2375
      %v2377 = vrcp.pop %v2376
      %v2378 = vmul.f32 %v2373, %v2377
      %v2379 = vpack.c.bf16 %v2378, %v2378
      %v2380 = vpack.c.bf16 %v2314, %v2314
      %v2382 = vsel %vm716, %v2379, 0
      %v2385 = vsel %vm780, %v2380, 0
      %2387 = vmatprep.subr.bf16.mxu0 0
      %2388 = vmatpush1.bf16.msra.mxu0 %v2385
      %2389 = vmatprep.subr.bf16.mxu0 0
      %2390 = vmatpush1.bf16.msra.mxu0 0
      %2391 = vmatprep.subr.bf16.mxu0 0
      %2392 = vmatpush1.bf16.msra.mxu0 0
      %2393 = vmatprep.subr.bf16.mxu0 0
      %2394 = vmatpush1.bf16.msra.mxu0 0
      %2395 = vmatprep.subr.bf16.mxu0 0
      %2396 = vmatpush1.bf16.msra.mxu0 0
      %2397 = vmatprep.subr.bf16.mxu0 0
      %2398 = vmatpush1.bf16.msra.mxu0 0
      %2399 = vmatprep.subr.bf16.mxu0 0
      %2400 = vmatpush1.bf16.msra.mxu0 0
      %2401 = vmatprep.subr.bf16.mxu0 0
      %2402 = vmatpush1.bf16.msra.mxu0 0
      %2403 = vmatprep.subr.bf16.mxu0 0
      %2404 = vmatpush1.bf16.msra.mxu0 0
      %2405 = vmatprep.subr.bf16.mxu0 0
      %2406 = vmatpush1.bf16.msra.mxu0 0
      %2407 = vmatprep.subr.bf16.mxu0 0
      %2408 = vmatpush1.bf16.msra.mxu0 0
      %2409 = vmatprep.subr.bf16.mxu0 0
      %2410 = vmatpush1.bf16.msra.mxu0 0
      %2411 = vmatprep.subr.bf16.mxu0 0
      %2412 = vmatpush1.bf16.msra.mxu0 0
      %2413 = vmatprep.subr.bf16.mxu0 0
      %2414 = vmatpush1.bf16.msra.mxu0 0
      %2415 = vmatprep.subr.bf16.mxu0 0
      %2416 = vmatpush1.bf16.msra.mxu0 0
      %2417 = vmatprep.subr.bf16.mxu0 0
      %2418 = vmatpush1.bf16.msra.mxu0 0
      %2419 = vmatprep.mubr.bf16.mxu0 0
      %2420 = vmatmul.mubr.bf16.gmra.mrb[0].mxu0 %v2382
      %v2421 = vpop.f32.mrb[0].mxu0
      %v2422 = vadd.f32 0.0, %v2421
      %v2423 = vpop.f32.mrb[0].mxu0
      %v2424 = vpop.f32.mrb[0].mxu0
      %v2425 = vpop.f32.mrb[0].mxu0
      %2426 = vdwg.mxu0
      %v2427 = vpack.c.bf16 %v2422, %v2422
      %s2428 = scalar_lea.vmem %s8, 16
      %v2429 = vld [vmem:[%s2428] sm:$0xf]
      %v2431 = vsel %vm716, %v2427, 0
      %v2434 = vsel %vm780, %v2429, 0
      %2436 = vmatprep.subr.bf16.mxu0 0
      %2437 = vmatpush1.bf16.msra.mxu0 %v2434
      %2438 = vmatprep.subr.bf16.mxu0 0
      %2439 = vmatpush1.bf16.msra.mxu0 0
      %2440 = vmatprep.subr.bf16.mxu0 0
      %2441 = vmatpush1.bf16.msra.mxu0 0
      %2442 = vmatprep.subr.bf16.mxu0 0
      %2443 = vmatpush1.bf16.msra.mxu0 0
      %2444 = vmatprep.subr.bf16.mxu0 0
      %2445 = vmatpush1.bf16.msra.mxu0 0
      %2446 = vmatprep.subr.bf16.mxu0 0
      %2447 = vmatpush1.bf16.msra.mxu0 0
      %2448 = vmatprep.subr.bf16.mxu0 0
      %2449 = vmatpush1.bf16.msra.mxu0 0
      %2450 = vmatprep.subr.bf16.mxu0 0
      %2451 = vmatpush1.bf16.msra.mxu0 0
      %2452 = vmatprep.subr.bf16.mxu0 0
      %2453 = vmatpush1.bf16.msra.mxu0 0
      %2454 = vmatprep.subr.bf16.mxu0 0
      %2455 = vmatpush1.bf16.msra.mxu0 0
      %2456 = vmatprep.subr.bf16.mxu0 0
      %2457 = vmatpush1.bf16.msra.mxu0 0
      %2458 = vmatprep.subr.bf16.mxu0 0
      %2459 = vmatpush1.bf16.msra.mxu0 0
      %2460 = vmatprep.subr.bf16.mxu0 0
      %2461 = vmatpush1.bf16.msra.mxu0 0
      %2462 = vmatprep.subr.bf16.mxu0 0
      %2463 = vmatpush1.bf16.msra.mxu0 0
      %2464 = vmatprep.subr.bf16.mxu0 0
      %2465 = vmatpush1.bf16.msra.mxu0 0
      %2466 = vmatprep.subr.bf16.mxu0 0
      %2467 = vmatpush1.bf16.msra.mxu0 0
      %2468 = vmatprep.mubr.bf16.mxu0 0
      %2469 = vmatmul.mubr.bf16.gmra.mrb[0].mxu0 %v2431
      %v2470 = vpop.f32.mrb[0].mxu0
      %v2471 = vadd.f32 0.0, %v2470
      %v2472 = vpop.f32.mrb[0].mxu0
      %v2473 = vpop.f32.mrb[0].mxu0
      %v2474 = vpop.f32.mrb[0].mxu0
      %2475 = vdwg.mxu0
      %v2476 = vadd.f32 %v2075, %v2471
      %s2477 = scalar_lea.vmem %s2, 160
      %v2478 = vld [vmem:[%s2477] sm:$0xf]
      %v2479 = vld [vmem:[%s2477 + $0x4] sm:$0xf]
      %v2480 = vld [vmem:[%s2477 + $0x8] sm:$0xf]
      %v2481 = vld [vmem:[%s2477 + $0xc] sm:$0xf]
      %v2482 = vld [vmem:[%s2477 + $0x10] sm:$0xf]
      %v2483 = vld [vmem:[%s2477 + $0x14] sm:$0xf]
      %v2484 = vld [vmem:[%s2477 + $0x18] sm:$0xf]
      %v2485 = vld [vmem:[%s2477 + $0x1c] sm:$0xf]
      %s2486 = scalar_lea.vmem %s3, 5
      %v2487 = vld [vmem:[%s2486] sm:$0x1]
      %v2489 = vlaneseq
      %v2490 = vshrl.u32 %v2489, 7
      %v2491 = vsub.s32 0, %v2490
      %v2492 = vrot.slane %v2487, %v2491
      %v2502 = vunpack.c.l.b16 %v2478
      %v2503 = vunpack.c.l.b16 %v2479
      %v2504 = vunpack.c.l.b16 %v2480
      %v2505 = vunpack.c.l.b16 %v2481
      %v2506 = vunpack.c.l.b16 %v2482
      %v2507 = vunpack.c.l.b16 %v2483
      %v2508 = vunpack.c.l.b16 %v2484
      %v2509 = vunpack.c.l.b16 %v2485
      %v2510 = vpack.c.b16 %v2503, %v2502
      %v2511 = vpack.c.b16 %v2505, %v2504
      %v2512 = vpack.c.b16 %v2507, %v2506
      %v2513 = vpack.c.b16 %v2509, %v2508
      %2518 = vmatprep.subr.bf16.mxu0 0
      %2519 = vmatpush1.bf16.msra.mxu0 %v2510
      %2520 = vmatprep.subr.bf16.mxu0 0
      %2521 = vmatpush1.bf16.msra.mxu0 %v2511
      %2522 = vmatprep.subr.bf16.mxu0 0
      %2523 = vmatpush1.bf16.msra.mxu0 %v2512
      %2524 = vmatprep.subr.bf16.mxu0 0
      %2525 = vmatpush1.bf16.msra.mxu0 %v2513
      %2526 = vmatprep.subr.bf16.mxu0 0
      %2527 = vmatpush1.bf16.msra.mxu0 0
      %2528 = vmatprep.subr.bf16.mxu0 0
      %2529 = vmatpush1.bf16.msra.mxu0 0
      %2530 = vmatprep.subr.bf16.mxu0 0
      %2531 = vmatpush1.bf16.msra.mxu0 0
      %2532 = vmatprep.subr.bf16.mxu0 0
      %2533 = vmatpush1.bf16.msra.mxu0 0
      %2534 = vmatprep.subr.bf16.mxu0 0
      %2535 = vmatpush1.bf16.msra.mxu0 0
      %2536 = vmatprep.subr.bf16.mxu0 0
      %2537 = vmatpush1.bf16.msra.mxu0 0
      %2538 = vmatprep.subr.bf16.mxu0 0
      %2539 = vmatpush1.bf16.msra.mxu0 0
      %2540 = vmatprep.subr.bf16.mxu0 0
      %2541 = vmatpush1.bf16.msra.mxu0 0
      %2542 = vmatprep.subr.bf16.mxu0 0
      %2543 = vmatpush1.bf16.msra.mxu0 0
      %2544 = vmatprep.subr.bf16.mxu0 0
      %2545 = vmatpush1.bf16.msra.mxu0 0
      %2546 = vmatprep.subr.bf16.mxu0 0
      %2547 = vmatpush1.bf16.msra.mxu0 0
      %2548 = vmatprep.subr.bf16.mxu0 0
      %2549 = vmatpush1.bf16.msra.mxu0 0
      %2550 = vmatprep.mubr.bf16.mxu0 0
      %2551 = vmatmul.mubr.bf16.gmra.mrb[0].mxu0 %v511
      %v2552 = vpop.f32.mrb[0].mxu0
      %v2553 = vadd.f32 %v2492, %v2552
      %v2554 = vpop.f32.mrb[0].mxu0
      %v2555 = vpop.f32.mrb[0].mxu0
      %v2556 = vpop.f32.mrb[0].mxu0
      %2557 = vdwg.mxu0
      %s2558 = scalar_lea.vmem %s4, 160
      %v2559 = vld [vmem:[%s2558] sm:$0xf]
      %v2560 = vld [vmem:[%s2558 + $0x4] sm:$0xf]
      %v2561 = vld [vmem:[%s2558 + $0x8] sm:$0xf]
      %v2562 = vld [vmem:[%s2558 + $0xc] sm:$0xf]
      %v2563 = vld [vmem:[%s2558 + $0x10] sm:$0xf]
      %v2564 = vld [vmem:[%s2558 + $0x14] sm:$0xf]
      %v2565 = vld [vmem:[%s2558 + $0x18] sm:$0xf]
      %v2566 = vld [vmem:[%s2558 + $0x1c] sm:$0xf]
      %s2567 = scalar_lea.vmem %s5, 5
      %v2568 = vld [vmem:[%s2567] sm:$0x1]
      %v2570 = vlaneseq
      %v2571 = vshrl.u32 %v2570, 7
      %v2572 = vsub.s32 0, %v2571
      %v2573 = vrot.slane %v2568, %v2572
      %v2583 = vunpack.c.l.b16 %v2559
      %v2584 = vunpack.c.l.b16 %v2560
      %v2585 = vunpack.c.l.b16 %v2561
      %v2586 = vunpack.c.l.b16 %v2562
      %v2587 = vunpack.c.l.b16 %v2563
      %v2588 = vunpack.c.l.b16 %v2564
      %v2589 = vunpack.c.l.b16 %v2565
      %v2590 = vunpack.c.l.b16 %v2566
      %v2591 = vpack.c.b16 %v2584, %v2583
      %v2592 = vpack.c.b16 %v2586, %v2585
      %v2593 = vpack.c.b16 %v2588, %v2587
      %v2594 = vpack.c.b16 %v2590, %v2589
      %2599 = vmatprep.subr.bf16.mxu0 0
      %2600 = vmatpush1.bf16.msra.mxu0 %v2591
      %2601 = vmatprep.subr.bf16.mxu0 0
      %2602 = vmatpush1.bf16.msra.mxu0 %v2592
      %2603 = vmatprep.subr.bf16.mxu0 0
      %2604 = vmatpush1.bf16.msra.mxu0 %v2593
      %2605 = vmatprep.subr.bf16.mxu0 0
      %2606 = vmatpush1.bf16.msra.mxu0 %v2594
      %2607 = vmatprep.subr.bf16.mxu0 0
      %2608 = vmatpush1.bf16.msra.mxu0 0
      %2609 = vmatprep.subr.bf16.mxu0 0
      %2610 = vmatpush1.bf16.msra.mxu0 0
      %2611 = vmatprep.subr.bf16.mxu0 0
      %2612 = vmatpush1.bf16.msra.mxu0 0
      %2613 = vmatprep.subr.bf16.mxu0 0
      %2614 = vmatpush1.bf16.msra.mxu0 0
      %2615 = vmatprep.subr.bf16.mxu0 0
      %2616 = vmatpush1.bf16.msra.mxu0 0
      %2617 = vmatprep.subr.bf16.mxu0 0
      %2618 = vmatpush1.bf16.msra.mxu0 0
      %2619 = vmatprep.subr.bf16.mxu0 0
      %2620 = vmatpush1.bf16.msra.mxu0 0
      %2621 = vmatprep.subr.bf16.mxu0 0
      %2622 = vmatpush1.bf16.msra.mxu0 0
      %2623 = vmatprep.subr.bf16.mxu0 0
      %2624 = vmatpush1.bf16.msra.mxu0 0
      %2625 = vmatprep.subr.bf16.mxu0 0
      %2626 = vmatpush1.bf16.msra.mxu0 0
      %2627 = vmatprep.subr.bf16.mxu0 0
      %2628 = vmatpush1.bf16.msra.mxu0 0
      %2629 = vmatprep.subr.bf16.mxu0 0
      %2630 = vmatpush1.bf16.msra.mxu0 0
      %2631 = vmatprep.mubr.bf16.mxu0 0
      %2632 = vmatmul.mubr.bf16.gmra.mrb[0].mxu0 %v593
      %v2633 = vpop.f32.mrb[0].mxu0
      %v2634 = vadd.f32 %v2573, %v2633
      %v2635 = vpop.f32.mrb[0].mxu0
      %v2636 = vpop.f32.mrb[0].mxu0
      %v2637 = vpop.f32.mrb[0].mxu0
      %2638 = vdwg.mxu0
      %s2639 = scalar_lea.vmem %s6, 160
      %v2640 = vld [vmem:[%s2639] sm:$0xf]
      %v2641 = vld [vmem:[%s2639 + $0x4] sm:$0xf]
      %v2642 = vld [vmem:[%s2639 + $0x8] sm:$0xf]
      %v2643 = vld [vmem:[%s2639 + $0xc] sm:$0xf]
      %v2644 = vld [vmem:[%s2639 + $0x10] sm:$0xf]
      %v2645 = vld [vmem:[%s2639 + $0x14] sm:$0xf]
      %v2646 = vld [vmem:[%s2639 + $0x18] sm:$0xf]
      %v2647 = vld [vmem:[%s2639 + $0x1c] sm:$0xf]
      %s2648 = scalar_lea.vmem %s7, 5
      %v2649 = vld [vmem:[%s2648] sm:$0x1]
      %v2651 = vlaneseq
      %v2652 = vshrl.u32 %v2651, 7
      %v2653 = vsub.s32 0, %v2652
      %v2654 = vrot.slane %v2649, %v2653
      %v2664 = vunpack.c.l.b16 %v2640
      %v2665 = vunpack.c.l.b16 %v2641
      %v2666 = vunpack.c.l.b16 %v2642
      %v2667 = vunpack.c.l.b16 %v2643
      %v2668 = vunpack.c.l.b16 %v2644
      %v2669 = vunpack.c.l.b16 %v2645
      %v2670 = vunpack.c.l.b16 %v2646
      %v2671 = vunpack.c.l.b16 %v2647
      %v2672 = vpack.c.b16 %v2665, %v2664
      %v2673 = vpack.c.b16 %v2667, %v2666
      %v2674 = vpack.c.b16 %v2669, %v2668
      %v2675 = vpack.c.b16 %v2671, %v2670
      %2680 = vmatprep.subr.bf16.mxu0 0
      %2681 = vmatpush1.bf16.msra.mxu0 %v2672
      %2682 = vmatprep.subr.bf16.mxu0 0
      %2683 = vmatpush1.bf16.msra.mxu0 %v2673
      %2684 = vmatprep.subr.bf16.mxu0 0
      %2685 = vmatpush1.bf16.msra.mxu0 %v2674
      %2686 = vmatprep.subr.bf16.mxu0 0
      %2687 = vmatpush1.bf16.msra.mxu0 %v2675
      %2688 = vmatprep.subr.bf16.mxu0 0
      %2689 = vmatpush1.bf16.msra.mxu0 0
      %2690 = vmatprep.subr.bf16.mxu0 0
      %2691 = vmatpush1.bf16.msra.mxu0 0
      %2692 = vmatprep.subr.bf16.mxu0 0
      %2693 = vmatpush1.bf16.msra.mxu0 0
      %2694 = vmatprep.subr.bf16.mxu0 0
      %2695 = vmatpush1.bf16.msra.mxu0 0
      %2696 = vmatprep.subr.bf16.mxu0 0
      %2697 = vmatpush1.bf16.msra.mxu0 0
      %2698 = vmatprep.subr.bf16.mxu0 0
      %2699 = vmatpush1.bf16.msra.mxu0 0
      %2700 = vmatprep.subr.bf16.mxu0 0
      %2701 = vmatpush1.bf16.msra.mxu0 0
      %2702 = vmatprep.subr.bf16.mxu0 0
      %2703 = vmatpush1.bf16.msra.mxu0 0
      %2704 = vmatprep.subr.bf16.mxu0 0
      %2705 = vmatpush1.bf16.msra.mxu0 0
      %2706 = vmatprep.subr.bf16.mxu0 0
      %2707 = vmatpush1.bf16.msra.mxu0 0
      %2708 = vmatprep.subr.bf16.mxu0 0
      %2709 = vmatpush1.bf16.msra.mxu0 0
      %2710 = vmatprep.subr.bf16.mxu0 0
      %2711 = vmatpush1.bf16.msra.mxu0 0
      %2712 = vmatprep.mubr.bf16.mxu0 0
      %2713 = vmatmul.mubr.bf16.gmra.mrb[0].mxu0 %v593
      %v2714 = vpop.f32.mrb[0].mxu0
      %v2715 = vadd.f32 %v2654, %v2714
      %v2716 = vpop.f32.mrb[0].mxu0
      %v2717 = vpop.f32.mrb[0].mxu0
      %v2718 = vpop.f32.mrb[0].mxu0
      %2719 = vdwg.mxu0
      %v2720 = vpack.c.bf16 %v2553, %v2553
      %v2721 = vpack.c.bf16 %v2634, %v2634
      %v2723 = vsel %vm716, %v2720, 0
      %v2726 = vsel %vm716, %v2721, 0
      %2728 = vmatprep.subr.bf16.mxu0 0
      %2729 = vmatpush1.bf16.xpose.msra.mxu0 %v2726
      %2730 = vmatprep.subr.bf16.mxu0 0
      %2731 = vmatpush1.bf16.xpose.msra.mxu0 0
      %2732 = vmatprep.subr.bf16.mxu0 0
      %2733 = vmatpush1.bf16.xpose.msra.mxu0 0
      %2734 = vmatprep.subr.bf16.mxu0 0
      %2735 = vmatpush1.bf16.xpose.msra.mxu0 0
      %2736 = vmatprep.subr.bf16.mxu0 0
      %2737 = vmatpush1.bf16.xpose.msra.mxu0 0
      %2738 = vmatprep.subr.bf16.mxu0 0
      %2739 = vmatpush1.bf16.xpose.msra.mxu0 0
      %2740 = vmatprep.subr.bf16.mxu0 0
      %2741 = vmatpush1.bf16.xpose.msra.mxu0 0
      %2742 = vmatprep.subr.bf16.mxu0 0
      %2743 = vmatpush1.bf16.xpose.msra.mxu0 0
      %2744 = vmatprep.subr.bf16.mxu0 0
      %2745 = vmatpush1.bf16.xpose.msra.mxu0 0
      %2746 = vmatprep.subr.bf16.mxu0 0
      %2747 = vmatpush1.bf16.xpose.msra.mxu0 0
      %2748 = vmatprep.subr.bf16.mxu0 0
      %2749 = vmatpush1.bf16.xpose.msra.mxu0 0
      %2750 = vmatprep.subr.bf16.mxu0 0
      %2751 = vmatpush1.bf16.xpose.msra.mxu0 0
      %2752 = vmatprep.subr.bf16.mxu0 0
      %2753 = vmatpush1.bf16.xpose.msra.mxu0 0
      %2754 = vmatprep.subr.bf16.mxu0 0
      %2755 = vmatpush1.bf16.xpose.msra.mxu0 0
      %2756 = vmatprep.subr.bf16.mxu0 0
      %2757 = vmatpush1.bf16.xpose.msra.mxu0 0
      %2758 = vmatprep.subr.bf16.mxu0 0
      %2759 = vmatpush1.bf16.xpose.msra.mxu0 0
      %2760 = vmatprep.mubr.bf16.mxu0 0
      %2761 = vmatmul.mubr.bf16.gmra.mrb[0].mxu0 %v2723
      %v2762 = vpop.f32.mrb[0].mxu0
      %v2763 = vadd.f32 0.0, %v2762
      %v2764 = vpop.f32.mrb[0].mxu0
      %v2765 = vpop.f32.mrb[0].mxu0
      %v2766 = vpop.f32.mrb[0].mxu0
      %2767 = vdwg.mxu0
      %v2768 = vmul.f32 %v2763, 0.35355338
      %v2769 = vsel %vm716, %v2768, -inf
      %2770 = vmax.xlane.f32.xlu0 %v2769
      %v2771 = vpop.xlane.xlu0 %2770
      %v2772 = vsub.f32 %v2768, %v2771
      %v2773 = vmul.f32 %v2772, 1.442695
      %v2774 = vpow.pop %v2773
      %v2775 = vsel %vm716, %v2774, 0.0
      %2776 = vadd.xlane.f32.xlu0 %v2775
      %v2777 = vpop.xlane.xlu0 %2776
      %v2778 = vrcp.pop %v2777
      %v2779 = vmul.f32 %v2774, %v2778
      %v2780 = vpack.c.bf16 %v2779, %v2779
      %v2781 = vpack.c.bf16 %v2715, %v2715
      %v2783 = vsel %vm716, %v2780, 0
      %v2786 = vsel %vm780, %v2781, 0
      %2788 = vmatprep.subr.bf16.mxu0 0
      %2789 = vmatpush1.bf16.msra.mxu0 %v2786
      %2790 = vmatprep.subr.bf16.mxu0 0
      %2791 = vmatpush1.bf16.msra.mxu0 0
      %2792 = vmatprep.subr.bf16.mxu0 0
      %2793 = vmatpush1.bf16.msra.mxu0 0
      %2794 = vmatprep.subr.bf16.mxu0 0
      %2795 = vmatpush1.bf16.msra.mxu0 0
      %2796 = vmatprep.subr.bf16.mxu0 0
      %2797 = vmatpush1.bf16.msra.mxu0 0
      %2798 = vmatprep.subr.bf16.mxu0 0
      %2799 = vmatpush1.bf16.msra.mxu0 0
      %2800 = vmatprep.subr.bf16.mxu0 0
      %2801 = vmatpush1.bf16.msra.mxu0 0
      %2802 = vmatprep.subr.bf16.mxu0 0
      %2803 = vmatpush1.bf16.msra.mxu0 0
      %2804 = vmatprep.subr.bf16.mxu0 0
      %2805 = vmatpush1.bf16.msra.mxu0 0
      %2806 = vmatprep.subr.bf16.mxu0 0
      %2807 = vmatpush1.bf16.msra.mxu0 0
      %2808 = vmatprep.subr.bf16.mxu0 0
      %2809 = vmatpush1.bf16.msra.mxu0 0
      %2810 = vmatprep.subr.bf16.mxu0 0
      %2811 = vmatpush1.bf16.msra.mxu0 0
      %2812 = vmatprep.subr.bf16.mxu0 0
      %2813 = vmatpush1.bf16.msra.mxu0 0
      %2814 = vmatprep.subr.bf16.mxu0 0
      %2815 = vmatpush1.bf16.msra.mxu0 0
      %2816 = vmatprep.subr.bf16.mxu0 0
      %2817 = vmatpush1.bf16.msra.mxu0 0
      %2818 = vmatprep.subr.bf16.mxu0 0
      %2819 = vmatpush1.bf16.msra.mxu0 0
      %2820 = vmatprep.mubr.bf16.mxu0 0
      %2821 = vmatmul.mubr.bf16.gmra.mrb[0].mxu0 %v2783
      %v2822 = vpop.f32.mrb[0].mxu0
      %v2823 = vadd.f32 0.0, %v2822
      %v2824 = vpop.f32.mrb[0].mxu0
      %v2825 = vpop.f32.mrb[0].mxu0
      %v2826 = vpop.f32.mrb[0].mxu0
      %2827 = vdwg.mxu0
      %v2828 = vpack.c.bf16 %v2823, %v2823
      %s2829 = scalar_lea.vmem %s8, 20
      %v2830 = vld [vmem:[%s2829] sm:$0xf]
      %v2832 = vsel %vm716, %v2828, 0
      %v2835 = vsel %vm780, %v2830, 0
      %2837 = vmatprep.subr.bf16.mxu0 0
      %2838 = vmatpush1.bf16.msra.mxu0 %v2835
      %2839 = vmatprep.subr.bf16.mxu0 0
      %2840 = vmatpush1.bf16.msra.mxu0 0
      %2841 = vmatprep.subr.bf16.mxu0 0
      %2842 = vmatpush1.bf16.msra.mxu0 0
      %2843 = vmatprep.subr.bf16.mxu0 0
      %2844 = vmatpush1.bf16.msra.mxu0 0
      %2845 = vmatprep.subr.bf16.mxu0 0
      %2846 = vmatpush1.bf16.msra.mxu0 0
      %2847 = vmatprep.subr.bf16.mxu0 0
      %2848 = vmatpush1.bf16.msra.mxu0 0
      %2849 = vmatprep.subr.bf16.mxu0 0
      %2850 = vmatpush1.bf16.msra.mxu0 0
      %2851 = vmatprep.subr.bf16.mxu0 0
      %2852 = vmatpush1.bf16.msra.mxu0 0
      %2853 = vmatprep.subr.bf16.mxu0 0
      %2854 = vmatpush1.bf16.msra.mxu0 0
      %2855 = vmatprep.subr.bf16.mxu0 0
      %2856 = vmatpush1.bf16.msra.mxu0 0
      %2857 = vmatprep.subr.bf16.mxu0 0
      %2858 = vmatpush1.bf16.msra.mxu0 0
      %2859 = vmatprep.subr.bf16.mxu0 0
      %2860 = vmatpush1.bf16.msra.mxu0 0
      %2861 = vmatprep.subr.bf16.mxu0 0
      %2862 = vmatpush1.bf16.msra.mxu0 0
      %2863 = vmatprep.subr.bf16.mxu0 0
      %2864 = vmatpush1.bf16.msra.mxu0 0
      %2865 = vmatprep.subr.bf16.mxu0 0
      %2866 = vmatpush1.bf16.msra.mxu0 0
      %2867 = vmatprep.subr.bf16.mxu0 0
      %2868 = vmatpush1.bf16.msra.mxu0 0
      %2869 = vmatprep.mubr.bf16.mxu0 0
      %2870 = vmatmul.mubr.bf16.gmra.mrb[0].mxu0 %v2832
      %v2871 = vpop.f32.mrb[0].mxu0
      %v2872 = vadd.f32 0.0, %v2871
      %v2873 = vpop.f32.mrb[0].mxu0
      %v2874 = vpop.f32.mrb[0].mxu0
      %v2875 = vpop.f32.mrb[0].mxu0
      %2876 = vdwg.mxu0
      %v2877 = vadd.f32 %v2476, %v2872
      %s2878 = scalar_lea.vmem %s2, 192
      %v2879 = vld [vmem:[%s2878] sm:$0xf]
      %v2880 = vld [vmem:[%s2878 + $0x4] sm:$0xf]
      %v2881 = vld [vmem:[%s2878 + $0x8] sm:$0xf]
      %v2882 = vld [vmem:[%s2878 + $0xc] sm:$0xf]
      %v2883 = vld [vmem:[%s2878 + $0x10] sm:$0xf]
      %v2884 = vld [vmem:[%s2878 + $0x14] sm:$0xf]
      %v2885 = vld [vmem:[%s2878 + $0x18] sm:$0xf]
      %v2886 = vld [vmem:[%s2878 + $0x1c] sm:$0xf]
      %s2887 = scalar_lea.vmem %s3, 6
      %v2888 = vld [vmem:[%s2887] sm:$0x1]
      %v2890 = vlaneseq
      %v2891 = vshrl.u32 %v2890, 7
      %v2892 = vsub.s32 0, %v2891
      %v2893 = vrot.slane %v2888, %v2892
      %v2903 = vunpack.c.l.b16 %v2879
      %v2904 = vunpack.c.l.b16 %v2880
      %v2905 = vunpack.c.l.b16 %v2881
      %v2906 = vunpack.c.l.b16 %v2882
      %v2907 = vunpack.c.l.b16 %v2883
      %v2908 = vunpack.c.l.b16 %v2884
      %v2909 = vunpack.c.l.b16 %v2885
      %v2910 = vunpack.c.l.b16 %v2886
      %v2911 = vpack.c.b16 %v2904, %v2903
      %v2912 = vpack.c.b16 %v2906, %v2905
      %v2913 = vpack.c.b16 %v2908, %v2907
      %v2914 = vpack.c.b16 %v2910, %v2909
      %2919 = vmatprep.subr.bf16.mxu0 0
      %2920 = vmatpush1.bf16.msra.mxu0 %v2911
      %2921 = vmatprep.subr.bf16.mxu0 0
      %2922 = vmatpush1.bf16.msra.mxu0 %v2912
      %2923 = vmatprep.subr.bf16.mxu0 0
      %2924 = vmatpush1.bf16.msra.mxu0 %v2913
      %2925 = vmatprep.subr.bf16.mxu0 0
      %2926 = vmatpush1.bf16.msra.mxu0 %v2914
      %2927 = vmatprep.subr.bf16.mxu0 0
      %2928 = vmatpush1.bf16.msra.mxu0 0
      %2929 = vmatprep.subr.bf16.mxu0 0
      %2930 = vmatpush1.bf16.msra.mxu0 0
      %2931 = vmatprep.subr.bf16.mxu0 0
      %2932 = vmatpush1.bf16.msra.mxu0 0
      %2933 = vmatprep.subr.bf16.mxu0 0
      %2934 = vmatpush1.bf16.msra.mxu0 0
      %2935 = vmatprep.subr.bf16.mxu0 0
      %2936 = vmatpush1.bf16.msra.mxu0 0
      %2937 = vmatprep.subr.bf16.mxu0 0
      %2938 = vmatpush1.bf16.msra.mxu0 0
      %2939 = vmatprep.subr.bf16.mxu0 0
      %2940 = vmatpush1.bf16.msra.mxu0 0
      %2941 = vmatprep.subr.bf16.mxu0 0
      %2942 = vmatpush1.bf16.msra.mxu0 0
      %2943 = vmatprep.subr.bf16.mxu0 0
      %2944 = vmatpush1.bf16.msra.mxu0 0
      %2945 = vmatprep.subr.bf16.mxu0 0
      %2946 = vmatpush1.bf16.msra.mxu0 0
      %2947 = vmatprep.subr.bf16.mxu0 0
      %2948 = vmatpush1.bf16.msra.mxu0 0
      %2949 = vmatprep.subr.bf16.mxu0 0
      %2950 = vmatpush1.bf16.msra.mxu0 0
      %2951 = vmatprep.mubr.bf16.mxu0 0
      %2952 = vmatmul.mubr.bf16.gmra.mrb[0].mxu0 %v511
      %v2953 = vpop.f32.mrb[0].mxu0
      %v2954 = vadd.f32 %v2893, %v2953
      %v2955 = vpop.f32.mrb[0].mxu0
      %v2956 = vpop.f32.mrb[0].mxu0
      %v2957 = vpop.f32.mrb[0].mxu0
      %2958 = vdwg.mxu0
      %s2959 = scalar_lea.vmem %s4, 192
      %v2960 = vld [vmem:[%s2959] sm:$0xf]
      %v2961 = vld [vmem:[%s2959 + $0x4] sm:$0xf]
      %v2962 = vld [vmem:[%s2959 + $0x8] sm:$0xf]
      %v2963 = vld [vmem:[%s2959 + $0xc] sm:$0xf]
      %v2964 = vld [vmem:[%s2959 + $0x10] sm:$0xf]
      %v2965 = vld [vmem:[%s2959 + $0x14] sm:$0xf]
      %v2966 = vld [vmem:[%s2959 + $0x18] sm:$0xf]
      %v2967 = vld [vmem:[%s2959 + $0x1c] sm:$0xf]
      %s2968 = scalar_lea.vmem %s5, 6
      %v2969 = vld [vmem:[%s2968] sm:$0x1]
      %v2971 = vlaneseq
      %v2972 = vshrl.u32 %v2971, 7
      %v2973 = vsub.s32 0, %v2972
      %v2974 = vrot.slane %v2969, %v2973
      %v2984 = vunpack.c.l.b16 %v2960
      %v2985 = vunpack.c.l.b16 %v2961
      %v2986 = vunpack.c.l.b16 %v2962
      %v2987 = vunpack.c.l.b16 %v2963
      %v2988 = vunpack.c.l.b16 %v2964
      %v2989 = vunpack.c.l.b16 %v2965
      %v2990 = vunpack.c.l.b16 %v2966
      %v2991 = vunpack.c.l.b16 %v2967
      %v2992 = vpack.c.b16 %v2985, %v2984
      %v2993 = vpack.c.b16 %v2987, %v2986
      %v2994 = vpack.c.b16 %v2989, %v2988
      %v2995 = vpack.c.b16 %v2991, %v2990
      %3000 = vmatprep.subr.bf16.mxu0 0
      %3001 = vmatpush1.bf16.msra.mxu0 %v2992
      %3002 = vmatprep.subr.bf16.mxu0 0
      %3003 = vmatpush1.bf16.msra.mxu0 %v2993
      %3004 = vmatprep.subr.bf16.mxu0 0
      %3005 = vmatpush1.bf16.msra.mxu0 %v2994
      %3006 = vmatprep.subr.bf16.mxu0 0
      %3007 = vmatpush1.bf16.msra.mxu0 %v2995
      %3008 = vmatprep.subr.bf16.mxu0 0
      %3009 = vmatpush1.bf16.msra.mxu0 0
      %3010 = vmatprep.subr.bf16.mxu0 0
      %3011 = vmatpush1.bf16.msra.mxu0 0
      %3012 = vmatprep.subr.bf16.mxu0 0
      %3013 = vmatpush1.bf16.msra.mxu0 0
      %3014 = vmatprep.subr.bf16.mxu0 0
      %3015 = vmatpush1.bf16.msra.mxu0 0
      %3016 = vmatprep.subr.bf16.mxu0 0
      %3017 = vmatpush1.bf16.msra.mxu0 0
      %3018 = vmatprep.subr.bf16.mxu0 0
      %3019 = vmatpush1.bf16.msra.mxu0 0
      %3020 = vmatprep.subr.bf16.mxu0 0
      %3021 = vmatpush1.bf16.msra.mxu0 0
      %3022 = vmatprep.subr.bf16.mxu0 0
      %3023 = vmatpush1.bf16.msra.mxu0 0
      %3024 = vmatprep.subr.bf16.mxu0 0
      %3025 = vmatpush1.bf16.msra.mxu0 0
      %3026 = vmatprep.subr.bf16.mxu0 0
      %3027 = vmatpush1.bf16.msra.mxu0 0
      %3028 = vmatprep.subr.bf16.mxu0 0
      %3029 = vmatpush1.bf16.msra.mxu0 0
      %3030 = vmatprep.subr.bf16.mxu0 0
      %3031 = vmatpush1.bf16.msra.mxu0 0
      %3032 = vmatprep.mubr.bf16.mxu0 0
      %3033 = vmatmul.mubr.bf16.gmra.mrb[0].mxu0 %v593
      %v3034 = vpop.f32.mrb[0].mxu0
      %v3035 = vadd.f32 %v2974, %v3034
      %v3036 = vpop.f32.mrb[0].mxu0
      %v3037 = vpop.f32.mrb[0].mxu0
      %v3038 = vpop.f32.mrb[0].mxu0
      %3039 = vdwg.mxu0
      %s3040 = scalar_lea.vmem %s6, 192
      %v3041 = vld [vmem:[%s3040] sm:$0xf]
      %v3042 = vld [vmem:[%s3040 + $0x4] sm:$0xf]
      %v3043 = vld [vmem:[%s3040 + $0x8] sm:$0xf]
      %v3044 = vld [vmem:[%s3040 + $0xc] sm:$0xf]
      %v3045 = vld [vmem:[%s3040 + $0x10] sm:$0xf]
      %v3046 = vld [vmem:[%s3040 + $0x14] sm:$0xf]
      %v3047 = vld [vmem:[%s3040 + $0x18] sm:$0xf]
      %v3048 = vld [vmem:[%s3040 + $0x1c] sm:$0xf]
      %s3049 = scalar_lea.vmem %s7, 6
      %v3050 = vld [vmem:[%s3049] sm:$0x1]
      %v3052 = vlaneseq
      %v3053 = vshrl.u32 %v3052, 7
      %v3054 = vsub.s32 0, %v3053
      %v3055 = vrot.slane %v3050, %v3054
      %v3065 = vunpack.c.l.b16 %v3041
      %v3066 = vunpack.c.l.b16 %v3042
      %v3067 = vunpack.c.l.b16 %v3043
      %v3068 = vunpack.c.l.b16 %v3044
      %v3069 = vunpack.c.l.b16 %v3045
      %v3070 = vunpack.c.l.b16 %v3046
      %v3071 = vunpack.c.l.b16 %v3047
      %v3072 = vunpack.c.l.b16 %v3048
      %v3073 = vpack.c.b16 %v3066, %v3065
      %v3074 = vpack.c.b16 %v3068, %v3067
      %v3075 = vpack.c.b16 %v3070, %v3069
      %v3076 = vpack.c.b16 %v3072, %v3071
      %3081 = vmatprep.subr.bf16.mxu0 0
      %3082 = vmatpush1.bf16.msra.mxu0 %v3073
      %3083 = vmatprep.subr.bf16.mxu0 0
      %3084 = vmatpush1.bf16.msra.mxu0 %v3074
      %3085 = vmatprep.subr.bf16.mxu0 0
      %3086 = vmatpush1.bf16.msra.mxu0 %v3075
      %3087 = vmatprep.subr.bf16.mxu0 0
      %3088 = vmatpush1.bf16.msra.mxu0 %v3076
      %3089 = vmatprep.subr.bf16.mxu0 0
      %3090 = vmatpush1.bf16.msra.mxu0 0
      %3091 = vmatprep.subr.bf16.mxu0 0
      %3092 = vmatpush1.bf16.msra.mxu0 0
      %3093 = vmatprep.subr.bf16.mxu0 0
      %3094 = vmatpush1.bf16.msra.mxu0 0
      %3095 = vmatprep.subr.bf16.mxu0 0
      %3096 = vmatpush1.bf16.msra.mxu0 0
      %3097 = vmatprep.subr.bf16.mxu0 0
      %3098 = vmatpush1.bf16.msra.mxu0 0
      %3099 = vmatprep.subr.bf16.mxu0 0
      %3100 = vmatpush1.bf16.msra.mxu0 0
      %3101 = vmatprep.subr.bf16.mxu0 0
      %3102 = vmatpush1.bf16.msra.mxu0 0
      %3103 = vmatprep.subr.bf16.mxu0 0
      %3104 = vmatpush1.bf16.msra.mxu0 0
      %3105 = vmatprep.subr.bf16.mxu0 0
      %3106 = vmatpush1.bf16.msra.mxu0 0
      %3107 = vmatprep.subr.bf16.mxu0 0
      %3108 = vmatpush1.bf16.msra.mxu0 0
      %3109 = vmatprep.subr.bf16.mxu0 0
      %3110 = vmatpush1.bf16.msra.mxu0 0
      %3111 = vmatprep.subr.bf16.mxu0 0
      %3112 = vmatpush1.bf16.msra.mxu0 0
      %3113 = vmatprep.mubr.bf16.mxu0 0
      %3114 = vmatmul.mubr.bf16.gmra.mrb[0].mxu0 %v593
      %v3115 = vpop.f32.mrb[0].mxu0
      %v3116 = vadd.f32 %v3055, %v3115
      %v3117 = vpop.f32.mrb[0].mxu0
      %v3118 = vpop.f32.mrb[0].mxu0
      %v3119 = vpop.f32.mrb[0].mxu0
      %3120 = vdwg.mxu0
      %v3121 = vpack.c.bf16 %v2954, %v2954
      %v3122 = vpack.c.bf16 %v3035, %v3035
      %v3124 = vsel %vm716, %v3121, 0
      %v3127 = vsel %vm716, %v3122, 0
      %3129 = vmatprep.subr.bf16.mxu0 0
      %3130 = vmatpush1.bf16.xpose.msra.mxu0 %v3127
      %3131 = vmatprep.subr.bf16.mxu0 0
      %3132 = vmatpush1.bf16.xpose.msra.mxu0 0
      %3133 = vmatprep.subr.bf16.mxu0 0
      %3134 = vmatpush1.bf16.xpose.msra.mxu0 0
      %3135 = vmatprep.subr.bf16.mxu0 0
      %3136 = vmatpush1.bf16.xpose.msra.mxu0 0
      %3137 = vmatprep.subr.bf16.mxu0 0
      %3138 = vmatpush1.bf16.xpose.msra.mxu0 0
      %3139 = vmatprep.subr.bf16.mxu0 0
      %3140 = vmatpush1.bf16.xpose.msra.mxu0 0
      %3141 = vmatprep.subr.bf16.mxu0 0
      %3142 = vmatpush1.bf16.xpose.msra.mxu0 0
      %3143 = vmatprep.subr.bf16.mxu0 0
      %3144 = vmatpush1.bf16.xpose.msra.mxu0 0
      %3145 = vmatprep.subr.bf16.mxu0 0
      %3146 = vmatpush1.bf16.xpose.msra.mxu0 0
      %3147 = vmatprep.subr.bf16.mxu0 0
      %3148 = vmatpush1.bf16.xpose.msra.mxu0 0
      %3149 = vmatprep.subr.bf16.mxu0 0
      %3150 = vmatpush1.bf16.xpose.msra.mxu0 0
      %3151 = vmatprep.subr.bf16.mxu0 0
      %3152 = vmatpush1.bf16.xpose.msra.mxu0 0
      %3153 = vmatprep.subr.bf16.mxu0 0
      %3154 = vmatpush1.bf16.xpose.msra.mxu0 0
      %3155 = vmatprep.subr.bf16.mxu0 0
      %3156 = vmatpush1.bf16.xpose.msra.mxu0 0
      %3157 = vmatprep.subr.bf16.mxu0 0
      %3158 = vmatpush1.bf16.xpose.msra.mxu0 0
      %3159 = vmatprep.subr.bf16.mxu0 0
      %3160 = vmatpush1.bf16.xpose.msra.mxu0 0
      %3161 = vmatprep.mubr.bf16.mxu0 0
      %3162 = vmatmul.mubr.bf16.gmra.mrb[0].mxu0 %v3124
      %v3163 = vpop.f32.mrb[0].mxu0
      %v3164 = vadd.f32 0.0, %v3163
      %v3165 = vpop.f32.mrb[0].mxu0
      %v3166 = vpop.f32.mrb[0].mxu0
      %v3167 = vpop.f32.mrb[0].mxu0
      %3168 = vdwg.mxu0
      %v3169 = vmul.f32 %v3164, 0.35355338
      %v3170 = vsel %vm716, %v3169, -inf
      %3171 = vmax.xlane.f32.xlu0 %v3170
      %v3172 = vpop.xlane.xlu0 %3171
      %v3173 = vsub.f32 %v3169, %v3172
      %v3174 = vmul.f32 %v3173, 1.442695
      %v3175 = vpow.pop %v3174
      %v3176 = vsel %vm716, %v3175, 0.0
      %3177 = vadd.xlane.f32.xlu0 %v3176
      %v3178 = vpop.xlane.xlu0 %3177
      %v3179 = vrcp.pop %v3178
      %v3180 = vmul.f32 %v3175, %v3179
      %v3181 = vpack.c.bf16 %v3180, %v3180
      %v3182 = vpack.c.bf16 %v3116, %v3116
      %v3184 = vsel %vm716, %v3181, 0
      %v3187 = vsel %vm780, %v3182, 0
      %3189 = vmatprep.subr.bf16.mxu0 0
      %3190 = vmatpush1.bf16.msra.mxu0 %v3187
      %3191 = vmatprep.subr.bf16.mxu0 0
      %3192 = vmatpush1.bf16.msra.mxu0 0
      %3193 = vmatprep.subr.bf16.mxu0 0
      %3194 = vmatpush1.bf16.msra.mxu0 0
      %3195 = vmatprep.subr.bf16.mxu0 0
      %3196 = vmatpush1.bf16.msra.mxu0 0
      %3197 = vmatprep.subr.bf16.mxu0 0
      %3198 = vmatpush1.bf16.msra.mxu0 0
      %3199 = vmatprep.subr.bf16.mxu0 0
      %3200 = vmatpush1.bf16.msra.mxu0 0
      %3201 = vmatprep.subr.bf16.mxu0 0
      %3202 = vmatpush1.bf16.msra.mxu0 0
      %3203 = vmatprep.subr.bf16.mxu0 0
      %3204 = vmatpush1.bf16.msra.mxu0 0
      %3205 = vmatprep.subr.bf16.mxu0 0
      %3206 = vmatpush1.bf16.msra.mxu0 0
      %3207 = vmatprep.subr.bf16.mxu0 0
      %3208 = vmatpush1.bf16.msra.mxu0 0
      %3209 = vmatprep.subr.bf16.mxu0 0
      %3210 = vmatpush1.bf16.msra.mxu0 0
      %3211 = vmatprep.subr.bf16.mxu0 0
      %3212 = vmatpush1.bf16.msra.mxu0 0
      %3213 = vmatprep.subr.bf16.mxu0 0
      %3214 = vmatpush1.bf16.msra.mxu0 0
      %3215 = vmatprep.subr.bf16.mxu0 0
      %3216 = vmatpush1.bf16.msra.mxu0 0
      %3217 = vmatprep.subr.bf16.mxu0 0
      %3218 = vmatpush1.bf16.msra.mxu0 0
      %3219 = vmatprep.subr.bf16.mxu0 0
      %3220 = vmatpush1.bf16.msra.mxu0 0
      %3221 = vmatprep.mubr.bf16.mxu0 0
      %3222 = vmatmul.mubr.bf16.gmra.mrb[0].mxu0 %v3184
      %v3223 = vpop.f32.mrb[0].mxu0
      %v3224 = vadd.f32 0.0, %v3223
      %v3225 = vpop.f32.mrb[0].mxu0
      %v3226 = vpop.f32.mrb[0].mxu0
      %v3227 = vpop.f32.mrb[0].mxu0
      %3228 = vdwg.mxu0
      %v3229 = vpack.c.bf16 %v3224, %v3224
      %s3230 = scalar_lea.vmem %s8, 24
      %v3231 = vld [vmem:[%s3230] sm:$0xf]
      %v3233 = vsel %vm716, %v3229, 0
      %v3236 = vsel %vm780, %v3231, 0
      %3238 = vmatprep.subr.bf16.mxu0 0
      %3239 = vmatpush1.bf16.msra.mxu0 %v3236
      %3240 = vmatprep.subr.bf16.mxu0 0
      %3241 = vmatpush1.bf16.msra.mxu0 0
      %3242 = vmatprep.subr.bf16.mxu0 0
      %3243 = vmatpush1.bf16.msra.mxu0 0
      %3244 = vmatprep.subr.bf16.mxu0 0
      %3245 = vmatpush1.bf16.msra.mxu0 0
      %3246 = vmatprep.subr.bf16.mxu0 0
      %3247 = vmatpush1.bf16.msra.mxu0 0
      %3248 = vmatprep.subr.bf16.mxu0 0
      %3249 = vmatpush1.bf16.msra.mxu0 0
      %3250 = vmatprep.subr.bf16.mxu0 0
      %3251 = vmatpush1.bf16.msra.mxu0 0
      %3252 = vmatprep.subr.bf16.mxu0 0
      %3253 = vmatpush1.bf16.msra.mxu0 0
      %3254 = vmatprep.subr.bf16.mxu0 0
      %3255 = vmatpush1.bf16.msra.mxu0 0
      %3256 = vmatprep.subr.bf16.mxu0 0
      %3257 = vmatpush1.bf16.msra.mxu0 0
      %3258 = vmatprep.subr.bf16.mxu0 0
      %3259 = vmatpush1.bf16.msra.mxu0 0
      %3260 = vmatprep.subr.bf16.mxu0 0
      %3261 = vmatpush1.bf16.msra.mxu0 0
      %3262 = vmatprep.subr.bf16.mxu0 0
      %3263 = vmatpush1.bf16.msra.mxu0 0
      %3264 = vmatprep.subr.bf16.mxu0 0
      %3265 = vmatpush1.bf16.msra.mxu0 0
      %3266 = vmatprep.subr.bf16.mxu0 0
      %3267 = vmatpush1.bf16.msra.mxu0 0
      %3268 = vmatprep.subr.bf16.mxu0 0
      %3269 = vmatpush1.bf16.msra.mxu0 0
      %3270 = vmatprep.mubr.bf16.mxu0 0
      %3271 = vmatmul.mubr.bf16.gmra.mrb[0].mxu0 %v3233
      %v3272 = vpop.f32.mrb[0].mxu0
      %v3273 = vadd.f32 0.0, %v3272
      %v3274 = vpop.f32.mrb[0].mxu0
      %v3275 = vpop.f32.mrb[0].mxu0
      %v3276 = vpop.f32.mrb[0].mxu0
      %3277 = vdwg.mxu0
      %v3278 = vadd.f32 %v2877, %v3273
      %s3279 = scalar_lea.vmem %s2, 224
      %v3280 = vld [vmem:[%s3279] sm:$0xf]
      %v3281 = vld [vmem:[%s3279 + $0x4] sm:$0xf]
      %v3282 = vld [vmem:[%s3279 + $0x8] sm:$0xf]
      %v3283 = vld [vmem:[%s3279 + $0xc] sm:$0xf]
      %v3284 = vld [vmem:[%s3279 + $0x10] sm:$0xf]
      %v3285 = vld [vmem:[%s3279 + $0x14] sm:$0xf]
      %v3286 = vld [vmem:[%s3279 + $0x18] sm:$0xf]
      %v3287 = vld [vmem:[%s3279 + $0x1c] sm:$0xf]
      %s3288 = scalar_lea.vmem %s3, 7
      %v3289 = vld [vmem:[%s3288] sm:$0x1]
      %v3291 = vlaneseq
      %v3292 = vshrl.u32 %v3291, 7
      %v3293 = vsub.s32 0, %v3292
      %v3294 = vrot.slane %v3289, %v3293
      %v3304 = vunpack.c.l.b16 %v3280
      %v3305 = vunpack.c.l.b16 %v3281
      %v3306 = vunpack.c.l.b16 %v3282
      %v3307 = vunpack.c.l.b16 %v3283
      %v3308 = vunpack.c.l.b16 %v3284
      %v3309 = vunpack.c.l.b16 %v3285
      %v3310 = vunpack.c.l.b16 %v3286
      %v3311 = vunpack.c.l.b16 %v3287
      %v3312 = vpack.c.b16 %v3305, %v3304
      %v3313 = vpack.c.b16 %v3307, %v3306
      %v3314 = vpack.c.b16 %v3309, %v3308
      %v3315 = vpack.c.b16 %v3311, %v3310
      %3320 = vmatprep.subr.bf16.mxu0 0
      %3321 = vmatpush1.bf16.msra.mxu0 %v3312
      %3322 = vmatprep.subr.bf16.mxu0 0
      %3323 = vmatpush1.bf16.msra.mxu0 %v3313
      %3324 = vmatprep.subr.bf16.mxu0 0
      %3325 = vmatpush1.bf16.msra.mxu0 %v3314
      %3326 = vmatprep.subr.bf16.mxu0 0
      %3327 = vmatpush1.bf16.msra.mxu0 %v3315
      %3328 = vmatprep.subr.bf16.mxu0 0
      %3329 = vmatpush1.bf16.msra.mxu0 0
      %3330 = vmatprep.subr.bf16.mxu0 0
      %3331 = vmatpush1.bf16.msra.mxu0 0
      %3332 = vmatprep.subr.bf16.mxu0 0
      %3333 = vmatpush1.bf16.msra.mxu0 0
      %3334 = vmatprep.subr.bf16.mxu0 0
      %3335 = vmatpush1.bf16.msra.mxu0 0
      %3336 = vmatprep.subr.bf16.mxu0 0
      %3337 = vmatpush1.bf16.msra.mxu0 0
      %3338 = vmatprep.subr.bf16.mxu0 0
      %3339 = vmatpush1.bf16.msra.mxu0 0
      %3340 = vmatprep.subr.bf16.mxu0 0
      %3341 = vmatpush1.bf16.msra.mxu0 0
      %3342 = vmatprep.subr.bf16.mxu0 0
      %3343 = vmatpush1.bf16.msra.mxu0 0
      %3344 = vmatprep.subr.bf16.mxu0 0
      %3345 = vmatpush1.bf16.msra.mxu0 0
      %3346 = vmatprep.subr.bf16.mxu0 0
      %3347 = vmatpush1.bf16.msra.mxu0 0
      %3348 = vmatprep.subr.bf16.mxu0 0
      %3349 = vmatpush1.bf16.msra.mxu0 0
      %3350 = vmatprep.subr.bf16.mxu0 0
      %3351 = vmatpush1.bf16.msra.mxu0 0
      %3352 = vmatprep.mubr.bf16.mxu0 0
      %3353 = vmatmul.mubr.bf16.gmra.mrb[0].mxu0 %v511
      %v3354 = vpop.f32.mrb[0].mxu0
      %v3355 = vadd.f32 %v3294, %v3354
      %v3356 = vpop.f32.mrb[0].mxu0
      %v3357 = vpop.f32.mrb[0].mxu0
      %v3358 = vpop.f32.mrb[0].mxu0
      %3359 = vdwg.mxu0
      %s3360 = scalar_lea.vmem %s4, 224
      %v3361 = vld [vmem:[%s3360] sm:$0xf]
      %v3362 = vld [vmem:[%s3360 + $0x4] sm:$0xf]
      %v3363 = vld [vmem:[%s3360 + $0x8] sm:$0xf]
      %v3364 = vld [vmem:[%s3360 + $0xc] sm:$0xf]
      %v3365 = vld [vmem:[%s3360 + $0x10] sm:$0xf]
      %v3366 = vld [vmem:[%s3360 + $0x14] sm:$0xf]
      %v3367 = vld [vmem:[%s3360 + $0x18] sm:$0xf]
      %v3368 = vld [vmem:[%s3360 + $0x1c] sm:$0xf]
      %s3369 = scalar_lea.vmem %s5, 7
      %v3370 = vld [vmem:[%s3369] sm:$0x1]
      %v3372 = vlaneseq
      %v3373 = vshrl.u32 %v3372, 7
      %v3374 = vsub.s32 0, %v3373
      %v3375 = vrot.slane %v3370, %v3374
      %v3385 = vunpack.c.l.b16 %v3361
      %v3386 = vunpack.c.l.b16 %v3362
      %v3387 = vunpack.c.l.b16 %v3363
      %v3388 = vunpack.c.l.b16 %v3364
      %v3389 = vunpack.c.l.b16 %v3365
      %v3390 = vunpack.c.l.b16 %v3366
      %v3391 = vunpack.c.l.b16 %v3367
      %v3392 = vunpack.c.l.b16 %v3368
      %v3393 = vpack.c.b16 %v3386, %v3385
      %v3394 = vpack.c.b16 %v3388, %v3387
      %v3395 = vpack.c.b16 %v3390, %v3389
      %v3396 = vpack.c.b16 %v3392, %v3391
      %3401 = vmatprep.subr.bf16.mxu0 0
      %3402 = vmatpush1.bf16.msra.mxu0 %v3393
      %3403 = vmatprep.subr.bf16.mxu0 0
      %3404 = vmatpush1.bf16.msra.mxu0 %v3394
      %3405 = vmatprep.subr.bf16.mxu0 0
      %3406 = vmatpush1.bf16.msra.mxu0 %v3395
      %3407 = vmatprep.subr.bf16.mxu0 0
      %3408 = vmatpush1.bf16.msra.mxu0 %v3396
      %3409 = vmatprep.subr.bf16.mxu0 0
      %3410 = vmatpush1.bf16.msra.mxu0 0
      %3411 = vmatprep.subr.bf16.mxu0 0
      %3412 = vmatpush1.bf16.msra.mxu0 0
      %3413 = vmatprep.subr.bf16.mxu0 0
      %3414 = vmatpush1.bf16.msra.mxu0 0
      %3415 = vmatprep.subr.bf16.mxu0 0
      %3416 = vmatpush1.bf16.msra.mxu0 0
      %3417 = vmatprep.subr.bf16.mxu0 0
      %3418 = vmatpush1.bf16.msra.mxu0 0
      %3419 = vmatprep.subr.bf16.mxu0 0
      %3420 = vmatpush1.bf16.msra.mxu0 0
      %3421 = vmatprep.subr.bf16.mxu0 0
      %3422 = vmatpush1.bf16.msra.mxu0 0
      %3423 = vmatprep.subr.bf16.mxu0 0
      %3424 = vmatpush1.bf16.msra.mxu0 0
      %3425 = vmatprep.subr.bf16.mxu0 0
      %3426 = vmatpush1.bf16.msra.mxu0 0
      %3427 = vmatprep.subr.bf16.mxu0 0
      %3428 = vmatpush1.bf16.msra.mxu0 0
      %3429 = vmatprep.subr.bf16.mxu0 0
      %3430 = vmatpush1.bf16.msra.mxu0 0
      %3431 = vmatprep.subr.bf16.mxu0 0
      %3432 = vmatpush1.bf16.msra.mxu0 0
      %3433 = vmatprep.mubr.bf16.mxu0 0
      %3434 = vmatmul.mubr.bf16.gmra.mrb[0].mxu0 %v593
      %v3435 = vpop.f32.mrb[0].mxu0
      %v3436 = vadd.f32 %v3375, %v3435
      %v3437 = vpop.f32.mrb[0].mxu0
      %v3438 = vpop.f32.mrb[0].mxu0
      %v3439 = vpop.f32.mrb[0].mxu0
      %3440 = vdwg.mxu0
      %s3441 = scalar_lea.vmem %s6, 224
      %v3442 = vld [vmem:[%s3441] sm:$0xf]
      %v3443 = vld [vmem:[%s3441 + $0x4] sm:$0xf]
      %v3444 = vld [vmem:[%s3441 + $0x8] sm:$0xf]
      %v3445 = vld [vmem:[%s3441 + $0xc] sm:$0xf]
      %v3446 = vld [vmem:[%s3441 + $0x10] sm:$0xf]
      %v3447 = vld [vmem:[%s3441 + $0x14] sm:$0xf]
      %v3448 = vld [vmem:[%s3441 + $0x18] sm:$0xf]
      %v3449 = vld [vmem:[%s3441 + $0x1c] sm:$0xf]
      %s3450 = scalar_lea.vmem %s7, 7
      %v3451 = vld [vmem:[%s3450] sm:$0x1]
      %v3453 = vlaneseq
      %v3454 = vshrl.u32 %v3453, 7
      %v3455 = vsub.s32 0, %v3454
      %v3456 = vrot.slane %v3451, %v3455
      %v3466 = vunpack.c.l.b16 %v3442
      %v3467 = vunpack.c.l.b16 %v3443
      %v3468 = vunpack.c.l.b16 %v3444
      %v3469 = vunpack.c.l.b16 %v3445
      %v3470 = vunpack.c.l.b16 %v3446
      %v3471 = vunpack.c.l.b16 %v3447
      %v3472 = vunpack.c.l.b16 %v3448
      %v3473 = vunpack.c.l.b16 %v3449
      %v3474 = vpack.c.b16 %v3467, %v3466
      %v3475 = vpack.c.b16 %v3469, %v3468
      %v3476 = vpack.c.b16 %v3471, %v3470
      %v3477 = vpack.c.b16 %v3473, %v3472
      %3482 = vmatprep.subr.bf16.mxu0 0
      %3483 = vmatpush1.bf16.msra.mxu0 %v3474
      %3484 = vmatprep.subr.bf16.mxu0 0
      %3485 = vmatpush1.bf16.msra.mxu0 %v3475
      %3486 = vmatprep.subr.bf16.mxu0 0
      %3487 = vmatpush1.bf16.msra.mxu0 %v3476
      %3488 = vmatprep.subr.bf16.mxu0 0
      %3489 = vmatpush1.bf16.msra.mxu0 %v3477
      %3490 = vmatprep.subr.bf16.mxu0 0
      %3491 = vmatpush1.bf16.msra.mxu0 0
      %3492 = vmatprep.subr.bf16.mxu0 0
      %3493 = vmatpush1.bf16.msra.mxu0 0
      %3494 = vmatprep.subr.bf16.mxu0 0
      %3495 = vmatpush1.bf16.msra.mxu0 0
      %3496 = vmatprep.subr.bf16.mxu0 0
      %3497 = vmatpush1.bf16.msra.mxu0 0
      %3498 = vmatprep.subr.bf16.mxu0 0
      %3499 = vmatpush1.bf16.msra.mxu0 0
      %3500 = vmatprep.subr.bf16.mxu0 0
      %3501 = vmatpush1.bf16.msra.mxu0 0
      %3502 = vmatprep.subr.bf16.mxu0 0
      %3503 = vmatpush1.bf16.msra.mxu0 0
      %3504 = vmatprep.subr.bf16.mxu0 0
      %3505 = vmatpush1.bf16.msra.mxu0 0
      %3506 = vmatprep.subr.bf16.mxu0 0
      %3507 = vmatpush1.bf16.msra.mxu0 0
      %3508 = vmatprep.subr.bf16.mxu0 0
      %3509 = vmatpush1.bf16.msra.mxu0 0
      %3510 = vmatprep.subr.bf16.mxu0 0
      %3511 = vmatpush1.bf16.msra.mxu0 0
      %3512 = vmatprep.subr.bf16.mxu0 0
      %3513 = vmatpush1.bf16.msra.mxu0 0
      %3514 = vmatprep.mubr.bf16.mxu0 0
      %3515 = vmatmul.mubr.bf16.gmra.mrb[0].mxu0 %v593
      %v3516 = vpop.f32.mrb[0].mxu0
      %v3517 = vadd.f32 %v3456, %v3516
      %v3518 = vpop.f32.mrb[0].mxu0
      %v3519 = vpop.f32.mrb[0].mxu0
      %v3520 = vpop.f32.mrb[0].mxu0
      %3521 = vdwg.mxu0
      %v3522 = vpack.c.bf16 %v3355, %v3355
      %v3523 = vpack.c.bf16 %v3436, %v3436
      %v3525 = vsel %vm716, %v3522, 0
      %v3528 = vsel %vm716, %v3523, 0
      %3530 = vmatprep.subr.bf16.mxu0 0
      %3531 = vmatpush1.bf16.xpose.msra.mxu0 %v3528
      %3532 = vmatprep.subr.bf16.mxu0 0
      %3533 = vmatpush1.bf16.xpose.msra.mxu0 0
      %3534 = vmatprep.subr.bf16.mxu0 0
      %3535 = vmatpush1.bf16.xpose.msra.mxu0 0
      %3536 = vmatprep.subr.bf16.mxu0 0
      %3537 = vmatpush1.bf16.xpose.msra.mxu0 0
      %3538 = vmatprep.subr.bf16.mxu0 0
      %3539 = vmatpush1.bf16.xpose.msra.mxu0 0
      %3540 = vmatprep.subr.bf16.mxu0 0
      %3541 = vmatpush1.bf16.xpose.msra.mxu0 0
      %3542 = vmatprep.subr.bf16.mxu0 0
      %3543 = vmatpush1.bf16.xpose.msra.mxu0 0
      %3544 = vmatprep.subr.bf16.mxu0 0
      %3545 = vmatpush1.bf16.xpose.msra.mxu0 0
      %3546 = vmatprep.subr.bf16.mxu0 0
      %3547 = vmatpush1.bf16.xpose.msra.mxu0 0
      %3548 = vmatprep.subr.bf16.mxu0 0
      %3549 = vmatpush1.bf16.xpose.msra.mxu0 0
      %3550 = vmatprep.subr.bf16.mxu0 0
      %3551 = vmatpush1.bf16.xpose.msra.mxu0 0
      %3552 = vmatprep.subr.bf16.mxu0 0
      %3553 = vmatpush1.bf16.xpose.msra.mxu0 0
      %3554 = vmatprep.subr.bf16.mxu0 0
      %3555 = vmatpush1.bf16.xpose.msra.mxu0 0
      %3556 = vmatprep.subr.bf16.mxu0 0
      %3557 = vmatpush1.bf16.xpose.msra.mxu0 0
      %3558 = vmatprep.subr.bf16.mxu0 0
      %3559 = vmatpush1.bf16.xpose.msra.mxu0 0
      %3560 = vmatprep.subr.bf16.mxu0 0
      %3561 = vmatpush1.bf16.xpose.msra.mxu0 0
      %3562 = vmatprep.mubr.bf16.mxu0 0
      %3563 = vmatmul.mubr.bf16.gmra.mrb[0].mxu0 %v3525
      %v3564 = vpop.f32.mrb[0].mxu0
      %v3565 = vadd.f32 0.0, %v3564
      %v3566 = vpop.f32.mrb[0].mxu0
      %v3567 = vpop.f32.mrb[0].mxu0
      %v3568 = vpop.f32.mrb[0].mxu0
      %3569 = vdwg.mxu0
      %v3570 = vmul.f32 %v3565, 0.35355338
      %v3571 = vsel %vm716, %v3570, -inf
      %3572 = vmax.xlane.f32.xlu0 %v3571
      %v3573 = vpop.xlane.xlu0 %3572
      %v3574 = vsub.f32 %v3570, %v3573
      %v3575 = vmul.f32 %v3574, 1.442695
      %v3576 = vpow.pop %v3575
      %v3577 = vsel %vm716, %v3576, 0.0
      %3578 = vadd.xlane.f32.xlu0 %v3577
      %v3579 = vpop.xlane.xlu0 %3578
      %v3580 = vrcp.pop %v3579
      %v3581 = vmul.f32 %v3576, %v3580
      %v3582 = vpack.c.bf16 %v3581, %v3581
      %v3583 = vpack.c.bf16 %v3517, %v3517
      %v3585 = vsel %vm716, %v3582, 0
      %v3588 = vsel %vm780, %v3583, 0
      %3590 = vmatprep.subr.bf16.mxu0 0
      %3591 = vmatpush1.bf16.msra.mxu0 %v3588
      %3592 = vmatprep.subr.bf16.mxu0 0
      %3593 = vmatpush1.bf16.msra.mxu0 0
      %3594 = vmatprep.subr.bf16.mxu0 0
      %3595 = vmatpush1.bf16.msra.mxu0 0
      %3596 = vmatprep.subr.bf16.mxu0 0
      %3597 = vmatpush1.bf16.msra.mxu0 0
      %3598 = vmatprep.subr.bf16.mxu0 0
      %3599 = vmatpush1.bf16.msra.mxu0 0
      %3600 = vmatprep.subr.bf16.mxu0 0
      %3601 = vmatpush1.bf16.msra.mxu0 0
      %3602 = vmatprep.subr.bf16.mxu0 0
      %3603 = vmatpush1.bf16.msra.mxu0 0
      %3604 = vmatprep.subr.bf16.mxu0 0
      %3605 = vmatpush1.bf16.msra.mxu0 0
      %3606 = vmatprep.subr.bf16.mxu0 0
      %3607 = vmatpush1.bf16.msra.mxu0 0
      %3608 = vmatprep.subr.bf16.mxu0 0
      %3609 = vmatpush1.bf16.msra.mxu0 0
      %3610 = vmatprep.subr.bf16.mxu0 0
      %3611 = vmatpush1.bf16.msra.mxu0 0
      %3612 = vmatprep.subr.bf16.mxu0 0
      %3613 = vmatpush1.bf16.msra.mxu0 0
      %3614 = vmatprep.subr.bf16.mxu0 0
      %3615 = vmatpush1.bf16.msra.mxu0 0
      %3616 = vmatprep.subr.bf16.mxu0 0
      %3617 = vmatpush1.bf16.msra.mxu0 0
      %3618 = vmatprep.subr.bf16.mxu0 0
      %3619 = vmatpush1.bf16.msra.mxu0 0
      %3620 = vmatprep.subr.bf16.mxu0 0
      %3621 = vmatpush1.bf16.msra.mxu0 0
      %3622 = vmatprep.mubr.bf16.mxu0 0
      %3623 = vmatmul.mubr.bf16.gmra.mrb[0].mxu0 %v3585
      %v3624 = vpop.f32.mrb[0].mxu0
      %v3625 = vadd.f32 0.0, %v3624
      %v3626 = vpop.f32.mrb[0].mxu0
      %v3627 = vpop.f32.mrb[0].mxu0
      %v3628 = vpop.f32.mrb[0].mxu0
      %3629 = vdwg.mxu0
      %v3630 = vpack.c.bf16 %v3625, %v3625
      %s3631 = scalar_lea.vmem %s8, 28
      %v3632 = vld [vmem:[%s3631] sm:$0xf]
      %v3634 = vsel %vm716, %v3630, 0
      %v3637 = vsel %vm780, %v3632, 0
      %3639 = vmatprep.subr.bf16.mxu0 0
      %3640 = vmatpush1.bf16.msra.mxu0 %v3637
      %3641 = vmatprep.subr.bf16.mxu0 0
      %3642 = vmatpush1.bf16.msra.mxu0 0
      %3643 = vmatprep.subr.bf16.mxu0 0
      %3644 = vmatpush1.bf16.msra.mxu0 0
      %3645 = vmatprep.subr.bf16.mxu0 0
      %3646 = vmatpush1.bf16.msra.mxu0 0
      %3647 = vmatprep.subr.bf16.mxu0 0
      %3648 = vmatpush1.bf16.msra.mxu0 0
      %3649 = vmatprep.subr.bf16.mxu0 0
      %3650 = vmatpush1.bf16.msra.mxu0 0
      %3651 = vmatprep.subr.bf16.mxu0 0
      %3652 = vmatpush1.bf16.msra.mxu0 0
      %3653 = vmatprep.subr.bf16.mxu0 0
      %3654 = vmatpush1.bf16.msra.mxu0 0
      %3655 = vmatprep.subr.bf16.mxu0 0
      %3656 = vmatpush1.bf16.msra.mxu0 0
      %3657 = vmatprep.subr.bf16.mxu0 0
      %3658 = vmatpush1.bf16.msra.mxu0 0
      %3659 = vmatprep.subr.bf16.mxu0 0
      %3660 = vmatpush1.bf16.msra.mxu0 0
      %3661 = vmatprep.subr.bf16.mxu0 0
      %3662 = vmatpush1.bf16.msra.mxu0 0
      %3663 = vmatprep.subr.bf16.mxu0 0
      %3664 = vmatpush1.bf16.msra.mxu0 0
      %3665 = vmatprep.subr.bf16.mxu0 0
      %3666 = vmatpush1.bf16.msra.mxu0 0
      %3667 = vmatprep.subr.bf16.mxu0 0
      %3668 = vmatpush1.bf16.msra.mxu0 0
      %3669 = vmatprep.subr.bf16.mxu0 0
      %3670 = vmatpush1.bf16.msra.mxu0 0
      %3671 = vmatprep.mubr.bf16.mxu0 0
      %3672 = vmatmul.mubr.bf16.gmra.mrb[0].mxu0 %v3634
      %v3673 = vpop.f32.mrb[0].mxu0
      %v3674 = vadd.f32 0.0, %v3673
      %v3675 = vpop.f32.mrb[0].mxu0
      %v3676 = vpop.f32.mrb[0].mxu0
      %v3677 = vpop.f32.mrb[0].mxu0
      %3678 = vdwg.mxu0
      %v3679 = vadd.f32 %v3278, %v3674
      %v3680 = vsel %vm509, %v3679, 0.0
      %3681 = vadd.xlane.f32.xlu0 %v3680
      %v3682 = vpop.xlane.xlu0 %3681
      %v3683 = vrcp.pop 64.0
      %v3684 = vmul.f32 %v3682, %v3683
      %v3685 = vsub.f32 %v3679, %v3684
      %v3686 = vmul.f32 %v3685, %v3685
      %v3687 = vsel %vm509, %v3686, 0.0
      %3688 = vadd.xlane.f32.xlu0 %v3687
      %v3689 = vpop.xlane.xlu0 %3688
      %v3690 = vmul.f32 %v3689, %v3683
      %v3691 = vadd.f32 %v3690, 1e-05
      %v3692 = vrsqrt.pop %v3691
      %v3693 = vmul.f32 %v3685, %v3692
      %v3694 = vld [vmem:[%s10] sm:$0x1]
      %v3696 = vlaneseq
      %v3697 = vshrl.u32 %v3696, 7
      %v3698 = vsub.s32 0, %v3697
      %v3699 = vrot.slane %v3694, %v3698
      %v3701 = vmul.f32 %v3693, %v3699
      %v3702 = vld [vmem:[%s11] sm:$0x1]
      %v3704 = vlaneseq
      %v3705 = vshrl.u32 %v3704, 7
      %v3706 = vsub.s32 0, %v3705
      %v3707 = vrot.slane %v3702, %v3706
      %v3709 = vadd.f32 %v3701, %v3707
      %3710 = vst.msk [vmem:[%s456] sm:$0xff] %vm509, %v3709
      %p3711 = scmp.lt.s32.totalorder %s27, 1
      %s3712 = scalar_select %p3711, %s27, 1
      %p3713 = scmp.lt.s32.totalorder %s28, 0
      %s3714 = scalar_select %p3713, %s28, 0
      %s3715 = sadd.s32 %s3714, %s3712
      %s3716 = smul.addr %s3715, 8
      %s3717 = scalar_lea.vmem %s12, %s3716
      // Predicated region
      $region69: #{stellar_transformer_forward.9} parent=67 // pred_check
        %p3718 = pneg %p319
      $region70: #{stellar_transformer_forward.9} parent=67 // pred_check_branch
        %3720 = sbr.rel (%p3718) target = $region72
      $region71: #{stellar_transformer_forward.9} parent=67 // pred_region
        _
      $region72: #{stellar_transformer_forward.9} parent=67 // pred_fallthru
        _
    $region68: #{stellar_transformer_forward.9} parent=5 // pred_fallthru
      _
    %p3721 = scmp.le.s32.totalorder 2, %s18
    // Predicated region
    $region73: #{stellar_transformer_forward.9} parent=5 // pred_check
      %p3722 = pneg %p3721
    $region74: #{stellar_transformer_forward.9} parent=5 // pred_check_branch
      %3724 = sbr.rel (%p3722) target = $region76
    $region75: #{stellar_transformer_forward.9} parent=5 // pred_region
      %s3725 = ssub.s32 %s18, 2
      // Predicated region
      $region77: #{stellar_transformer_forward.9} parent=75 // pred_check
        %p3726 = pneg %p325
      $region78: #{stellar_transformer_forward.9} parent=75 // pred_check_branch
        %3728 = sbr.rel (%p3726) target = $region80
      $region79: #{stellar_transformer_forward.9} parent=75 // pred_region
        %p3729 = scmp.lt.s32.totalorder %s29, 1
        %s3730 = scalar_select %p3729, %s29, 1
        %p3731 = scmp.lt.s32.totalorder %s30, 0
        %s3732 = scalar_select %p3731, %s30, 0
        %s3733 = sadd.s32 %s3732, %s3730
        %s3734 = smul.addr %s3733, 8
        %s3735 = scalar_lea.vmem %s12, %s3734
      $region80: #{stellar_transformer_forward.9} parent=75 // pred_fallthru
        _
    $region76: #{stellar_transformer_forward.9} parent=5 // pred_fallthru
      _
  $region6: #{stellar_transformer_forward.9} parent=0 // loop_footer
    %s22 = sadd.s32 1, %s18
  $region7: #{stellar_transformer_forward.9} parent=0 // loop_footer_branch
    %17 = sbr.rel target = $region3
  $region8: #{stellar_transformer_forward.9} parent=0 // loop_exit
    _

</llo_original>
